<compile_context>
chip_gen: v7x
topology: tpu7x:2x2x1
jax: 0.10.0
libtpu: 0.0.40
codegen_flags: <defaults>
</compile_context>

<pallas_src>
import functools

import jax
import jax.numpy as jnp
from jax.experimental import pallas as pl
from jax.experimental.pallas import tpu as pltpu

MM_DTYPE = jnp.bfloat16           # MXU operand dtype (accumulation stays f32)
ATTN_DTYPE = jnp.float32          # attn-prob output dtype (bf16 halves HBM writeback)
LN_EPS = 1e-5                     # PyTorch nn.LayerNorm default

_VMEM_LIMIT_CACHE = None


def _vmem_limit_bytes():
    """Chip-aware VMEM scoped limit: ~3/4 of physical VMEM, capped at 100 MiB."""
    global _VMEM_LIMIT_CACHE
    if _VMEM_LIMIT_CACHE is None:
        cap = 64 * 1024 * 1024
        try:
            info = pltpu.get_tpu_info()
            cap = int(getattr(info, "vmem_capacity_bytes", cap))
        except Exception:
            pass
        _VMEM_LIMIT_CACHE = min(cap * 3 // 4, 100 * 1024 * 1024)
    return _VMEM_LIMIT_CACHE


def _compiler_params(n_parallel_axes=1):
    return pltpu.CompilerParams(
        dimension_semantics=("parallel",) * n_parallel_axes,
        vmem_limit_bytes=_vmem_limit_bytes(),
    )


def _row_tile(m, preferred=512):
    """Full rows when small, else a fixed lane/sublane-aligned tile; ragged tail
    is handled by pl.cdiv + masked edge blocks (no tiny-divisor fallback)."""
    return m if m <= preferred else preferred


# ----------- fused MHA core: proj -> softmax -> out-proj -> +res -> LN -------

def _mha_core(q_src, kv_src, wq, wk, wv, bq, bk, bv, wo, bo, gamma, beta,
              o_ref, a_ref):
    """q_src: [Lq, D] (also the residual), kv_src: [Lk, D].
    wq/wk/wv: [H, D, Dh] bf16 (scale folded into wq/bq), wo: [H, Dh, D] bf16.
    Writes attention probs [H, Lq, Lk] to a_ref and
    LayerNorm(res + out-proj(MHA)) [1, Lq, D] to o_ref."""
    H = wq.shape[0]
    qb = q_src.astype(MM_DTYPE)
    kb = kv_src.astype(MM_DTYPE)
    qh_in = jnp.broadcast_to(qb[None], (H,) + qb.shape)      # [H, Lq, D]
    kh_in = jnp.broadcast_to(kb[None], (H,) + kb.shape)      # [H, Lk, D]

    # head-major projections (batched over the leading head axis; no lane slices)
    q = jnp.einsum('hld,hdk->hlk', qh_in, wq,
                   preferred_element_type=jnp.float32) + bq   # [H, Lq, Dh]
    k = jnp.einsum('hld,hdk->hlk', kh_in, wk,
                   preferred_element_type=jnp.float32) + bk   # [H, Lk, Dh]
    v = jnp.einsum('hld,hdk->hlk', kh_in, wv,
                   preferred_element_type=jnp.float32) + bv   # [H, Lk, Dh]

    # scores (scale already folded into q), softmax in f32, EUP reciprocal
    s = jnp.einsum('hqd,hkd->hqk', q.astype(MM_DTYPE), k.astype(MM_DTYPE),
                   preferred_element_type=jnp.float32)        # [H, Lq, Lk]
    m = jnp.max(s, axis=-1, keepdims=True)
    e = jnp.exp(s - m)
    p = e * pl.reciprocal(jnp.sum(e, axis=-1, keepdims=True), approx=True)
    a_ref[...] = p.astype(a_ref.dtype)

    o = jnp.einsum('hqk,hkd->hqd', p.astype(MM_DTYPE), v.astype(MM_DTYPE),
                   preferred_element_type=jnp.float32)        # [H, Lq, Dh]

    # out-projection accumulated per head: sum_h o[h] @ wo[h]  (no lane concat)
    proj = bo                                                  # [1, D] f32
    for h in range(H):                                         # static unroll
        proj = proj + jnp.dot(o[h].astype(MM_DTYPE), wo[h],
                              preferred_element_type=jnp.float32)

    r = q_src.astype(jnp.float32) + proj
    mean = jnp.mean(r, axis=-1, keepdims=True)
    var = jnp.mean(jnp.square(r - mean), axis=-1, keepdims=True)
    out = (r - mean) * jax.lax.rsqrt(var + LN_EPS) * gamma + beta
    o_ref[0] = out.astype(o_ref.dtype)


def _self_attn_kernel(x_ref, wq, wk, wv, bq, bk, bv, wo, bo, g_ref, b_ref,
                      o_ref, a_ref):
    x = x_ref[0]
    _mha_core(x, x, wq[...], wk[...], wv[...], bq[...], bk[...], bv[...],
              wo[...], bo[...], g_ref[...], b_ref[...], o_ref, a_ref)


def _cross_attn_kernel(x_ref, e_ref, wq, wk, wv, bq, bk, bv, wo, bo, g_ref,
                       b_ref, o_ref, a_ref):
    _mha_core(x_ref[0], e_ref[0], wq[...], wk[...], wv[...], bq[...], bk[...],
              bv[...], wo[...], bo[...], g_ref[...], b_ref[...], o_ref, a_ref)


# NOTE(v7x): grid is over batch only (all heads per step) because the fused
# residual+LN needs every head.  For more megacore grid points one could add a
# head axis marked 'arbitrary' with an accumulator scratch — left as future work.
def self_attention_block(x, sa, num_heads):
    B, Lq, D = x.shape
    H, Dh = num_heads, D // num_heads
    wspec = pl.BlockSpec((H, D, Dh), lambda b: (0, 0, 0))
    bspec = pl.BlockSpec((H, 1, Dh), lambda b: (0, 0, 0))
    vspec = pl.BlockSpec((1, D), lambda b: (0, 0))
    out, attn = pl.pallas_call(
        _self_attn_kernel,
        out_shape=(
            jax.ShapeDtypeStruct((B, Lq, D), x.dtype),
            jax.ShapeDtypeStruct((B * H, Lq, Lq), ATTN_DTYPE),
        ),
        grid=(B,),
        in_specs=[
            pl.BlockSpec((1, Lq, D), lambda b: (b, 0, 0)),
            wspec, wspec, wspec, bspec, bspec, bspec,
            pl.BlockSpec((H, Dh, D), lambda b: (0, 0, 0)),
            vspec, vspec, vspec,
        ],
        out_specs=(
            pl.BlockSpec((1, Lq, D), lambda b: (b, 0, 0)),
            pl.BlockSpec((H, Lq, Lq), lambda b: (b, 0, 0)),
        ),
        compiler_params=_compiler_params(),
    )(x, sa["wq"], sa["wk"], sa["wv"], sa["bq"], sa["bk"], sa["bv"],
      sa["wo"], sa["bo"], sa["gamma"], sa["beta"])
    return out, attn.reshape(B, H, Lq, Lq)


def cross_attention_block(x, enc_out, ca, num_heads):
    B, Lq, D = x.shape
    Lk = enc_out.shape[1]
    H, Dh = num_heads, D // num_heads
    wspec = pl.BlockSpec((H, D, Dh), lambda b: (0, 0, 0))
    bspec = pl.BlockSpec((H, 1, Dh), lambda b: (0, 0, 0))
    vspec = pl.BlockSpec((1, D), lambda b: (0, 0))
    out, attn = pl.pallas_call(
        _cross_attn_kernel,
        out_shape=(
            jax.ShapeDtypeStruct((B, Lq, D), x.dtype),
            jax.ShapeDtypeStruct((B * H, Lq, Lk), ATTN_DTYPE),
        ),
        grid=(B,),
        in_specs=[
            pl.BlockSpec((1, Lq, D), lambda b: (b, 0, 0)),
            pl.BlockSpec((1, Lk, D), lambda b: (b, 0, 0)),
            wspec, wspec, wspec, bspec, bspec, bspec,
            pl.BlockSpec((H, Dh, D), lambda b: (0, 0, 0)),
            vspec, vspec, vspec,
        ],
        out_specs=(
            pl.BlockSpec((1, Lq, D), lambda b: (b, 0, 0)),
            pl.BlockSpec((H, Lq, Lk), lambda b: (b, 0, 0)),
        ),
        compiler_params=_compiler_params(),
    )(x, enc_out, ca["wq"], ca["wk"], ca["wv"], ca["bq"], ca["bk"], ca["bv"],
      ca["wo"], ca["bo"], ca["gamma"], ca["beta"])
    return out, attn.reshape(B, H, Lq, Lk)


# -------------------- fused FFN + residual + LayerNorm -----------------------

def _ffn_kernel(x_ref, w1_ref, b1_ref, w2_ref, b2_ref, g_ref, beta_ref, o_ref):
    x = x_ref[...]
    h = jnp.dot(x.astype(MM_DTYPE), w1_ref[...],
                preferred_element_type=jnp.float32) + b1_ref[...]
    h = jnp.maximum(h, 0.0)
    y = jnp.dot(h.astype(MM_DTYPE), w2_ref[...],
                preferred_element_type=jnp.float32) + b2_ref[...]
    r = x.astype(jnp.float32) + y
    mean = jnp.mean(r, axis=-1, keepdims=True)
    var = jnp.mean(jnp.square(r - mean), axis=-1, keepdims=True)
    out = (r - mean) * jax.lax.rsqrt(var + LN_EPS) * g_ref[...] + beta_ref[...]
    o_ref[...] = out.astype(o_ref.dtype)


def ffn_block(x, fp):
    lead = x.shape[:-1]
    D = x.shape[-1]
    Dff = fp["w1"].shape[1]
    M = 1
    for s in lead:
        M *= s
    tm = _row_tile(M)
    out = pl.pallas_call(
        _ffn_kernel,
        out_shape=jax.ShapeDtypeStruct((M, D), x.dtype),
        grid=(pl.cdiv(M, tm),),
        in_specs=[
            pl.BlockSpec((tm, D), lambda i: (i, 0)),
            pl.BlockSpec((D, Dff), lambda i: (0, 0)),     # VMEM-resident weights
            pl.BlockSpec((1, Dff), lambda i: (0, 0)),
            pl.BlockSpec((Dff, D), lambda i: (0, 0)),
            pl.BlockSpec((1, D), lambda i: (0, 0)),
            pl.BlockSpec((1, D), lambda i: (0, 0)),
            pl.BlockSpec((1, D), lambda i: (0, 0)),
        ],
        out_specs=pl.BlockSpec((tm, D), lambda i: (i, 0)),
        compiler_params=_compiler_params(),
    )(x.reshape(M, D), fp["w1"], fp["b1"], fp["w2"], fp["b2"],
      fp["gamma"], fp["beta"])
    return out.reshape(*lead, D)


# -------------- fused final LayerNorm + lane-dense projection ----------------

def _ln_proj_kernel(x_ref, g_ref, b_ref, w_ref, pb_ref, o_ref):
    h = x_ref[...].astype(jnp.float32)
    mean = jnp.mean(h, axis=-1, keepdims=True)
    var = jnp.mean(jnp.square(h - mean), axis=-1, keepdims=True)
    n = (h - mean) * jax.lax.rsqrt(var + LN_EPS) * g_ref[...] + b_ref[...]
    y = jnp.dot(n.astype(MM_DTYPE), w_ref[...],
                preferred_element_type=jnp.float32) + pb_ref[...]
    o_ref[...] = y.astype(o_ref.dtype)


def layernorm_projection(x, gamma, beta, w_pad, b_pad):
    """LayerNorm + projection fused; output padded to 128 lanes (sliced outside)."""
    lead = x.shape[:-1]
    D = x.shape[-1]
    Cp = w_pad.shape[1]
    M = 1
    for s in lead:
        M *= s
    tm = _row_tile(M)
    return pl.pallas_call(
        _ln_proj_kernel,
        out_shape=jax.ShapeDtypeStruct((M, Cp), x.dtype),
        grid=(pl.cdiv(M, tm),),
        in_specs=[
            pl.BlockSpec((tm, D), lambda i: (i, 0)),
            pl.BlockSpec((1, D), lambda i: (0, 0)),
            pl.BlockSpec((1, D), lambda i: (0, 0)),
            pl.BlockSpec((D, Cp), lambda i: (0, 0)),
            pl.BlockSpec((1, Cp), lambda i: (0, 0)),
        ],
        out_specs=pl.BlockSpec((tm, Cp), lambda i: (i, 0)),
        compiler_params=_compiler_params(),
    )(x.reshape(M, D), gamma, beta, w_pad, b_pad)


# --------------------------- parameter construction -------------------------

def _init_linear(key, din, dout, scale=0.02):
    w = scale * jax.random.normal(key, (din, dout), jnp.float32)
    b = jnp.zeros((dout,), jnp.float32)
    return w, b


def init_decoder_params(key, n_layers, d_model, n_heads, d_ff, c_out):
    """'PyTorch-like' f32 parameters (fused QKV / fused cross-KV weight matrices)."""
    layers = []
    for li in range(n_layers):
        lk = jax.random.fold_in(key, li)
        ks = jax.random.split(lk, 8)
        layers.append(dict(
            wqkv=_init_linear(ks[0], d_model, 3 * d_model),
            wo=_init_linear(ks[1], d_model, d_model),
            cwq=_init_linear(ks[2], d_model, d_model),
            cwkv=_init_linear(ks[3], d_model, 2 * d_model),
            cwo=_init_linear(ks[4], d_model, d_model),
            w1=_init_linear(ks[5], d_model, d_ff),
            w2=_init_linear(ks[6], d_ff, d_model),
            ln1=(jnp.ones((d_model,), jnp.float32), jnp.zeros((d_model,), jnp.float32)),
            ln2=(jnp.ones((d_model,), jnp.float32), jnp.zeros((d_model,), jnp.float32)),
            ln3=(jnp.ones((d_model,), jnp.float32), jnp.zeros((d_model,), jnp.float32)),
        ))
    pk = jax.random.fold_in(key, 1000)
    return dict(
        layers=layers,
        norm=(jnp.ones((d_model,), jnp.float32), jnp.zeros((d_model,), jnp.float32)),
        proj=_init_linear(pk, d_model, c_out),
    )


def _split_heads_w(w, n_heads):
    d, hd = w.shape
    dh = hd // n_heads
    return jnp.transpose(w.reshape(d, n_heads, dh), (1, 0, 2))      # [H, D, Dh]


def _split_heads_b(b, n_heads):
    dh = b.shape[0] // n_heads
    return b.reshape(n_heads, 1, dh)                                # [H, 1, Dh]


def _prep_attn(wq, bq, wk, bk, wv, bv, wo, bo, gamma, beta, n_heads):
    d = wq.shape[0]
    dh = d // n_heads
    scale = 1.0 / float(dh) ** 0.5
    return dict(
        wq=(_split_heads_w(wq, n_heads) * scale).astype(MM_DTYPE),  # scale folded
        wk=_split_heads_w(wk, n_heads).astype(MM_DTYPE),
        wv=_split_heads_w(wv, n_heads).astype(MM_DTYPE),
        bq=_split_heads_b(bq, n_heads) * scale,
        bk=_split_heads_b(bk, n_heads),
        bv=_split_heads_b(bv, n_heads),
        wo=wo.reshape(n_heads, dh, d).astype(MM_DTYPE),
        bo=bo.reshape(1, d),
        gamma=gamma.reshape(1, d),
        beta=beta.reshape(1, d),
    )


def prepare_decoder_params(params, n_heads):
    """One-time, free transformations: head-major weights, bf16 casts, scale fold,
    lane-padded final projection."""
    layers = []
    for p in params["layers"]:
        wqkv, bqkv = p["wqkv"]
        d = wqkv.shape[0]
        wo, bo = p["wo"]
        g1, bt1 = p["ln1"]
        sa = _prep_attn(wqkv[:, :d], bqkv[:d], wqkv[:, d:2 * d], bqkv[d:2 * d],
                        wqkv[:, 2 * d:], bqkv[2 * d:], wo, bo, g1, bt1, n_heads)
        cwq, cbq = p["cwq"]
        cwkv, cbkv = p["cwkv"]
        cwo, cbo = p["cwo"]
        g2, bt2 = p["ln2"]
        ca = _prep_attn(cwq, cbq, cwkv[:, :d], cbkv[:d], cwkv[:, d:], cbkv[d:],
                        cwo, cbo, g2, bt2, n_heads)
        w1, b1 = p["w1"]
        w2, b2 = p["w2"]
        g3, bt3 = p["ln3"]
        ffn = dict(w1=w1.astype(MM_DTYPE), b1=b1.reshape(1, -1),
                   w2=w2.astype(MM_DTYPE), b2=b2.reshape(1, d),
                   gamma=g3.reshape(1, d), beta=bt3.reshape(1, d))
        layers.append(dict(sa=sa, ca=ca, ffn=ffn))

    gn, bn = params["norm"]
    wp, bp = params["proj"]
    d, c_out = wp.shape
    c_pad = max(128, ((c_out + 127) // 128) * 128)   # lane-dense projection output
    wp_pad = jnp.zeros((d, c_pad), jnp.float32).at[:, :c_out].set(wp).astype(MM_DTYPE)
    bp_pad = jnp.zeros((1, c_pad), jnp.float32).at[:, :c_out].set(bp.reshape(1, -1))
    head = dict(gamma=gn.reshape(1, d), beta=bn.reshape(1, d),
                wp=wp_pad, bp=bp_pad)
    return dict(layers=layers, head=head)


# ------------------------------ decoder forward -----------------------------

def decoder_layer_forward(x, enc_out, p, n_heads):
    # self-attention block (post-norm): x = LN(x + Wo * MHA(Wq x, Wk x, Wv x))
    x, dec_attn = self_attention_block(x, p["sa"], n_heads)
    # cross-attention block:            x = LN(x + Wo * MHA(Wq x, Wk e, Wv e))
    x, cross_attn = cross_attention_block(x, enc_out, p["ca"], n_heads)
    # feed-forward block:               x = LN(x + W2 * relu(W1 x))
    x = ffn_block(x, p["ffn"])
    return x, dec_attn, cross_attn


@functools.partial(jax.jit, static_argnames=("n_heads", "c_out"))
def decoder_forward(x, enc_out, params, n_heads, c_out):
    """Mirrors Decoder.forward: stack of layers -> norm_layer -> projection."""
    dec_attns, cross_attns = [], []
    for p in params["layers"]:
        x, dec_attn, cross_attn = decoder_layer_forward(x, enc_out, p, n_heads)
        dec_attns.append(dec_attn)
        cross_attns.append(cross_attn)
    h = params["head"]
    y = layernorm_projection(x, h["gamma"], h["beta"], h["wp"], h["bp"])
    B, L, _ = x.shape
    y = y[:, :c_out].reshape(B, L, c_out)       # un-pad the lane-dense output
    return y, dec_attns, cross_attns


# ---------------------------------- main ------------------------------------

if __name__ == "__main__":
    B, L_DEC, L_ENC = 2, 8, 8
    D_MODEL, N_HEADS, D_FF, C_OUT, N_LAYERS = 32, 4, 64, 8, 2

    key = jax.random.PRNGKey(0)
    kx, ke, kp = jax.random.split(key, 3)
    x = jax.random.normal(kx, (B, L_DEC, D_MODEL), jnp.float32)
    enc_out = jax.random.normal(ke, (B, L_ENC, D_MODEL), jnp.float32)

    raw_params = init_decoder_params(kp, N_LAYERS, D_MODEL, N_HEADS, D_FF, C_OUT)
    params = prepare_decoder_params(raw_params, N_HEADS)

    out, dec_attns, cross_attns = decoder_forward(
        x, enc_out, params, n_heads=N_HEADS, c_out=C_OUT)
    jax.block_until_ready(out)
    for a in dec_attns + cross_attns:
        jax.block_until_ready(a)

    assert out.shape == (B, L_DEC, C_OUT)
    assert len(dec_attns) == N_LAYERS and dec_attns[0].shape == (B, N_HEADS, L_DEC, L_DEC)
    assert len(cross_attns) == N_LAYERS and cross_attns[0].shape == (B, N_HEADS, L_DEC, L_ENC)
    assert bool(jnp.all(jnp.isfinite(out)))

    print("KERNEL_OK")
</pallas_src>

<mosaic_0001>
module attributes {stable_mosaic.version = 11 : i64} {
  func.func @_cross_attn_kernel(%arg0: i32, %arg1: memref<1x8x32xf32, #tpu.memory_space<vmem>>, %arg2: memref<1x8x32xf32, #tpu.memory_space<vmem>>, %arg3: memref<4x32x8xbf16, #tpu.memory_space<vmem>>, %arg4: memref<4x32x8xbf16, #tpu.memory_space<vmem>>, %arg5: memref<4x32x8xbf16, #tpu.memory_space<vmem>>, %arg6: memref<4x1x8xf32, #tpu.memory_space<vmem>>, %arg7: memref<4x1x8xf32, #tpu.memory_space<vmem>>, %arg8: memref<4x1x8xf32, #tpu.memory_space<vmem>>, %arg9: memref<4x8x32xbf16, #tpu.memory_space<vmem>>, %arg10: memref<1x32xf32, #tpu.memory_space<vmem>>, %arg11: memref<1x32xf32, #tpu.memory_space<vmem>>, %arg12: memref<1x32xf32, #tpu.memory_space<vmem>>, %arg13: memref<1x8x32xf32, #tpu.memory_space<vmem>>, %arg14: memref<4x8x8xf32, #tpu.memory_space<vmem>>) attributes {dimension_semantics = [#tpu.dimension_semantics<parallel>], iteration_bounds = array<i64: 2>, scalar_prefetch = 0 : i64, scratch_operands = 0 : i64, tpu.core_type = #tpu.core_type<tc>, window_params = [{transform_indices = @transform_0, window_bounds = array<i64: 1, 8, 32>}, {transform_indices = @transform_1, window_bounds = array<i64: 1, 8, 32>}, {pipeline_mode = #tpu.pipeline_mode<synchronous>, transform_indices = @transform_2, window_bounds = array<i64: 4, 32, 8>}, {pipeline_mode = #tpu.pipeline_mode<synchronous>, transform_indices = @transform_3, window_bounds = array<i64: 4, 32, 8>}, {pipeline_mode = #tpu.pipeline_mode<synchronous>, transform_indices = @transform_4, window_bounds = array<i64: 4, 32, 8>}, {pipeline_mode = #tpu.pipeline_mode<synchronous>, transform_indices = @transform_5, window_bounds = array<i64: 4, 1, 8>}, {pipeline_mode = #tpu.pipeline_mode<synchronous>, transform_indices = @transform_6, window_bounds = array<i64: 4, 1, 8>}, {pipeline_mode = #tpu.pipeline_mode<synchronous>, transform_indices = @transform_7, window_bounds = array<i64: 4, 1, 8>}, {pipeline_mode = #tpu.pipeline_mode<synchronous>, transform_indices = @transform_8, window_bounds = array<i64: 4, 8, 32>}, {pipeline_mode = #tpu.pipeline_mode<synchronous>, transform_indices = @transform_9, window_bounds = array<i64: 1, 32>}, {pipeline_mode = #tpu.pipeline_mode<synchronous>, transform_indices = @transform_10, window_bounds = array<i64: 1, 32>}, {pipeline_mode = #tpu.pipeline_mode<synchronous>, transform_indices = @transform_11, window_bounds = array<i64: 1, 32>}, {transform_indices = @transform_12, window_bounds = array<i64: 1, 8, 32>}, {transform_indices = @transform_13, window_bounds = array<i64: 4, 8, 8>}]} {
    %c0 = arith.constant 0 : index
    %c0_0 = arith.constant 0 : index
    %c0_1 = arith.constant 0 : index
    %0 = vector.load %arg1[%c0, %c0_0, %c0_1] : memref<1x8x32xf32, #tpu.memory_space<vmem>>, vector<1x8x32xf32>
    %1 = vector.shape_cast %0 : vector<1x8x32xf32> to vector<8x32xf32>
    %c0_2 = arith.constant 0 : index
    %c0_3 = arith.constant 0 : index
    %c0_4 = arith.constant 0 : index
    %2 = vector.load %arg2[%c0_2, %c0_3, %c0_4] : memref<1x8x32xf32, #tpu.memory_space<vmem>>, vector<1x8x32xf32>
    %3 = vector.shape_cast %2 : vector<1x8x32xf32> to vector<8x32xf32>
    %c0_5 = arith.constant 0 : index
    %c0_6 = arith.constant 0 : index
    %c0_7 = arith.constant 0 : index
    %4 = vector.load %arg3[%c0_5, %c0_6, %c0_7] : memref<4x32x8xbf16, #tpu.memory_space<vmem>>, vector<4x32x8xbf16>
    %c0_8 = arith.constant 0 : index
    %c0_9 = arith.constant 0 : index
    %c0_10 = arith.constant 0 : index
    %5 = vector.load %arg4[%c0_8, %c0_9, %c0_10] : memref<4x32x8xbf16, #tpu.memory_space<vmem>>, vector<4x32x8xbf16>
    %c0_11 = arith.constant 0 : index
    %c0_12 = arith.constant 0 : index
    %c0_13 = arith.constant 0 : index
    %6 = vector.load %arg5[%c0_11, %c0_12, %c0_13] : memref<4x32x8xbf16, #tpu.memory_space<vmem>>, vector<4x32x8xbf16>
    %c0_14 = arith.constant 0 : index
    %c0_15 = arith.constant 0 : index
    %c0_16 = arith.constant 0 : index
    %7 = vector.load %arg6[%c0_14, %c0_15, %c0_16] : memref<4x1x8xf32, #tpu.memory_space<vmem>>, vector<4x1x8xf32>
    %c0_17 = arith.constant 0 : index
    %c0_18 = arith.constant 0 : index
    %c0_19 = arith.constant 0 : index
    %8 = vector.load %arg7[%c0_17, %c0_18, %c0_19] : memref<4x1x8xf32, #tpu.memory_space<vmem>>, vector<4x1x8xf32>
    %c0_20 = arith.constant 0 : index
    %c0_21 = arith.constant 0 : index
    %c0_22 = arith.constant 0 : index
    %9 = vector.load %arg8[%c0_20, %c0_21, %c0_22] : memref<4x1x8xf32, #tpu.memory_space<vmem>>, vector<4x1x8xf32>
    %c0_23 = arith.constant 0 : index
    %c0_24 = arith.constant 0 : index
    %c0_25 = arith.constant 0 : index
    %10 = vector.load %arg9[%c0_23, %c0_24, %c0_25] : memref<4x8x32xbf16, #tpu.memory_space<vmem>>, vector<4x8x32xbf16>
    %c0_26 = arith.constant 0 : index
    %c0_27 = arith.constant 0 : index
    %11 = vector.load %arg10[%c0_26, %c0_27] : memref<1x32xf32, #tpu.memory_space<vmem>>, vector<1x32xf32>
    %c0_28 = arith.constant 0 : index
    %c0_29 = arith.constant 0 : index
    %12 = vector.load %arg11[%c0_28, %c0_29] : memref<1x32xf32, #tpu.memory_space<vmem>>, vector<1x32xf32>
    %c0_30 = arith.constant 0 : index
    %c0_31 = arith.constant 0 : index
    %13 = vector.load %arg12[%c0_30, %c0_31] : memref<1x32xf32, #tpu.memory_space<vmem>>, vector<1x32xf32>
    %14 = arith.truncf %1 : vector<8x32xf32> to vector<8x32xbf16>
    %15 = arith.truncf %3 : vector<8x32xf32> to vector<8x32xbf16>
    %16 = vector.shape_cast %14 : vector<8x32xbf16> to vector<1x8x32xbf16>
    %17 = vector.shape_cast %16 : vector<1x8x32xbf16> to vector<1x8x32xbf16>
    %18 = vector.broadcast %17 : vector<1x8x32xbf16> to vector<4x8x32xbf16>
    %19 = vector.shape_cast %15 : vector<8x32xbf16> to vector<1x8x32xbf16>
    %20 = vector.shape_cast %19 : vector<1x8x32xbf16> to vector<1x8x32xbf16>
    %21 = vector.broadcast %20 : vector<1x8x32xbf16> to vector<4x8x32xbf16>
    "tpu.trace_start"() <{level = 10 : i32, message = "hld,hdk->hlk"}> : () -> ()
    %cst = arith.constant dense<0.000000e+00> : vector<4x8x8xf32>
    %22 = tpu.matmul %18, %4, %cst {dimension_numbers = #tpu.dot_dimension_numbers<[2], [1], [1], [2], [0, 0, 0, 1, 1, 2], [0], [0]>} : vector<4x8x32xbf16>, vector<4x32x8xbf16>, vector<4x8x8xf32> -> vector<4x8x8xf32>
    "tpu.trace_stop"() : () -> ()
    %23 = vector.broadcast %7 : vector<4x1x8xf32> to vector<4x8x8xf32>
    %24 = arith.addf %22, %23 : vector<4x8x8xf32>
    "tpu.trace_start"() <{level = 10 : i32, message = "hld,hdk->hlk"}> : () -> ()
    %cst_32 = arith.constant dense<0.000000e+00> : vector<4x8x8xf32>
    %25 = tpu.matmul %21, %5, %cst_32 {dimension_numbers = #tpu.dot_dimension_numbers<[2], [1], [1], [2], [0, 0, 0, 1, 1, 2], [0], [0]>} : vector<4x8x32xbf16>, vector<4x32x8xbf16>, vector<4x8x8xf32> -> vector<4x8x8xf32>
    "tpu.trace_stop"() : () -> ()
    %26 = vector.broadcast %8 : vector<4x1x8xf32> to vector<4x8x8xf32>
    %27 = arith.addf %25, %26 : vector<4x8x8xf32>
    "tpu.trace_start"() <{level = 10 : i32, message = "hld,hdk->hlk"}> : () -> ()
    %cst_33 = arith.constant dense<0.000000e+00> : vector<4x8x8xf32>
    %28 = tpu.matmul %21, %6, %cst_33 {dimension_numbers = #tpu.dot_dimension_numbers<[2], [1], [1], [2], [0, 0, 0, 1, 1, 2], [0], [0]>} : vector<4x8x32xbf16>, vector<4x32x8xbf16>, vector<4x8x8xf32> -> vector<4x8x8xf32>
    "tpu.trace_stop"() : () -> ()
    %29 = vector.broadcast %9 : vector<4x1x8xf32> to vector<4x8x8xf32>
    %30 = arith.addf %28, %29 : vector<4x8x8xf32>
    %31 = arith.truncf %24 : vector<4x8x8xf32> to vector<4x8x8xbf16>
    %32 = arith.truncf %27 : vector<4x8x8xf32> to vector<4x8x8xbf16>
    "tpu.trace_start"() <{level = 10 : i32, message = "hqd,hkd->hqk"}> : () -> ()
    %cst_34 = arith.constant dense<0.000000e+00> : vector<4x8x8xf32>
    %33 = tpu.matmul %31, %32, %cst_34 {dimension_numbers = #tpu.dot_dimension_numbers<[2], [2], [1], [1], [0, 0, 0, 1, 1, 1], [0], [0]>} : vector<4x8x8xbf16>, vector<4x8x8xbf16>, vector<4x8x8xf32> -> vector<4x8x8xf32>
    "tpu.trace_stop"() : () -> ()
    %cst_35 = arith.constant dense<0xFF800000> : vector<4x8xf32>
    %34 = vector.multi_reduction <maximumf>, %33, %cst_35 [2] : vector<4x8x8xf32> to vector<4x8xf32>
    %35 = vector.shape_cast %34 : vector<4x8xf32> to vector<4x8x1xf32>
    %36 = vector.broadcast %35 : vector<4x8x1xf32> to vector<4x8x8xf32>
    %37 = arith.subf %33, %36 : vector<4x8x8xf32>
    %38 = math.exp %37 : vector<4x8x8xf32>
    %cst_36 = arith.constant dense<0.000000e+00> : vector<4x8xf32>
    %39 = vector.multi_reduction <add>, %38, %cst_36 [2] : vector<4x8x8xf32> to vector<4x8xf32>
    %40 = vector.shape_cast %39 : vector<4x8xf32> to vector<4x8x1xf32>
    %41 = tpu.reciprocal %40 {approx = true} : vector<4x8x1xf32> -> vector<4x8x1xf32>
    %42 = vector.broadcast %41 : vector<4x8x1xf32> to vector<4x8x8xf32>
    %43 = arith.mulf %38, %42 : vector<4x8x8xf32>
    %c0_37 = arith.constant 0 : index
    %c0_38 = arith.constant 0 : index
    %c0_39 = arith.constant 0 : index
    %44 = vector.load %arg14[%c0_37, %c0_38, %c0_39] : memref<4x8x8xf32, #tpu.memory_space<vmem>>, vector<4x8x8xf32>
    tpu.vector_store %arg14[%c0_37, %c0_38, %c0_39], %43 {strides = array<i32>} : memref<4x8x8xf32, #tpu.memory_space<vmem>>, vector<4x8x8xf32>,
    %45 = arith.truncf %43 : vector<4x8x8xf32> to vector<4x8x8xbf16>
    %46 = arith.truncf %30 : vector<4x8x8xf32> to vector<4x8x8xbf16>
    "tpu.trace_start"() <{level = 10 : i32, message = "hqk,hkd->hqd"}> : () -> ()
    %cst_40 = arith.constant dense<0.000000e+00> : vector<4x8x8xf32>
    %47 = tpu.matmul %45, %46, %cst_40 {dimension_numbers = #tpu.dot_dimension_numbers<[2], [1], [1], [2], [0, 0, 0, 1, 1, 2], [0], [0]>} : vector<4x8x8xbf16>, vector<4x8x8xbf16>, vector<4x8x8xf32> -> vector<4x8x8xf32>
    "tpu.trace_stop"() : () -> ()
    %48 = vector.extract_strided_slice %47 {offsets = [0, 0, 0], sizes = [1, 8, 8], strides = [1, 1, 1]} : vector<4x8x8xf32> to vector<1x8x8xf32>
    %49 = vector.shape_cast %48 : vector<1x8x8xf32> to vector<8x8xf32>
    %50 = arith.truncf %49 : vector<8x8xf32> to vector<8x8xbf16>
    %51 = vector.extract_strided_slice %10 {offsets = [0, 0, 0], sizes = [1, 8, 32], strides = [1, 1, 1]} : vector<4x8x32xbf16> to vector<1x8x32xbf16>
    %52 = vector.shape_cast %51 : vector<1x8x32xbf16> to vector<8x32xbf16>
    %cst_41 = arith.constant dense<0.000000e+00> : vector<8x32xf32>
    %53 = tpu.matmul %50, %52, %cst_41 {dimension_numbers = #tpu.dot_dimension_numbers<[1], [0], [0], [1], [0, 0, 1, 1], [], []>} : vector<8x8xbf16>, vector<8x32xbf16>, vector<8x32xf32> -> vector<8x32xf32>
    %54 = vector.broadcast %11 : vector<1x32xf32> to vector<8x32xf32>
    %55 = arith.addf %54, %53 : vector<8x32xf32>
    %56 = vector.extract_strided_slice %47 {offsets = [1, 0, 0], sizes = [1, 8, 8], strides = [1, 1, 1]} : vector<4x8x8xf32> to vector<1x8x8xf32>
    %57 = vector.shape_cast %56 : vector<1x8x8xf32> to vector<8x8xf32>
    %58 = arith.truncf %57 : vector<8x8xf32> to vector<8x8xbf16>
    %59 = vector.extract_strided_slice %10 {offsets = [1, 0, 0], sizes = [1, 8, 32], strides = [1, 1, 1]} : vector<4x8x32xbf16> to vector<1x8x32xbf16>
    %60 = vector.shape_cast %59 : vector<1x8x32xbf16> to vector<8x32xbf16>
    %cst_42 = arith.constant dense<0.000000e+00> : vector<8x32xf32>
    %61 = tpu.matmul %58, %60, %cst_42 {dimension_numbers = #tpu.dot_dimension_numbers<[1], [0], [0], [1], [0, 0, 1, 1], [], []>} : vector<8x8xbf16>, vector<8x32xbf16>, vector<8x32xf32> -> vector<8x32xf32>
    %62 = arith.addf %55, %61 : vector<8x32xf32>
    %63 = vector.extract_strided_slice %47 {offsets = [2, 0, 0], sizes = [1, 8, 8], strides = [1, 1, 1]} : vector<4x8x8xf32> to vector<1x8x8xf32>
    %64 = vector.shape_cast %63 : vector<1x8x8xf32> to vector<8x8xf32>
    %65 = arith.truncf %64 : vector<8x8xf32> to vector<8x8xbf16>
    %66 = vector.extract_strided_slice %10 {offsets = [2, 0, 0], sizes = [1, 8, 32], strides = [1, 1, 1]} : vector<4x8x32xbf16> to vector<1x8x32xbf16>
    %67 = vector.shape_cast %66 : vector<1x8x32xbf16> to vector<8x32xbf16>
    %cst_43 = arith.constant dense<0.000000e+00> : vector<8x32xf32>
    %68 = tpu.matmul %65, %67, %cst_43 {dimension_numbers = #tpu.dot_dimension_numbers<[1], [0], [0], [1], [0, 0, 1, 1], [], []>} : vector<8x8xbf16>, vector<8x32xbf16>, vector<8x32xf32> -> vector<8x32xf32>
    %69 = arith.addf %62, %68 : vector<8x32xf32>
    %70 = vector.extract_strided_slice %47 {offsets = [3, 0, 0], sizes = [1, 8, 8], strides = [1, 1, 1]} : vector<4x8x8xf32> to vector<1x8x8xf32>
    %71 = vector.shape_cast %70 : vector<1x8x8xf32> to vector<8x8xf32>
    %72 = arith.truncf %71 : vector<8x8xf32> to vector<8x8xbf16>
    %73 = vector.extract_strided_slice %10 {offsets = [3, 0, 0], sizes = [1, 8, 32], strides = [1, 1, 1]} : vector<4x8x32xbf16> to vector<1x8x32xbf16>
    %74 = vector.shape_cast %73 : vector<1x8x32xbf16> to vector<8x32xbf16>
    %cst_44 = arith.constant dense<0.000000e+00> : vector<8x32xf32>
    %75 = tpu.matmul %72, %74, %cst_44 {dimension_numbers = #tpu.dot_dimension_numbers<[1], [0], [0], [1], [0, 0, 1, 1], [], []>} : vector<8x8xbf16>, vector<8x32xbf16>, vector<8x32xf32> -> vector<8x32xf32>
    %76 = arith.addf %69, %75 : vector<8x32xf32>
    %77 = arith.addf %1, %76 : vector<8x32xf32>
    %cst_45 = arith.constant dense<0.000000e+00> : vector<8xf32>
    %78 = vector.multi_reduction <add>, %77, %cst_45 [1] : vector<8x32xf32> to vector<8xf32>
    %79 = vector.shape_cast %78 : vector<8xf32> to vector<8x1xf32>
    %cst_46 = arith.constant 3.200000e+01 : f32
    %80 = vector.broadcast %cst_46 : f32 to vector<8x1xf32>
    %81 = arith.divf %79, %80 : vector<8x1xf32>
    %82 = vector.broadcast %81 : vector<8x1xf32> to vector<8x32xf32>
    %83 = arith.subf %77, %82 : vector<8x32xf32>
    %84 = arith.mulf %83, %83 : vector<8x32xf32>
    %cst_47 = arith.constant dense<0.000000e+00> : vector<8xf32>
    %85 = vector.multi_reduction <add>, %84, %cst_47 [1] : vector<8x32xf32> to vector<8xf32>
    %86 = vector.shape_cast %85 : vector<8xf32> to vector<8x1xf32>
    %cst_48 = arith.constant 3.200000e+01 : f32
    %87 = vector.broadcast %cst_48 : f32 to vector<8x1xf32>
    %88 = arith.divf %86, %87 : vector<8x1xf32>
    %89 = vector.broadcast %81 : vector<8x1xf32> to vector<8x32xf32>
    %90 = arith.subf %77, %89 : vector<8x32xf32>
    %cst_49 = arith.constant 9.99999974E-6 : f32
    %91 = vector.broadcast %cst_49 : f32 to vector<8x1xf32>
    %92 = arith.addf %88, %91 : vector<8x1xf32>
    %93 = math.rsqrt %92 : vector<8x1xf32>
    %94 = vector.broadcast %93 : vector<8x1xf32> to vector<8x32xf32>
    %95 = arith.mulf %90, %94 : vector<8x32xf32>
    %96 = vector.broadcast %12 : vector<1x32xf32> to vector<8x32xf32>
    %97 = arith.mulf %95, %96 : vector<8x32xf32>
    %98 = vector.broadcast %13 : vector<1x32xf32> to vector<8x32xf32>
    %99 = arith.addf %97, %98 : vector<8x32xf32>
    %c0_50 = arith.constant 0 : index
    %c0_51 = arith.constant 0 : index
    %c0_52 = arith.constant 0 : index
    %100 = vector.load %arg13[%c0_50, %c0_51, %c0_52] : memref<1x8x32xf32, #tpu.memory_space<vmem>>, vector<1x8x32xf32>
    %101 = vector.shape_cast %100 : vector<1x8x32xf32> to vector<8x32xf32>
    %102 = vector.shape_cast %99 : vector<8x32xf32> to vector<1x8x32xf32>
    tpu.vector_store %arg13[%c0_50, %c0_51, %c0_52], %102 {strides = array<i32>} : memref<1x8x32xf32, #tpu.memory_space<vmem>>, vector<1x8x32xf32>,
    return
  }
  func.func @transform_0(%arg0: i32) -> (i32, i32, i32) {
    %c0_i32 = arith.constant 0 : i32
    %c0_i32_0 = arith.constant 0 : i32
    %c0_i32_1 = arith.constant 0 : i32
    return %arg0, %c0_i32, %c0_i32_0 : i32, i32, i32
  }
  func.func @transform_1(%arg0: i32) -> (i32, i32, i32) {
    %c0_i32 = arith.constant 0 : i32
    %c0_i32_0 = arith.constant 0 : i32
    %c0_i32_1 = arith.constant 0 : i32
    return %arg0, %c0_i32, %c0_i32_0 : i32, i32, i32
  }
  func.func @transform_2(%arg0: i32) -> (i32, i32, i32) {
    %c0_i32 = arith.constant 0 : i32
    %c0_i32_0 = arith.constant 0 : i32
    %c0_i32_1 = arith.constant 0 : i32
    %c0_i32_2 = arith.constant 0 : i32
    return %c0_i32, %c0_i32_0, %c0_i32_1 : i32, i32, i32
  }
  func.func @transform_3(%arg0: i32) -> (i32, i32, i32) {
    %c0_i32 = arith.constant 0 : i32
    %c0_i32_0 = arith.constant 0 : i32
    %c0_i32_1 = arith.constant 0 : i32
    %c0_i32_2 = arith.constant 0 : i32
    return %c0_i32, %c0_i32_0, %c0_i32_1 : i32, i32, i32
  }
  func.func @transform_4(%arg0: i32) -> (i32, i32, i32) {
    %c0_i32 = arith.constant 0 : i32
    %c0_i32_0 = arith.constant 0 : i32
    %c0_i32_1 = arith.constant 0 : i32
    %c0_i32_2 = arith.constant 0 : i32
    return %c0_i32, %c0_i32_0, %c0_i32_1 : i32, i32, i32
  }
  func.func @transform_5(%arg0: i32) -> (i32, i32, i32) {
    %c0_i32 = arith.constant 0 : i32
    %c0_i32_0 = arith.constant 0 : i32
    %c0_i32_1 = arith.constant 0 : i32
    %c0_i32_2 = arith.constant 0 : i32
    return %c0_i32, %c0_i32_0, %c0_i32_1 : i32, i32, i32
  }
  func.func @transform_6(%arg0: i32) -> (i32, i32, i32) {
    %c0_i32 = arith.constant 0 : i32
    %c0_i32_0 = arith.constant 0 : i32
    %c0_i32_1 = arith.constant 0 : i32
    %c0_i32_2 = arith.constant 0 : i32
    return %c0_i32, %c0_i32_0, %c0_i32_1 : i32, i32, i32
  }
  func.func @transform_7(%arg0: i32) -> (i32, i32, i32) {
    %c0_i32 = arith.constant 0 : i32
    %c0_i32_0 = arith.constant 0 : i32
    %c0_i32_1 = arith.constant 0 : i32
    %c0_i32_2 = arith.constant 0 : i32
    return %c0_i32, %c0_i32_0, %c0_i32_1 : i32, i32, i32
  }
  func.func @transform_8(%arg0: i32) -> (i32, i32, i32) {
    %c0_i32 = arith.constant 0 : i32
    %c0_i32_0 = arith.constant 0 : i32
    %c0_i32_1 = arith.constant 0 : i32
    %c0_i32_2 = arith.constant 0 : i32
    return %c0_i32, %c0_i32_0, %c0_i32_1 : i32, i32, i32
  }
  func.func @transform_9(%arg0: i32) -> (i32, i32) {
    %c0_i32 = arith.constant 0 : i32
    %c0_i32_0 = arith.constant 0 : i32
    %c0_i32_1 = arith.constant 0 : i32
    return %c0_i32, %c0_i32_0 : i32, i32
  }
  func.func @transform_10(%arg0: i32) -> (i32, i32) {
    %c0_i32 = arith.constant 0 : i32
    %c0_i32_0 = arith.constant 0 : i32
    %c0_i32_1 = arith.constant 0 : i32
    return %c0_i32, %c0_i32_0 : i32, i32
  }
  func.func @transform_11(%arg0: i32) -> (i32, i32) {
    %c0_i32 = arith.constant 0 : i32
    %c0_i32_0 = arith.constant 0 : i32
    %c0_i32_1 = arith.constant 0 : i32
    return %c0_i32, %c0_i32_0 : i32, i32
  }
  func.func @transform_12(%arg0: i32) -> (i32, i32, i32) {
    %c0_i32 = arith.constant 0 : i32
    %c0_i32_0 = arith.constant 0 : i32
    %c0_i32_1 = arith.constant 0 : i32
    return %arg0, %c0_i32, %c0_i32_0 : i32, i32, i32
  }
  func.func @transform_13(%arg0: i32) -> (i32, i32, i32) {
    %c0_i32 = arith.constant 0 : i32
    %c0_i32_0 = arith.constant 0 : i32
    %c0_i32_1 = arith.constant 0 : i32
    return %arg0, %c0_i32, %c0_i32_0 : i32, i32, i32
  }
}

module attributes {stable_mosaic.version = 11 : i64} {
  func.func @_self_attn_kernel(%arg0: i32, %arg1: memref<1x8x32xf32, #tpu.memory_space<vmem>>, %arg2: memref<4x32x8xbf16, #tpu.memory_space<vmem>>, %arg3: memref<4x32x8xbf16, #tpu.memory_space<vmem>>, %arg4: memref<4x32x8xbf16, #tpu.memory_space<vmem>>, %arg5: memref<4x1x8xf32, #tpu.memory_space<vmem>>, %arg6: memref<4x1x8xf32, #tpu.memory_space<vmem>>, %arg7: memref<4x1x8xf32, #tpu.memory_space<vmem>>, %arg8: memref<4x8x32xbf16, #tpu.memory_space<vmem>>, %arg9: memref<1x32xf32, #tpu.memory_space<vmem>>, %arg10: memref<1x32xf32, #tpu.memory_space<vmem>>, %arg11: memref<1x32xf32, #tpu.memory_space<vmem>>, %arg12: memref<1x8x32xf32, #tpu.memory_space<vmem>>, %arg13: memref<4x8x8xf32, #tpu.memory_space<vmem>>) attributes {dimension_semantics = [#tpu.dimension_semantics<parallel>], iteration_bounds = array<i64: 2>, scalar_prefetch = 0 : i64, scratch_operands = 0 : i64, tpu.core_type = #tpu.core_type<tc>, window_params = [{transform_indices = @transform_0, window_bounds = array<i64: 1, 8, 32>}, {pipeline_mode = #tpu.pipeline_mode<synchronous>, transform_indices = @transform_1, window_bounds = array<i64: 4, 32, 8>}, {pipeline_mode = #tpu.pipeline_mode<synchronous>, transform_indices = @transform_2, window_bounds = array<i64: 4, 32, 8>}, {pipeline_mode = #tpu.pipeline_mode<synchronous>, transform_indices = @transform_3, window_bounds = array<i64: 4, 32, 8>}, {pipeline_mode = #tpu.pipeline_mode<synchronous>, transform_indices = @transform_4, window_bounds = array<i64: 4, 1, 8>}, {pipeline_mode = #tpu.pipeline_mode<synchronous>, transform_indices = @transform_5, window_bounds = array<i64: 4, 1, 8>}, {pipeline_mode = #tpu.pipeline_mode<synchronous>, transform_indices = @transform_6, window_bounds = array<i64: 4, 1, 8>}, {pipeline_mode = #tpu.pipeline_mode<synchronous>, transform_indices = @transform_7, window_bounds = array<i64: 4, 8, 32>}, {pipeline_mode = #tpu.pipeline_mode<synchronous>, transform_indices = @transform_8, window_bounds = array<i64: 1, 32>}, {pipeline_mode = #tpu.pipeline_mode<synchronous>, transform_indices = @transform_9, window_bounds = array<i64: 1, 32>}, {pipeline_mode = #tpu.pipeline_mode<synchronous>, transform_indices = @transform_10, window_bounds = array<i64: 1, 32>}, {transform_indices = @transform_11, window_bounds = array<i64: 1, 8, 32>}, {transform_indices = @transform_12, window_bounds = array<i64: 4, 8, 8>}]} {
    %c0 = arith.constant 0 : index
    %c0_0 = arith.constant 0 : index
    %c0_1 = arith.constant 0 : index
    %0 = vector.load %arg1[%c0, %c0_0, %c0_1] : memref<1x8x32xf32, #tpu.memory_space<vmem>>, vector<1x8x32xf32>
    %1 = vector.shape_cast %0 : vector<1x8x32xf32> to vector<8x32xf32>
    %c0_2 = arith.constant 0 : index
    %c0_3 = arith.constant 0 : index
    %c0_4 = arith.constant 0 : index
    %2 = vector.load %arg2[%c0_2, %c0_3, %c0_4] : memref<4x32x8xbf16, #tpu.memory_space<vmem>>, vector<4x32x8xbf16>
    %c0_5 = arith.constant 0 : index
    %c0_6 = arith.constant 0 : index
    %c0_7 = arith.constant 0 : index
    %3 = vector.load %arg3[%c0_5, %c0_6, %c0_7] : memref<4x32x8xbf16, #tpu.memory_space<vmem>>, vector<4x32x8xbf16>
    %c0_8 = arith.constant 0 : index
    %c0_9 = arith.constant 0 : index
    %c0_10 = arith.constant 0 : index
    %4 = vector.load %arg4[%c0_8, %c0_9, %c0_10] : memref<4x32x8xbf16, #tpu.memory_space<vmem>>, vector<4x32x8xbf16>
    %c0_11 = arith.constant 0 : index
    %c0_12 = arith.constant 0 : index
    %c0_13 = arith.constant 0 : index
    %5 = vector.load %arg5[%c0_11, %c0_12, %c0_13] : memref<4x1x8xf32, #tpu.memory_space<vmem>>, vector<4x1x8xf32>
    %c0_14 = arith.constant 0 : index
    %c0_15 = arith.constant 0 : index
    %c0_16 = arith.constant 0 : index
    %6 = vector.load %arg6[%c0_14, %c0_15, %c0_16] : memref<4x1x8xf32, #tpu.memory_space<vmem>>, vector<4x1x8xf32>
    %c0_17 = arith.constant 0 : index
    %c0_18 = arith.constant 0 : index
    %c0_19 = arith.constant 0 : index
    %7 = vector.load %arg7[%c0_17, %c0_18, %c0_19] : memref<4x1x8xf32, #tpu.memory_space<vmem>>, vector<4x1x8xf32>
    %c0_20 = arith.constant 0 : index
    %c0_21 = arith.constant 0 : index
    %c0_22 = arith.constant 0 : index
    %8 = vector.load %arg8[%c0_20, %c0_21, %c0_22] : memref<4x8x32xbf16, #tpu.memory_space<vmem>>, vector<4x8x32xbf16>
    %c0_23 = arith.constant 0 : index
    %c0_24 = arith.constant 0 : index
    %9 = vector.load %arg9[%c0_23, %c0_24] : memref<1x32xf32, #tpu.memory_space<vmem>>, vector<1x32xf32>
    %c0_25 = arith.constant 0 : index
    %c0_26 = arith.constant 0 : index
    %10 = vector.load %arg10[%c0_25, %c0_26] : memref<1x32xf32, #tpu.memory_space<vmem>>, vector<1x32xf32>
    %c0_27 = arith.constant 0 : index
    %c0_28 = arith.constant 0 : index
    %11 = vector.load %arg11[%c0_27, %c0_28] : memref<1x32xf32, #tpu.memory_space<vmem>>, vector<1x32xf32>
    %12 = arith.truncf %1 : vector<8x32xf32> to vector<8x32xbf16>
    %13 = arith.truncf %1 : vector<8x32xf32> to vector<8x32xbf16>
    %14 = vector.shape_cast %12 : vector<8x32xbf16> to vector<1x8x32xbf16>
    %15 = vector.shape_cast %14 : vector<1x8x32xbf16> to vector<1x8x32xbf16>
    %16 = vector.broadcast %15 : vector<1x8x32xbf16> to vector<4x8x32xbf16>
    %17 = vector.shape_cast %13 : vector<8x32xbf16> to vector<1x8x32xbf16>
    %18 = vector.shape_cast %17 : vector<1x8x32xbf16> to vector<1x8x32xbf16>
    %19 = vector.broadcast %18 : vector<1x8x32xbf16> to vector<4x8x32xbf16>
    "tpu.trace_start"() <{level = 10 : i32, message = "hld,hdk->hlk"}> : () -> ()
    %cst = arith.constant dense<0.000000e+00> : vector<4x8x8xf32>
    %20 = tpu.matmul %16, %2, %cst {dimension_numbers = #tpu.dot_dimension_numbers<[2], [1], [1], [2], [0, 0, 0, 1, 1, 2], [0], [0]>} : vector<4x8x32xbf16>, vector<4x32x8xbf16>, vector<4x8x8xf32> -> vector<4x8x8xf32>
    "tpu.trace_stop"() : () -> ()
    %21 = vector.broadcast %5 : vector<4x1x8xf32> to vector<4x8x8xf32>
    %22 = arith.addf %20, %21 : vector<4x8x8xf32>
    "tpu.trace_start"() <{level = 10 : i32, message = "hld,hdk->hlk"}> : () -> ()
    %cst_29 = arith.constant dense<0.000000e+00> : vector<4x8x8xf32>
    %23 = tpu.matmul %19, %3, %cst_29 {dimension_numbers = #tpu.dot_dimension_numbers<[2], [1], [1], [2], [0, 0, 0, 1, 1, 2], [0], [0]>} : vector<4x8x32xbf16>, vector<4x32x8xbf16>, vector<4x8x8xf32> -> vector<4x8x8xf32>
    "tpu.trace_stop"() : () -> ()
    %24 = vector.broadcast %6 : vector<4x1x8xf32> to vector<4x8x8xf32>
    %25 = arith.addf %23, %24 : vector<4x8x8xf32>
    "tpu.trace_start"() <{level = 10 : i32, message = "hld,hdk->hlk"}> : () -> ()
    %cst_30 = arith.constant dense<0.000000e+00> : vector<4x8x8xf32>
    %26 = tpu.matmul %19, %4, %cst_30 {dimension_numbers = #tpu.dot_dimension_numbers<[2], [1], [1], [2], [0, 0, 0, 1, 1, 2], [0], [0]>} : vector<4x8x32xbf16>, vector<4x32x8xbf16>, vector<4x8x8xf32> -> vector<4x8x8xf32>
    "tpu.trace_stop"() : () -> ()
    %27 = vector.broadcast %7 : vector<4x1x8xf32> to vector<4x8x8xf32>
    %28 = arith.addf %26, %27 : vector<4x8x8xf32>
    %29 = arith.truncf %22 : vector<4x8x8xf32> to vector<4x8x8xbf16>
    %30 = arith.truncf %25 : vector<4x8x8xf32> to vector<4x8x8xbf16>
    "tpu.trace_start"() <{level = 10 : i32, message = "hqd,hkd->hqk"}> : () -> ()
    %cst_31 = arith.constant dense<0.000000e+00> : vector<4x8x8xf32>
    %31 = tpu.matmul %29, %30, %cst_31 {dimension_numbers = #tpu.dot_dimension_numbers<[2], [2], [1], [1], [0, 0, 0, 1, 1, 1], [0], [0]>} : vector<4x8x8xbf16>, vector<4x8x8xbf16>, vector<4x8x8xf32> -> vector<4x8x8xf32>
    "tpu.trace_stop"() : () -> ()
    %cst_32 = arith.constant dense<0xFF800000> : vector<4x8xf32>
    %32 = vector.multi_reduction <maximumf>, %31, %cst_32 [2] : vector<4x8x8xf32> to vector<4x8xf32>
    %33 = vector.shape_cast %32 : vector<4x8xf32> to vector<4x8x1xf32>
    %34 = vector.broadcast %33 : vector<4x8x1xf32> to vector<4x8x8xf32>
    %35 = arith.subf %31, %34 : vector<4x8x8xf32>
    %36 = math.exp %35 : vector<4x8x8xf32>
    %cst_33 = arith.constant dense<0.000000e+00> : vector<4x8xf32>
    %37 = vector.multi_reduction <add>, %36, %cst_33 [2] : vector<4x8x8xf32> to vector<4x8xf32>
    %38 = vector.shape_cast %37 : vector<4x8xf32> to vector<4x8x1xf32>
    %39 = tpu.reciprocal %38 {approx = true} : vector<4x8x1xf32> -> vector<4x8x1xf32>
    %40 = vector.broadcast %39 : vector<4x8x1xf32> to vector<4x8x8xf32>
    %41 = arith.mulf %36, %40 : vector<4x8x8xf32>
    %c0_34 = arith.constant 0 : index
    %c0_35 = arith.constant 0 : index
    %c0_36 = arith.constant 0 : index
    %42 = vector.load %arg13[%c0_34, %c0_35, %c0_36] : memref<4x8x8xf32, #tpu.memory_space<vmem>>, vector<4x8x8xf32>
    tpu.vector_store %arg13[%c0_34, %c0_35, %c0_36], %41 {strides = array<i32>} : memref<4x8x8xf32, #tpu.memory_space<vmem>>, vector<4x8x8xf32>,
    %43 = arith.truncf %41 : vector<4x8x8xf32> to vector<4x8x8xbf16>
    %44 = arith.truncf %28 : vector<4x8x8xf32> to vector<4x8x8xbf16>
    "tpu.trace_start"() <{level = 10 : i32, message = "hqk,hkd->hqd"}> : () -> ()
    %cst_37 = arith.constant dense<0.000000e+00> : vector<4x8x8xf32>
    %45 = tpu.matmul %43, %44, %cst_37 {dimension_numbers = #tpu.dot_dimension_numbers<[2], [1], [1], [2], [0, 0, 0, 1, 1, 2], [0], [0]>} : vector<4x8x8xbf16>, vector<4x8x8xbf16>, vector<4x8x8xf32> -> vector<4x8x8xf32>
    "tpu.trace_stop"() : () -> ()
    %46 = vector.extract_strided_slice %45 {offsets = [0, 0, 0], sizes = [1, 8, 8], strides = [1, 1, 1]} : vector<4x8x8xf32> to vector<1x8x8xf32>
    %47 = vector.shape_cast %46 : vector<1x8x8xf32> to vector<8x8xf32>
    %48 = arith.truncf %47 : vector<8x8xf32> to vector<8x8xbf16>
    %49 = vector.extract_strided_slice %8 {offsets = [0, 0, 0], sizes = [1, 8, 32], strides = [1, 1, 1]} : vector<4x8x32xbf16> to vector<1x8x32xbf16>
    %50 = vector.shape_cast %49 : vector<1x8x32xbf16> to vector<8x32xbf16>
    %cst_38 = arith.constant dense<0.000000e+00> : vector<8x32xf32>
    %51 = tpu.matmul %48, %50, %cst_38 {dimension_numbers = #tpu.dot_dimension_numbers<[1], [0], [0], [1], [0, 0, 1, 1], [], []>} : vector<8x8xbf16>, vector<8x32xbf16>, vector<8x32xf32> -> vector<8x32xf32>
    %52 = vector.broadcast %9 : vector<1x32xf32> to vector<8x32xf32>
    %53 = arith.addf %52, %51 : vector<8x32xf32>
    %54 = vector.extract_strided_slice %45 {offsets = [1, 0, 0], sizes = [1, 8, 8], strides = [1, 1, 1]} : vector<4x8x8xf32> to vector<1x8x8xf32>
    %55 = vector.shape_cast %54 : vector<1x8x8xf32> to vector<8x8xf32>
    %56 = arith.truncf %55 : vector<8x8xf32> to vector<8x8xbf16>
    %57 = vector.extract_strided_slice %8 {offsets = [1, 0, 0], sizes = [1, 8, 32], strides = [1, 1, 1]} : vector<4x8x32xbf16> to vector<1x8x32xbf16>
    %58 = vector.shape_cast %57 : vector<1x8x32xbf16> to vector<8x32xbf16>
    %cst_39 = arith.constant dense<0.000000e+00> : vector<8x32xf32>
    %59 = tpu.matmul %56, %58, %cst_39 {dimension_numbers = #tpu.dot_dimension_numbers<[1], [0], [0], [1], [0, 0, 1, 1], [], []>} : vector<8x8xbf16>, vector<8x32xbf16>, vector<8x32xf32> -> vector<8x32xf32>
    %60 = arith.addf %53, %59 : vector<8x32xf32>
    %61 = vector.extract_strided_slice %45 {offsets = [2, 0, 0], sizes = [1, 8, 8], strides = [1, 1, 1]} : vector<4x8x8xf32> to vector<1x8x8xf32>
    %62 = vector.shape_cast %61 : vector<1x8x8xf32> to vector<8x8xf32>
    %63 = arith.truncf %62 : vector<8x8xf32> to vector<8x8xbf16>
    %64 = vector.extract_strided_slice %8 {offsets = [2, 0, 0], sizes = [1, 8, 32], strides = [1, 1, 1]} : vector<4x8x32xbf16> to vector<1x8x32xbf16>
    %65 = vector.shape_cast %64 : vector<1x8x32xbf16> to vector<8x32xbf16>
    %cst_40 = arith.constant dense<0.000000e+00> : vector<8x32xf32>
    %66 = tpu.matmul %63, %65, %cst_40 {dimension_numbers = #tpu.dot_dimension_numbers<[1], [0], [0], [1], [0, 0, 1, 1], [], []>} : vector<8x8xbf16>, vector<8x32xbf16>, vector<8x32xf32> -> vector<8x32xf32>
    %67 = arith.addf %60, %66 : vector<8x32xf32>
    %68 = vector.extract_strided_slice %45 {offsets = [3, 0, 0], sizes = [1, 8, 8], strides = [1, 1, 1]} : vector<4x8x8xf32> to vector<1x8x8xf32>
    %69 = vector.shape_cast %68 : vector<1x8x8xf32> to vector<8x8xf32>
    %70 = arith.truncf %69 : vector<8x8xf32> to vector<8x8xbf16>
    %71 = vector.extract_strided_slice %8 {offsets = [3, 0, 0], sizes = [1, 8, 32], strides = [1, 1, 1]} : vector<4x8x32xbf16> to vector<1x8x32xbf16>
    %72 = vector.shape_cast %71 : vector<1x8x32xbf16> to vector<8x32xbf16>
    %cst_41 = arith.constant dense<0.000000e+00> : vector<8x32xf32>
    %73 = tpu.matmul %70, %72, %cst_41 {dimension_numbers = #tpu.dot_dimension_numbers<[1], [0], [0], [1], [0, 0, 1, 1], [], []>} : vector<8x8xbf16>, vector<8x32xbf16>, vector<8x32xf32> -> vector<8x32xf32>
    %74 = arith.addf %67, %73 : vector<8x32xf32>
    %75 = arith.addf %1, %74 : vector<8x32xf32>
    %cst_42 = arith.constant dense<0.000000e+00> : vector<8xf32>
    %76 = vector.multi_reduction <add>, %75, %cst_42 [1] : vector<8x32xf32> to vector<8xf32>
    %77 = vector.shape_cast %76 : vector<8xf32> to vector<8x1xf32>
    %cst_43 = arith.constant 3.200000e+01 : f32
    %78 = vector.broadcast %cst_43 : f32 to vector<8x1xf32>
    %79 = arith.divf %77, %78 : vector<8x1xf32>
    %80 = vector.broadcast %79 : vector<8x1xf32> to vector<8x32xf32>
    %81 = arith.subf %75, %80 : vector<8x32xf32>
    %82 = arith.mulf %81, %81 : vector<8x32xf32>
    %cst_44 = arith.constant dense<0.000000e+00> : vector<8xf32>
    %83 = vector.multi_reduction <add>, %82, %cst_44 [1] : vector<8x32xf32> to vector<8xf32>
    %84 = vector.shape_cast %83 : vector<8xf32> to vector<8x1xf32>
    %cst_45 = arith.constant 3.200000e+01 : f32
    %85 = vector.broadcast %cst_45 : f32 to vector<8x1xf32>
    %86 = arith.divf %84, %85 : vector<8x1xf32>
    %87 = vector.broadcast %79 : vector<8x1xf32> to vector<8x32xf32>
    %88 = arith.subf %75, %87 : vector<8x32xf32>
    %cst_46 = arith.constant 9.99999974E-6 : f32
    %89 = vector.broadcast %cst_46 : f32 to vector<8x1xf32>
    %90 = arith.addf %86, %89 : vector<8x1xf32>
    %91 = math.rsqrt %90 : vector<8x1xf32>
    %92 = vector.broadcast %91 : vector<8x1xf32> to vector<8x32xf32>
    %93 = arith.mulf %88, %92 : vector<8x32xf32>
    %94 = vector.broadcast %10 : vector<1x32xf32> to vector<8x32xf32>
    %95 = arith.mulf %93, %94 : vector<8x32xf32>
    %96 = vector.broadcast %11 : vector<1x32xf32> to vector<8x32xf32>
    %97 = arith.addf %95, %96 : vector<8x32xf32>
    %c0_47 = arith.constant 0 : index
    %c0_48 = arith.constant 0 : index
    %c0_49 = arith.constant 0 : index
    %98 = vector.load %arg12[%c0_47, %c0_48, %c0_49] : memref<1x8x32xf32, #tpu.memory_space<vmem>>, vector<1x8x32xf32>
    %99 = vector.shape_cast %98 : vector<1x8x32xf32> to vector<8x32xf32>
    %100 = vector.shape_cast %97 : vector<8x32xf32> to vector<1x8x32xf32>
    tpu.vector_store %arg12[%c0_47, %c0_48, %c0_49], %100 {strides = array<i32>} : memref<1x8x32xf32, #tpu.memory_space<vmem>>, vector<1x8x32xf32>,
    return
  }
  func.func @transform_0(%arg0: i32) -> (i32, i32, i32) {
    %c0_i32 = arith.constant 0 : i32
    %c0_i32_0 = arith.constant 0 : i32
    %c0_i32_1 = arith.constant 0 : i32
    return %arg0, %c0_i32, %c0_i32_0 : i32, i32, i32
  }
  func.func @transform_1(%arg0: i32) -> (i32, i32, i32) {
    %c0_i32 = arith.constant 0 : i32
    %c0_i32_0 = arith.constant 0 : i32
    %c0_i32_1 = arith.constant 0 : i32
    %c0_i32_2 = arith.constant 0 : i32
    return %c0_i32, %c0_i32_0, %c0_i32_1 : i32, i32, i32
  }
  func.func @transform_2(%arg0: i32) -> (i32, i32, i32) {
    %c0_i32 = arith.constant 0 : i32
    %c0_i32_0 = arith.constant 0 : i32
    %c0_i32_1 = arith.constant 0 : i32
    %c0_i32_2 = arith.constant 0 : i32
    return %c0_i32, %c0_i32_0, %c0_i32_1 : i32, i32, i32
  }
  func.func @transform_3(%arg0: i32) -> (i32, i32, i32) {
    %c0_i32 = arith.constant 0 : i32
    %c0_i32_0 = arith.constant 0 : i32
    %c0_i32_1 = arith.constant 0 : i32
    %c0_i32_2 = arith.constant 0 : i32
    return %c0_i32, %c0_i32_0, %c0_i32_1 : i32, i32, i32
  }
  func.func @transform_4(%arg0: i32) -> (i32, i32, i32) {
    %c0_i32 = arith.constant 0 : i32
    %c0_i32_0 = arith.constant 0 : i32
    %c0_i32_1 = arith.constant 0 : i32
    %c0_i32_2 = arith.constant 0 : i32
    return %c0_i32, %c0_i32_0, %c0_i32_1 : i32, i32, i32
  }
  func.func @transform_5(%arg0: i32) -> (i32, i32, i32) {
    %c0_i32 = arith.constant 0 : i32
    %c0_i32_0 = arith.constant 0 : i32
    %c0_i32_1 = arith.constant 0 : i32
    %c0_i32_2 = arith.constant 0 : i32
    return %c0_i32, %c0_i32_0, %c0_i32_1 : i32, i32, i32
  }
  func.func @transform_6(%arg0: i32) -> (i32, i32, i32) {
    %c0_i32 = arith.constant 0 : i32
    %c0_i32_0 = arith.constant 0 : i32
    %c0_i32_1 = arith.constant 0 : i32
    %c0_i32_2 = arith.constant 0 : i32
    return %c0_i32, %c0_i32_0, %c0_i32_1 : i32, i32, i32
  }
  func.func @transform_7(%arg0: i32) -> (i32, i32, i32) {
    %c0_i32 = arith.constant 0 : i32
    %c0_i32_0 = arith.constant 0 : i32
    %c0_i32_1 = arith.constant 0 : i32
    %c0_i32_2 = arith.constant 0 : i32
    return %c0_i32, %c0_i32_0, %c0_i32_1 : i32, i32, i32
  }
  func.func @transform_8(%arg0: i32) -> (i32, i32) {
    %c0_i32 = arith.constant 0 : i32
    %c0_i32_0 = arith.constant 0 : i32
    %c0_i32_1 = arith.constant 0 : i32
    return %c0_i32, %c0_i32_0 : i32, i32
  }
  func.func @transform_9(%arg0: i32) -> (i32, i32) {
    %c0_i32 = arith.constant 0 : i32
    %c0_i32_0 = arith.constant 0 : i32
    %c0_i32_1 = arith.constant 0 : i32
    return %c0_i32, %c0_i32_0 : i32, i32
  }
  func.func @transform_10(%arg0: i32) -> (i32, i32) {
    %c0_i32 = arith.constant 0 : i32
    %c0_i32_0 = arith.constant 0 : i32
    %c0_i32_1 = arith.constant 0 : i32
    return %c0_i32, %c0_i32_0 : i32, i32
  }
  func.func @transform_11(%arg0: i32) -> (i32, i32, i32) {
    %c0_i32 = arith.constant 0 : i32
    %c0_i32_0 = arith.constant 0 : i32
    %c0_i32_1 = arith.constant 0 : i32
    return %arg0, %c0_i32, %c0_i32_0 : i32, i32, i32
  }
  func.func @transform_12(%arg0: i32) -> (i32, i32, i32) {
    %c0_i32 = arith.constant 0 : i32
    %c0_i32_0 = arith.constant 0 : i32
    %c0_i32_1 = arith.constant 0 : i32
    return %arg0, %c0_i32, %c0_i32_0 : i32, i32, i32
  }
}

module attributes {stable_mosaic.version = 11 : i64} {
  func.func @_ln_proj_kernel(%arg0: i32, %arg1: memref<16x32xf32, #tpu.memory_space<vmem>>, %arg2: memref<1x32xf32, #tpu.memory_space<vmem>>, %arg3: memref<1x32xf32, #tpu.memory_space<vmem>>, %arg4: memref<32x128xbf16, #tpu.memory_space<vmem>>, %arg5: memref<1x128xf32, #tpu.memory_space<vmem>>, %arg6: memref<16x128xf32, #tpu.memory_space<vmem>>) attributes {dimension_semantics = [#tpu.dimension_semantics<parallel>], iteration_bounds = array<i64: 1>, scalar_prefetch = 0 : i64, scratch_operands = 0 : i64, tpu.core_type = #tpu.core_type<tc>, window_params = [{transform_indices = @transform_0, window_bounds = array<i64: 16, 32>}, {pipeline_mode = #tpu.pipeline_mode<synchronous>, transform_indices = @transform_1, window_bounds = array<i64: 1, 32>}, {pipeline_mode = #tpu.pipeline_mode<synchronous>, transform_indices = @transform_2, window_bounds = array<i64: 1, 32>}, {pipeline_mode = #tpu.pipeline_mode<synchronous>, transform_indices = @transform_3, window_bounds = array<i64: 32, 128>}, {pipeline_mode = #tpu.pipeline_mode<synchronous>, transform_indices = @transform_4, window_bounds = array<i64: 1, 128>}, {transform_indices = @transform_5, window_bounds = array<i64: 16, 128>}]} {
    %c0 = arith.constant 0 : index
    %c0_0 = arith.constant 0 : index
    %0 = vector.load %arg1[%c0, %c0_0] : memref<16x32xf32, #tpu.memory_space<vmem>>, vector<16x32xf32>
    %cst = arith.constant dense<0.000000e+00> : vector<16xf32>
    %1 = vector.multi_reduction <add>, %0, %cst [1] : vector<16x32xf32> to vector<16xf32>
    %2 = vector.shape_cast %1 : vector<16xf32> to vector<16x1xf32>
    %cst_1 = arith.constant 3.200000e+01 : f32
    %3 = vector.broadcast %cst_1 : f32 to vector<16x1xf32>
    %4 = arith.divf %2, %3 : vector<16x1xf32>
    %5 = vector.broadcast %4 : vector<16x1xf32> to vector<16x32xf32>
    %6 = arith.subf %0, %5 : vector<16x32xf32>
    %7 = arith.mulf %6, %6 : vector<16x32xf32>
    %cst_2 = arith.constant dense<0.000000e+00> : vector<16xf32>
    %8 = vector.multi_reduction <add>, %7, %cst_2 [1] : vector<16x32xf32> to vector<16xf32>
    %9 = vector.shape_cast %8 : vector<16xf32> to vector<16x1xf32>
    %cst_3 = arith.constant 3.200000e+01 : f32
    %10 = vector.broadcast %cst_3 : f32 to vector<16x1xf32>
    %11 = arith.divf %9, %10 : vector<16x1xf32>
    %12 = vector.broadcast %4 : vector<16x1xf32> to vector<16x32xf32>
    %13 = arith.subf %0, %12 : vector<16x32xf32>
    %cst_4 = arith.constant 9.99999974E-6 : f32
    %14 = vector.broadcast %cst_4 : f32 to vector<16x1xf32>
    %15 = arith.addf %11, %14 : vector<16x1xf32>
    %16 = math.rsqrt %15 : vector<16x1xf32>
    %17 = vector.broadcast %16 : vector<16x1xf32> to vector<16x32xf32>
    %18 = arith.mulf %13, %17 : vector<16x32xf32>
    %c0_5 = arith.constant 0 : index
    %c0_6 = arith.constant 0 : index
    %19 = vector.load %arg2[%c0_5, %c0_6] : memref<1x32xf32, #tpu.memory_space<vmem>>, vector<1x32xf32>
    %20 = vector.broadcast %19 : vector<1x32xf32> to vector<16x32xf32>
    %21 = arith.mulf %18, %20 : vector<16x32xf32>
    %c0_7 = arith.constant 0 : index
    %c0_8 = arith.constant 0 : index
    %22 = vector.load %arg3[%c0_7, %c0_8] : memref<1x32xf32, #tpu.memory_space<vmem>>, vector<1x32xf32>
    %23 = vector.broadcast %22 : vector<1x32xf32> to vector<16x32xf32>
    %24 = arith.addf %21, %23 : vector<16x32xf32>
    %25 = arith.truncf %24 : vector<16x32xf32> to vector<16x32xbf16>
    %c0_9 = arith.constant 0 : index
    %c0_10 = arith.constant 0 : index
    %26 = vector.load %arg4[%c0_9, %c0_10] : memref<32x128xbf16, #tpu.memory_space<vmem>>, vector<32x128xbf16>
    %cst_11 = arith.constant dense<0.000000e+00> : vector<16x128xf32>
    %27 = tpu.matmul %25, %26, %cst_11 {dimension_numbers = #tpu.dot_dimension_numbers<[1], [0], [0], [1], [0, 0, 1, 1], [], []>} : vector<16x32xbf16>, vector<32x128xbf16>, vector<16x128xf32> -> vector<16x128xf32>
    %c0_12 = arith.constant 0 : index
    %c0_13 = arith.constant 0 : index
    %28 = vector.load %arg5[%c0_12, %c0_13] : memref<1x128xf32, #tpu.memory_space<vmem>>, vector<1x128xf32>
    %29 = vector.broadcast %28 : vector<1x128xf32> to vector<16x128xf32>
    %30 = arith.addf %27, %29 : vector<16x128xf32>
    %c0_14 = arith.constant 0 : index
    %c0_15 = arith.constant 0 : index
    %31 = vector.load %arg6[%c0_14, %c0_15] : memref<16x128xf32, #tpu.memory_space<vmem>>, vector<16x128xf32>
    tpu.vector_store %arg6[%c0_14, %c0_15], %30 {strides = array<i32>} : memref<16x128xf32, #tpu.memory_space<vmem>>, vector<16x128xf32>,
    return
  }
  func.func @transform_0(%arg0: i32) -> (i32, i32) {
    %c0_i32 = arith.constant 0 : i32
    %c0_i32_0 = arith.constant 0 : i32
    return %arg0, %c0_i32 : i32, i32
  }
  func.func @transform_1(%arg0: i32) -> (i32, i32) {
    %c0_i32 = arith.constant 0 : i32
    %c0_i32_0 = arith.constant 0 : i32
    %c0_i32_1 = arith.constant 0 : i32
    return %c0_i32, %c0_i32_0 : i32, i32
  }
  func.func @transform_2(%arg0: i32) -> (i32, i32) {
    %c0_i32 = arith.constant 0 : i32
    %c0_i32_0 = arith.constant 0 : i32
    %c0_i32_1 = arith.constant 0 : i32
    return %c0_i32, %c0_i32_0 : i32, i32
  }
  func.func @transform_3(%arg0: i32) -> (i32, i32) {
    %c0_i32 = arith.constant 0 : i32
    %c0_i32_0 = arith.constant 0 : i32
    %c0_i32_1 = arith.constant 0 : i32
    return %c0_i32, %c0_i32_0 : i32, i32
  }
  func.func @transform_4(%arg0: i32) -> (i32, i32) {
    %c0_i32 = arith.constant 0 : i32
    %c0_i32_0 = arith.constant 0 : i32
    %c0_i32_1 = arith.constant 0 : i32
    return %c0_i32, %c0_i32_0 : i32, i32
  }
  func.func @transform_5(%arg0: i32) -> (i32, i32) {
    %c0_i32 = arith.constant 0 : i32
    %c0_i32_0 = arith.constant 0 : i32
    return %arg0, %c0_i32 : i32, i32
  }
}

module attributes {stable_mosaic.version = 11 : i64} {
  func.func @_ffn_kernel(%arg0: i32, %arg1: memref<16x32xf32, #tpu.memory_space<vmem>>, %arg2: memref<32x64xbf16, #tpu.memory_space<vmem>>, %arg3: memref<1x64xf32, #tpu.memory_space<vmem>>, %arg4: memref<64x32xbf16, #tpu.memory_space<vmem>>, %arg5: memref<1x32xf32, #tpu.memory_space<vmem>>, %arg6: memref<1x32xf32, #tpu.memory_space<vmem>>, %arg7: memref<1x32xf32, #tpu.memory_space<vmem>>, %arg8: memref<16x32xf32, #tpu.memory_space<vmem>>) attributes {dimension_semantics = [#tpu.dimension_semantics<parallel>], iteration_bounds = array<i64: 1>, scalar_prefetch = 0 : i64, scratch_operands = 0 : i64, tpu.core_type = #tpu.core_type<tc>, window_params = [{transform_indices = @transform_0, window_bounds = array<i64: 16, 32>}, {pipeline_mode = #tpu.pipeline_mode<synchronous>, transform_indices = @transform_1, window_bounds = array<i64: 32, 64>}, {pipeline_mode = #tpu.pipeline_mode<synchronous>, transform_indices = @transform_2, window_bounds = array<i64: 1, 64>}, {pipeline_mode = #tpu.pipeline_mode<synchronous>, transform_indices = @transform_3, window_bounds = array<i64: 64, 32>}, {pipeline_mode = #tpu.pipeline_mode<synchronous>, transform_indices = @transform_4, window_bounds = array<i64: 1, 32>}, {pipeline_mode = #tpu.pipeline_mode<synchronous>, transform_indices = @transform_5, window_bounds = array<i64: 1, 32>}, {pipeline_mode = #tpu.pipeline_mode<synchronous>, transform_indices = @transform_6, window_bounds = array<i64: 1, 32>}, {transform_indices = @transform_7, window_bounds = array<i64: 16, 32>}]} {
    %c0 = arith.constant 0 : index
    %c0_0 = arith.constant 0 : index
    %0 = vector.load %arg1[%c0, %c0_0] : memref<16x32xf32, #tpu.memory_space<vmem>>, vector<16x32xf32>
    %1 = arith.truncf %0 : vector<16x32xf32> to vector<16x32xbf16>
    %c0_1 = arith.constant 0 : index
    %c0_2 = arith.constant 0 : index
    %2 = vector.load %arg2[%c0_1, %c0_2] : memref<32x64xbf16, #tpu.memory_space<vmem>>, vector<32x64xbf16>
    %cst = arith.constant dense<0.000000e+00> : vector<16x64xf32>
    %3 = tpu.matmul %1, %2, %cst {dimension_numbers = #tpu.dot_dimension_numbers<[1], [0], [0], [1], [0, 0, 1, 1], [], []>} : vector<16x32xbf16>, vector<32x64xbf16>, vector<16x64xf32> -> vector<16x64xf32>
    %c0_3 = arith.constant 0 : index
    %c0_4 = arith.constant 0 : index
    %4 = vector.load %arg3[%c0_3, %c0_4] : memref<1x64xf32, #tpu.memory_space<vmem>>, vector<1x64xf32>
    %5 = vector.broadcast %4 : vector<1x64xf32> to vector<16x64xf32>
    %6 = arith.addf %3, %5 : vector<16x64xf32>
    %cst_5 = arith.constant 0.000000e+00 : f32
    %7 = vector.broadcast %cst_5 : f32 to vector<16x64xf32>
    %8 = arith.maximumf %6, %7 : vector<16x64xf32>
    %9 = arith.truncf %8 : vector<16x64xf32> to vector<16x64xbf16>
    %c0_6 = arith.constant 0 : index
    %c0_7 = arith.constant 0 : index
    %10 = vector.load %arg4[%c0_6, %c0_7] : memref<64x32xbf16, #tpu.memory_space<vmem>>, vector<64x32xbf16>
    %cst_8 = arith.constant dense<0.000000e+00> : vector<16x32xf32>
    %11 = tpu.matmul %9, %10, %cst_8 {dimension_numbers = #tpu.dot_dimension_numbers<[1], [0], [0], [1], [0, 0, 1, 1], [], []>} : vector<16x64xbf16>, vector<64x32xbf16>, vector<16x32xf32> -> vector<16x32xf32>
    %c0_9 = arith.constant 0 : index
    %c0_10 = arith.constant 0 : index
    %12 = vector.load %arg5[%c0_9, %c0_10] : memref<1x32xf32, #tpu.memory_space<vmem>>, vector<1x32xf32>
    %13 = vector.broadcast %12 : vector<1x32xf32> to vector<16x32xf32>
    %14 = arith.addf %11, %13 : vector<16x32xf32>
    %15 = arith.addf %0, %14 : vector<16x32xf32>
    %cst_11 = arith.constant dense<0.000000e+00> : vector<16xf32>
    %16 = vector.multi_reduction <add>, %15, %cst_11 [1] : vector<16x32xf32> to vector<16xf32>
    %17 = vector.shape_cast %16 : vector<16xf32> to vector<16x1xf32>
    %cst_12 = arith.constant 3.200000e+01 : f32
    %18 = vector.broadcast %cst_12 : f32 to vector<16x1xf32>
    %19 = arith.divf %17, %18 : vector<16x1xf32>
    %20 = vector.broadcast %19 : vector<16x1xf32> to vector<16x32xf32>
    %21 = arith.subf %15, %20 : vector<16x32xf32>
    %22 = arith.mulf %21, %21 : vector<16x32xf32>
    %cst_13 = arith.constant dense<0.000000e+00> : vector<16xf32>
    %23 = vector.multi_reduction <add>, %22, %cst_13 [1] : vector<16x32xf32> to vector<16xf32>
    %24 = vector.shape_cast %23 : vector<16xf32> to vector<16x1xf32>
    %cst_14 = arith.constant 3.200000e+01 : f32
    %25 = vector.broadcast %cst_14 : f32 to vector<16x1xf32>
    %26 = arith.divf %24, %25 : vector<16x1xf32>
    %27 = vector.broadcast %19 : vector<16x1xf32> to vector<16x32xf32>
    %28 = arith.subf %15, %27 : vector<16x32xf32>
    %cst_15 = arith.constant 9.99999974E-6 : f32
    %29 = vector.broadcast %cst_15 : f32 to vector<16x1xf32>
    %30 = arith.addf %26, %29 : vector<16x1xf32>
    %31 = math.rsqrt %30 : vector<16x1xf32>
    %32 = vector.broadcast %31 : vector<16x1xf32> to vector<16x32xf32>
    %33 = arith.mulf %28, %32 : vector<16x32xf32>
    %c0_16 = arith.constant 0 : index
    %c0_17 = arith.constant 0 : index
    %34 = vector.load %arg6[%c0_16, %c0_17] : memref<1x32xf32, #tpu.memory_space<vmem>>, vector<1x32xf32>
    %35 = vector.broadcast %34 : vector<1x32xf32> to vector<16x32xf32>
    %36 = arith.mulf %33, %35 : vector<16x32xf32>
    %c0_18 = arith.constant 0 : index
    %c0_19 = arith.constant 0 : index
    %37 = vector.load %arg7[%c0_18, %c0_19] : memref<1x32xf32, #tpu.memory_space<vmem>>, vector<1x32xf32>
    %38 = vector.broadcast %37 : vector<1x32xf32> to vector<16x32xf32>
    %39 = arith.addf %36, %38 : vector<16x32xf32>
    %c0_20 = arith.constant 0 : index
    %c0_21 = arith.constant 0 : index
    %40 = vector.load %arg8[%c0_20, %c0_21] : memref<16x32xf32, #tpu.memory_space<vmem>>, vector<16x32xf32>
    tpu.vector_store %arg8[%c0_20, %c0_21], %39 {strides = array<i32>} : memref<16x32xf32, #tpu.memory_space<vmem>>, vector<16x32xf32>,
    return
  }
  func.func @transform_0(%arg0: i32) -> (i32, i32) {
    %c0_i32 = arith.constant 0 : i32
    %c0_i32_0 = arith.constant 0 : i32
    return %arg0, %c0_i32 : i32, i32
  }
  func.func @transform_1(%arg0: i32) -> (i32, i32) {
    %c0_i32 = arith.constant 0 : i32
    %c0_i32_0 = arith.constant 0 : i32
    %c0_i32_1 = arith.constant 0 : i32
    return %c0_i32, %c0_i32_0 : i32, i32
  }
  func.func @transform_2(%arg0: i32) -> (i32, i32) {
    %c0_i32 = arith.constant 0 : i32
    %c0_i32_0 = arith.constant 0 : i32
    %c0_i32_1 = arith.constant 0 : i32
    return %c0_i32, %c0_i32_0 : i32, i32
  }
  func.func @transform_3(%arg0: i32) -> (i32, i32) {
    %c0_i32 = arith.constant 0 : i32
    %c0_i32_0 = arith.constant 0 : i32
    %c0_i32_1 = arith.constant 0 : i32
    return %c0_i32, %c0_i32_0 : i32, i32
  }
  func.func @transform_4(%arg0: i32) -> (i32, i32) {
    %c0_i32 = arith.constant 0 : i32
    %c0_i32_0 = arith.constant 0 : i32
    %c0_i32_1 = arith.constant 0 : i32
    return %c0_i32, %c0_i32_0 : i32, i32
  }
  func.func @transform_5(%arg0: i32) -> (i32, i32) {
    %c0_i32 = arith.constant 0 : i32
    %c0_i32_0 = arith.constant 0 : i32
    %c0_i32_1 = arith.constant 0 : i32
    return %c0_i32, %c0_i32_0 : i32, i32
  }
  func.func @transform_6(%arg0: i32) -> (i32, i32) {
    %c0_i32 = arith.constant 0 : i32
    %c0_i32_0 = arith.constant 0 : i32
    %c0_i32_1 = arith.constant 0 : i32
    return %c0_i32, %c0_i32_0 : i32, i32
  }
  func.func @transform_7(%arg0: i32) -> (i32, i32) {
    %c0_i32 = arith.constant 0 : i32
    %c0_i32_0 = arith.constant 0 : i32
    return %arg0, %c0_i32 : i32, i32
  }
}

</mosaic_0001>

<llo_original>
// kernel: decoder_forward.13
$region0: #{decoder_forward.13}
  #allocation0 [shape = 'u32[]', space=smem, size = 0x4, offset = 0x4, fixed_abs, tag = 'smem constant byte address 0x4 - core index']
  #allocation1 [shape = 'u32[144,128]{1,0:T(1,128)}', space=vmem, size = 0x12000, scoped, tag = 'internal scratch']
  %s0 = inlined_call_operand.vmem [shape: f32[16,32], index: 0, kind: input, shape index: {}]
  %s1 = inlined_call_operand.vmem [shape: f32[1,32], index: 1, kind: input, shape index: {}]
  %s2 = inlined_call_operand.vmem [shape: f32[1,32], index: 2, kind: input, shape index: {}]
  %s3 = inlined_call_operand.vmem [shape: bf16[32,128], index: 3, kind: input, shape index: {}]
  %s4 = inlined_call_operand.vmem [shape: f32[1,128], index: 4, kind: input, shape index: {}]
  %s5 = inlined_call_operand.vmem [shape: f32[16,128], index: 5, kind: output, shape index: {}]
  %s6 = sld [smem:[#allocation0]]
  $region30: #{decoder_forward.13} parent=0
    _
  %s8 = ssub.s32 1, %s6
  %s9 = scalar_select 0, %s8, %s6
  // Predicated region
  $region2: #{decoder_forward.13} parent=0 // pred_check
    _
  $region3: #{decoder_forward.13} parent=0 // pred_check_branch
    %11 = sbr.rel (0) target = $region5
  $region4: #{decoder_forward.13} parent=0 // pred_region
    _
  $region5: #{decoder_forward.13} parent=0 // pred_fallthru
    _
  // Predicated region
  $region6: #{decoder_forward.13} parent=0 // pred_check
    _
  $region7: #{decoder_forward.13} parent=0 // pred_check_branch
    %13 = sbr.rel (0) target = $region9
  $region8: #{decoder_forward.13} parent=0 // pred_region
    _
  $region9: #{decoder_forward.13} parent=0 // pred_fallthru
    _
  // Predicated region
  $region10: #{decoder_forward.13} parent=0 // pred_check
    _
  $region11: #{decoder_forward.13} parent=0 // pred_check_branch
    %15 = sbr.rel (0) target = $region13
  $region12: #{decoder_forward.13} parent=0 // pred_region
    _
  $region13: #{decoder_forward.13} parent=0 // pred_fallthru
    _
  // Predicated region
  $region14: #{decoder_forward.13} parent=0 // pred_check
    _
  $region15: #{decoder_forward.13} parent=0 // pred_check_branch
    %17 = sbr.rel (0) target = $region17
  $region16: #{decoder_forward.13} parent=0 // pred_region
    _
  $region17: #{decoder_forward.13} parent=0 // pred_fallthru
    _
  // Predicated region
  $region18: #{decoder_forward.13} parent=0 // pred_check
    _
  $region19: #{decoder_forward.13} parent=0 // pred_check_branch
    %19 = sbr.rel (0) target = $region21
  $region20: #{decoder_forward.13} parent=0 // pred_region
    _
  $region21: #{decoder_forward.13} parent=0 // pred_fallthru
    _
  %v21 = vld [vmem:[%s0] sm:$0xff]
  %v22 = vld [vmem:[%s0 + $0x8] sm:$0xff]
  %vm23 = vcmask 261120
  %v24 = vsel %vm23, %v21, 0.0
  %25 = vadd.xlane.f32.xlu0 %v24
  %v26 = vpop.xlane.xlu0 %25
  %v27 = vsel %vm23, %v22, 0.0
  %28 = vadd.xlane.f32.xlu0 %v27
  %v29 = vpop.xlane.xlu0 %28
  %v30 = vrcp.pop 32.0
  %v31 = vmul.f32 %v26, %v30
  %v32 = vmul.f32 %v29, %v30
  %v33 = vsub.f32 %v21, %v31
  %v34 = vsub.f32 %v22, %v32
  %v35 = vmul.f32 %v33, %v33
  %v36 = vmul.f32 %v34, %v34
  %v37 = vsel %vm23, %v35, 0.0
  %38 = vadd.xlane.f32.xlu0 %v37
  %v39 = vpop.xlane.xlu0 %38
  %v40 = vsel %vm23, %v36, 0.0
  %41 = vadd.xlane.f32.xlu0 %v40
  %v42 = vpop.xlane.xlu0 %41
  %v43 = vmul.f32 %v39, %v30
  %v44 = vmul.f32 %v42, %v30
  %v45 = vadd.f32 %v43, 1e-05
  %v46 = vadd.f32 %v44, 1e-05
  %v47 = vrsqrt.pop %v45
  %v48 = vrsqrt.pop %v46
  %v49 = vmul.f32 %v33, %v47
  %v50 = vmul.f32 %v34, %v48
  %v51 = vld [vmem:[%s1] sm:$0x1]
  %v53 = vlaneseq
  %v54 = vshrl.u32 %v53, 7
  %v55 = vsub.s32 0, %v54
  %v56 = vrot.slane %v51, %v55
  %v58 = vmul.f32 %v49, %v56
  %v59 = vmul.f32 %v50, %v56
  %v60 = vld [vmem:[%s2] sm:$0x1]
  %v62 = vlaneseq
  %v63 = vshrl.u32 %v62, 7
  %v64 = vsub.s32 0, %v63
  %v65 = vrot.slane %v60, %v64
  %v67 = vadd.f32 %v58, %v65
  %v68 = vadd.f32 %v59, %v65
  %v69 = vpack.c.bf16 %v68, %v67
  %v70 = vld [vmem:[%s3] sm:$0xf]
  %v71 = vld [vmem:[%s3 + $0x4] sm:$0xf]
  %v72 = vld [vmem:[%s3 + $0x8] sm:$0xf]
  %v73 = vld [vmem:[%s3 + $0xc] sm:$0xf]
  %v74 = vld [vmem:[%s4] sm:$0x1]
  %v76 = vlaneseq
  %v77 = vshrl.u32 %v76, 7
  %v78 = vsub.s32 0, %v77
  %v79 = vrot.slane %v74, %v78
  %v85 = vunpack.c.l.b16 %v70
  %v86 = vunpack.c.l.b16 %v71
  %v87 = vunpack.c.l.b16 %v72
  %v88 = vunpack.c.l.b16 %v73
  %v89 = vpack.c.b16 %v86, %v85
  %v90 = vpack.c.b16 %v88, %v87
  %v94 = vsel %vm23, %v69, 0
  %96 = vmatprep.subr.bf16.mxu0 0
  %97 = vmatpush1.bf16.msra.mxu0 %v89
  %98 = vmatprep.subr.bf16.mxu0 0
  %99 = vmatpush1.bf16.msra.mxu0 %v90
  %100 = vmatprep.subr.bf16.mxu0 0
  %101 = vmatpush1.bf16.msra.mxu0 0
  %102 = vmatprep.subr.bf16.mxu0 0
  %103 = vmatpush1.bf16.msra.mxu0 0
  %104 = vmatprep.subr.bf16.mxu0 0
  %105 = vmatpush1.bf16.msra.mxu0 0
  %106 = vmatprep.subr.bf16.mxu0 0
  %107 = vmatpush1.bf16.msra.mxu0 0
  %108 = vmatprep.subr.bf16.mxu0 0
  %109 = vmatpush1.bf16.msra.mxu0 0
  %110 = vmatprep.subr.bf16.mxu0 0
  %111 = vmatpush1.bf16.msra.mxu0 0
  %112 = vmatprep.subr.bf16.mxu0 0
  %113 = vmatpush1.bf16.msra.mxu0 0
  %114 = vmatprep.subr.bf16.mxu0 0
  %115 = vmatpush1.bf16.msra.mxu0 0
  %116 = vmatprep.subr.bf16.mxu0 0
  %117 = vmatpush1.bf16.msra.mxu0 0
  %118 = vmatprep.subr.bf16.mxu0 0
  %119 = vmatpush1.bf16.msra.mxu0 0
  %120 = vmatprep.subr.bf16.mxu0 0
  %121 = vmatpush1.bf16.msra.mxu0 0
  %122 = vmatprep.subr.bf16.mxu0 0
  %123 = vmatpush1.bf16.msra.mxu0 0
  %124 = vmatprep.subr.bf16.mxu0 0
  %125 = vmatpush1.bf16.msra.mxu0 0
  %126 = vmatprep.subr.bf16.mxu0 0
  %127 = vmatpush1.bf16.msra.mxu0 0
  %128 = vmatprep.mubr.bf16.mxu0 0
  %129 = vmatmul.mubr.bf16.gmra.mrb[0].mxu0 %v94
  %v130 = vpop.f32.mrb[0].mxu0
  %v131 = vadd.f32 %v79, %v130
  %v132 = vpop.f32.mrb[0].mxu0
  %v133 = vpop.f32.mrb[0].mxu0
  %v134 = vadd.f32 %v79, %v133
  %v135 = vpop.f32.mrb[0].mxu0
  %136 = vdwg.mxu0
  %137 = vst [vmem:[%s5] sm:$0xff] %v131
  %138 = vst [vmem:[%s5 + $0x8] sm:$0xff] %v134
  // Predicated region
  $region22: #{decoder_forward.13} parent=0 // pred_check
    _
  $region23: #{decoder_forward.13} parent=0 // pred_check_branch
    %140 = sbr.rel (0) target = $region25
  $region24: #{decoder_forward.13} parent=0 // pred_region
    _
  $region25: #{decoder_forward.13} parent=0 // pred_fallthru
    _
  // Predicated region
  $region26: #{decoder_forward.13} parent=0 // pred_check
    _
  $region27: #{decoder_forward.13} parent=0 // pred_check_branch
    %142 = sbr.rel (0) target = $region29
  $region28: #{decoder_forward.13} parent=0 // pred_region
    _
  $region29: #{decoder_forward.13} parent=0 // pred_fallthru
    _

// kernel: decoder_forward.9
$region0: #{decoder_forward.9}
  #allocation0 [shape = 'u32[]', space=smem, size = 0x4, offset = 0x4, fixed_abs, tag = 'smem constant byte address 0x4 - core index']
  #allocation1 [shape = 'u32[144,128]{1,0:T(1,128)}', space=vmem, size = 0x12000, scoped, tag = 'internal scratch']
  %s0 = inlined_call_operand.vmem [shape: f32[16,32], index: 0, kind: input, shape index: {}]
  %s1 = inlined_call_operand.vmem [shape: bf16[32,64], index: 1, kind: input, shape index: {}]
  %s2 = inlined_call_operand.vmem [shape: f32[1,64], index: 2, kind: input, shape index: {}]
  %s3 = inlined_call_operand.vmem [shape: bf16[64,32], index: 3, kind: input, shape index: {}]
  %s4 = inlined_call_operand.vmem [shape: f32[1,32], index: 4, kind: input, shape index: {}]
  %s5 = inlined_call_operand.vmem [shape: f32[1,32], index: 5, kind: input, shape index: {}]
  %s6 = inlined_call_operand.vmem [shape: f32[1,32], index: 6, kind: input, shape index: {}]
  %s7 = inlined_call_operand.vmem [shape: f32[16,32], index: 7, kind: output, shape index: {}]
  %s8 = sld [smem:[#allocation0]]
  $region38: #{decoder_forward.9} parent=0
    _
  %s10 = ssub.s32 1, %s8
  %s11 = scalar_select 0, %s10, %s8
  // Predicated region
  $region2: #{decoder_forward.9} parent=0 // pred_check
    _
  $region3: #{decoder_forward.9} parent=0 // pred_check_branch
    %13 = sbr.rel (0) target = $region5
  $region4: #{decoder_forward.9} parent=0 // pred_region
    _
  $region5: #{decoder_forward.9} parent=0 // pred_fallthru
    _
  // Predicated region
  $region6: #{decoder_forward.9} parent=0 // pred_check
    _
  $region7: #{decoder_forward.9} parent=0 // pred_check_branch
    %15 = sbr.rel (0) target = $region9
  $region8: #{decoder_forward.9} parent=0 // pred_region
    _
  $region9: #{decoder_forward.9} parent=0 // pred_fallthru
    _
  // Predicated region
  $region10: #{decoder_forward.9} parent=0 // pred_check
    _
  $region11: #{decoder_forward.9} parent=0 // pred_check_branch
    %17 = sbr.rel (0) target = $region13
  $region12: #{decoder_forward.9} parent=0 // pred_region
    _
  $region13: #{decoder_forward.9} parent=0 // pred_fallthru
    _
  // Predicated region
  $region14: #{decoder_forward.9} parent=0 // pred_check
    _
  $region15: #{decoder_forward.9} parent=0 // pred_check_branch
    %19 = sbr.rel (0) target = $region17
  $region16: #{decoder_forward.9} parent=0 // pred_region
    _
  $region17: #{decoder_forward.9} parent=0 // pred_fallthru
    _
  // Predicated region
  $region18: #{decoder_forward.9} parent=0 // pred_check
    _
  $region19: #{decoder_forward.9} parent=0 // pred_check_branch
    %21 = sbr.rel (0) target = $region21
  $region20: #{decoder_forward.9} parent=0 // pred_region
    _
  $region21: #{decoder_forward.9} parent=0 // pred_fallthru
    _
  // Predicated region
  $region22: #{decoder_forward.9} parent=0 // pred_check
    _
  $region23: #{decoder_forward.9} parent=0 // pred_check_branch
    %23 = sbr.rel (0) target = $region25
  $region24: #{decoder_forward.9} parent=0 // pred_region
    _
  $region25: #{decoder_forward.9} parent=0 // pred_fallthru
    _
  // Predicated region
  $region26: #{decoder_forward.9} parent=0 // pred_check
    _
  $region27: #{decoder_forward.9} parent=0 // pred_check_branch
    %25 = sbr.rel (0) target = $region29
  $region28: #{decoder_forward.9} parent=0 // pred_region
    _
  $region29: #{decoder_forward.9} parent=0 // pred_fallthru
    _
  %v27 = vld [vmem:[%s0] sm:$0xff]
  %v28 = vld [vmem:[%s0 + $0x8] sm:$0xff]
  %v29 = vpack.c.bf16 %v28, %v27
  %v30 = vld [vmem:[%s1] sm:$0xf]
  %v31 = vld [vmem:[%s1 + $0x4] sm:$0xf]
  %v32 = vld [vmem:[%s1 + $0x8] sm:$0xf]
  %v33 = vld [vmem:[%s1 + $0xc] sm:$0xf]
  %v34 = vld [vmem:[%s2] sm:$0x1]
  %v36 = vlaneseq
  %v37 = vshrl.u32 %v36, 7
  %v38 = vsub.s32 0, %v37
  %v39 = vrot.slane %v34, %v38
  %v45 = vunpack.c.l.b16 %v30
  %v46 = vunpack.c.l.b16 %v31
  %v47 = vunpack.c.l.b16 %v32
  %v48 = vunpack.c.l.b16 %v33
  %v49 = vpack.c.b16 %v46, %v45
  %v50 = vpack.c.b16 %v48, %v47
  %vm53 = vcmask 261120
  %v55 = vsel %vm53, %v29, 0
  %57 = vmatprep.subr.bf16.mxu0 0
  %58 = vmatpush1.bf16.msra.mxu0 %v49
  %59 = vmatprep.subr.bf16.mxu0 0
  %60 = vmatpush1.bf16.msra.mxu0 %v50
  %61 = vmatprep.subr.bf16.mxu0 0
  %62 = vmatpush1.bf16.msra.mxu0 0
  %63 = vmatprep.subr.bf16.mxu0 0
  %64 = vmatpush1.bf16.msra.mxu0 0
  %65 = vmatprep.subr.bf16.mxu0 0
  %66 = vmatpush1.bf16.msra.mxu0 0
  %67 = vmatprep.subr.bf16.mxu0 0
  %68 = vmatpush1.bf16.msra.mxu0 0
  %69 = vmatprep.subr.bf16.mxu0 0
  %70 = vmatpush1.bf16.msra.mxu0 0
  %71 = vmatprep.subr.bf16.mxu0 0
  %72 = vmatpush1.bf16.msra.mxu0 0
  %73 = vmatprep.subr.bf16.mxu0 0
  %74 = vmatpush1.bf16.msra.mxu0 0
  %75 = vmatprep.subr.bf16.mxu0 0
  %76 = vmatpush1.bf16.msra.mxu0 0
  %77 = vmatprep.subr.bf16.mxu0 0
  %78 = vmatpush1.bf16.msra.mxu0 0
  %79 = vmatprep.subr.bf16.mxu0 0
  %80 = vmatpush1.bf16.msra.mxu0 0
  %81 = vmatprep.subr.bf16.mxu0 0
  %82 = vmatpush1.bf16.msra.mxu0 0
  %83 = vmatprep.subr.bf16.mxu0 0
  %84 = vmatpush1.bf16.msra.mxu0 0
  %85 = vmatprep.subr.bf16.mxu0 0
  %86 = vmatpush1.bf16.msra.mxu0 0
  %87 = vmatprep.subr.bf16.mxu0 0
  %88 = vmatpush1.bf16.msra.mxu0 0
  %89 = vmatprep.mubr.bf16.mxu0 0
  %90 = vmatmul.mubr.bf16.gmra.mrb[0].mxu0 %v55
  %v91 = vpop.f32.mrb[0].mxu0
  %v92 = vadd.f32 %v39, %v91
  %v93 = vpop.f32.mrb[0].mxu0
  %v94 = vpop.f32.mrb[0].mxu0
  %v95 = vadd.f32 %v39, %v94
  %v96 = vpop.f32.mrb[0].mxu0
  %97 = vdwg.mxu0
  %v98 = vmax.f32 %v92, 0.0
  %v99 = vmax.f32 %v95, 0.0
  %v100 = vpack.c.bf16 %v99, %v98
  %v101 = vld [vmem:[%s3] sm:$0xf]
  %v102 = vld [vmem:[%s3 + $0x4] sm:$0xf]
  %v103 = vld [vmem:[%s3 + $0x8] sm:$0xf]
  %v104 = vld [vmem:[%s3 + $0xc] sm:$0xf]
  %v105 = vld [vmem:[%s3 + $0x10] sm:$0xf]
  %v106 = vld [vmem:[%s3 + $0x14] sm:$0xf]
  %v107 = vld [vmem:[%s3 + $0x18] sm:$0xf]
  %v108 = vld [vmem:[%s3 + $0x1c] sm:$0xf]
  %v109 = vld [vmem:[%s4] sm:$0x1]
  %v111 = vlaneseq
  %v112 = vshrl.u32 %v111, 7
  %v113 = vsub.s32 0, %v112
  %v114 = vrot.slane %v109, %v113
  %v124 = vunpack.c.l.b16 %v101
  %v125 = vunpack.c.l.b16 %v102
  %v126 = vunpack.c.l.b16 %v103
  %v127 = vunpack.c.l.b16 %v104
  %v128 = vunpack.c.l.b16 %v105
  %v129 = vunpack.c.l.b16 %v106
  %v130 = vunpack.c.l.b16 %v107
  %v131 = vunpack.c.l.b16 %v108
  %v132 = vpack.c.b16 %v125, %v124
  %v133 = vpack.c.b16 %v127, %v126
  %v134 = vpack.c.b16 %v129, %v128
  %v135 = vpack.c.b16 %v131, %v130
  %vm140 = vcmask 523264
  %v142 = vsel %vm140, %v100, 0
  %144 = vmatprep.subr.bf16.mxu0 0
  %145 = vmatpush1.bf16.msra.mxu0 %v132
  %146 = vmatprep.subr.bf16.mxu0 0
  %147 = vmatpush1.bf16.msra.mxu0 %v133
  %148 = vmatprep.subr.bf16.mxu0 0
  %149 = vmatpush1.bf16.msra.mxu0 %v134
  %150 = vmatprep.subr.bf16.mxu0 0
  %151 = vmatpush1.bf16.msra.mxu0 %v135
  %152 = vmatprep.subr.bf16.mxu0 0
  %153 = vmatpush1.bf16.msra.mxu0 0
  %154 = vmatprep.subr.bf16.mxu0 0
  %155 = vmatpush1.bf16.msra.mxu0 0
  %156 = vmatprep.subr.bf16.mxu0 0
  %157 = vmatpush1.bf16.msra.mxu0 0
  %158 = vmatprep.subr.bf16.mxu0 0
  %159 = vmatpush1.bf16.msra.mxu0 0
  %160 = vmatprep.subr.bf16.mxu0 0
  %161 = vmatpush1.bf16.msra.mxu0 0
  %162 = vmatprep.subr.bf16.mxu0 0
  %163 = vmatpush1.bf16.msra.mxu0 0
  %164 = vmatprep.subr.bf16.mxu0 0
  %165 = vmatpush1.bf16.msra.mxu0 0
  %166 = vmatprep.subr.bf16.mxu0 0
  %167 = vmatpush1.bf16.msra.mxu0 0
  %168 = vmatprep.subr.bf16.mxu0 0
  %169 = vmatpush1.bf16.msra.mxu0 0
  %170 = vmatprep.subr.bf16.mxu0 0
  %171 = vmatpush1.bf16.msra.mxu0 0
  %172 = vmatprep.subr.bf16.mxu0 0
  %173 = vmatpush1.bf16.msra.mxu0 0
  %174 = vmatprep.subr.bf16.mxu0 0
  %175 = vmatpush1.bf16.msra.mxu0 0
  %176 = vmatprep.mubr.bf16.mxu0 0
  %177 = vmatmul.mubr.bf16.gmra.mrb[0].mxu0 %v142
  %v178 = vpop.f32.mrb[0].mxu0
  %v179 = vadd.f32 %v114, %v178
  %v180 = vpop.f32.mrb[0].mxu0
  %v181 = vpop.f32.mrb[0].mxu0
  %v182 = vadd.f32 %v114, %v181
  %v183 = vpop.f32.mrb[0].mxu0
  %184 = vdwg.mxu0
  %v185 = vadd.f32 %v27, %v179
  %v186 = vadd.f32 %v28, %v182
  %v187 = vsel %vm53, %v185, 0.0
  %188 = vadd.xlane.f32.xlu0 %v187
  %v189 = vpop.xlane.xlu0 %188
  %v190 = vsel %vm53, %v186, 0.0
  %191 = vadd.xlane.f32.xlu0 %v190
  %v192 = vpop.xlane.xlu0 %191
  %v193 = vrcp.pop 32.0
  %v194 = vmul.f32 %v189, %v193
  %v195 = vmul.f32 %v192, %v193
  %v196 = vsub.f32 %v185, %v194
  %v197 = vsub.f32 %v186, %v195
  %v198 = vmul.f32 %v196, %v196
  %v199 = vmul.f32 %v197, %v197
  %v200 = vsel %vm53, %v198, 0.0
  %201 = vadd.xlane.f32.xlu0 %v200
  %v202 = vpop.xlane.xlu0 %201
  %v203 = vsel %vm53, %v199, 0.0
  %204 = vadd.xlane.f32.xlu0 %v203
  %v205 = vpop.xlane.xlu0 %204
  %v206 = vmul.f32 %v202, %v193
  %v207 = vmul.f32 %v205, %v193
  %v208 = vadd.f32 %v206, 1e-05
  %v209 = vadd.f32 %v207, 1e-05
  %v210 = vrsqrt.pop %v208
  %v211 = vrsqrt.pop %v209
  %v212 = vmul.f32 %v196, %v210
  %v213 = vmul.f32 %v197, %v211
  %v214 = vld [vmem:[%s5] sm:$0x1]
  %v216 = vlaneseq
  %v217 = vshrl.u32 %v216, 7
  %v218 = vsub.s32 0, %v217
  %v219 = vrot.slane %v214, %v218
  %v221 = vmul.f32 %v212, %v219
  %v222 = vmul.f32 %v213, %v219
  %v223 = vld [vmem:[%s6] sm:$0x1]
  %v225 = vlaneseq
  %v226 = vshrl.u32 %v225, 7
  %v227 = vsub.s32 0, %v226
  %v228 = vrot.slane %v223, %v227
  %v230 = vadd.f32 %v221, %v228
  %v231 = vadd.f32 %v222, %v228
  %232 = vst.msk [vmem:[%s7] sm:$0xff] %vm53, %v230
  %233 = vst.msk [vmem:[%s7 + $0x8] sm:$0xff] %vm53, %v231
  // Predicated region
  $region30: #{decoder_forward.9} parent=0 // pred_check
    _
  $region31: #{decoder_forward.9} parent=0 // pred_check_branch
    %235 = sbr.rel (0) target = $region33
  $region32: #{decoder_forward.9} parent=0 // pred_region
    _
  $region33: #{decoder_forward.9} parent=0 // pred_fallthru
    _
  // Predicated region
  $region34: #{decoder_forward.9} parent=0 // pred_check
    _
  $region35: #{decoder_forward.9} parent=0 // pred_check_branch
    %237 = sbr.rel (0) target = $region37
  $region36: #{decoder_forward.9} parent=0 // pred_region
    _
  $region37: #{decoder_forward.9} parent=0 // pred_fallthru
    _

// kernel: decoder_forward.8
$region0: #{decoder_forward.8}
  #allocation0 [shape = 'u32[]', space=smem, size = 0x4, offset = 0x4, fixed_abs, tag = 'smem constant byte address 0x4 - core index']
  #allocation1 [shape = 'u32[144,128]{1,0:T(1,128)}', space=vmem, size = 0x12000, scoped, tag = 'internal scratch']
  %s0 = inlined_call_operand.vmem [shape: f32[2,8,32], index: 0, kind: input, shape index: {}]
  %s1 = inlined_call_operand.vmem [shape: f32[2,8,32], index: 1, kind: input, shape index: {}]
  %s2 = inlined_call_operand.vmem [shape: bf16[4,32,8], index: 2, kind: input, shape index: {}]
  %s3 = inlined_call_operand.vmem [shape: bf16[4,32,8], index: 3, kind: input, shape index: {}]
  %s4 = inlined_call_operand.vmem [shape: bf16[4,32,8], index: 4, kind: input, shape index: {}]
  %s5 = inlined_call_operand.vmem [shape: f32[4,1,8], index: 5, kind: input, shape index: {}]
  %s6 = inlined_call_operand.vmem [shape: f32[4,1,8], index: 6, kind: input, shape index: {}]
  %s7 = inlined_call_operand.vmem [shape: f32[4,1,8], index: 7, kind: input, shape index: {}]
  %s8 = inlined_call_operand.vmem [shape: bf16[4,8,32], index: 8, kind: input, shape index: {}]
  %s9 = inlined_call_operand.vmem [shape: f32[1,32], index: 9, kind: input, shape index: {}]
  %s10 = inlined_call_operand.vmem [shape: f32[1,32], index: 10, kind: input, shape index: {}]
  %s11 = inlined_call_operand.vmem [shape: f32[1,32], index: 11, kind: input, shape index: {}]
  %s12 = inlined_call_operand.vmem [shape: f32[2,8,32], index: 12, kind: output, shape index: {0}]
  %s13 = inlined_call_operand.hbm [shape: f32[8,8,8], index: 13, kind: output, shape index: {1}]
  %14 = xla_tuple %s12, %s13
  %s15 = sld [smem:[#allocation0]]
  $region89: #{decoder_forward.8} parent=0
    _
  %s17 = ssub.s32 1, %s15
  %s18 = scalar_select 0, %s17, %s15
  $region1: #{decoder_forward.8} parent=0
    #allocation2 [shape = 'u8[32768]{0}', space=vmem, size = 0x8000, scoped, tag = 'output window, operand 1']
    #allocation3 [shape = 's32[2]{0}', space=sflag, size = 0x8, scoped, tag = 'scoped memory for decoder_forward.8']
    %19 = vsyncpa [#allocation3], 0
    %s20 = scalar_lea.sflag [#allocation3], 1
    %21 = vsyncpa %s20, 0
    loop: start=0, step=1, limit=4
    $region2: #{decoder_forward.8} parent=1 // loop_pre_header
      _
    $region3: #{decoder_forward.8} parent=1 // loop_header
      %s23 = sphi 0, %s27
      %p24 = scmp.ge.s32.totalorder %s23, 4
      %s33 = sphi 0, %s35
      %s36 = sphi 0, %s33
      %s37 = sphi 0, %s36
      %s53 = sphi 0, %s37
      %s59 = sphi 0, %s61
      %s62 = sphi 0, %s59
      %s63 = sphi 0, %s62
      %s79 = sphi 0, %s63
      %s83 = sphi 0, %s83
      %s85 = sphi 0, %s83
      %s86 = sphi 0, %s85
      %s100 = sphi 0, %s86
      %s104 = sphi 0, %s104
      %s106 = sphi 0, %s104
      %s107 = sphi 0, %s106
      %s121 = sphi 0, %s107
      %s125 = sphi 0, %s125
      %s127 = sphi 0, %s125
      %s128 = sphi 0, %s127
      %s142 = sphi 0, %s128
      %s146 = sphi 0, %s146
      %s148 = sphi 0, %s146
      %s149 = sphi 0, %s148
      %s163 = sphi 0, %s149
      %s167 = sphi 0, %s167
      %s169 = sphi 0, %s167
      %s170 = sphi 0, %s169
      %s184 = sphi 0, %s170
      %s188 = sphi 0, %s188
      %s190 = sphi 0, %s188
      %s191 = sphi 0, %s190
      %s205 = sphi 0, %s191
      %s209 = sphi 0, %s209
      %s211 = sphi 0, %s209
      %s212 = sphi 0, %s211
      %s226 = sphi 0, %s212
      %s230 = sphi 0, %s230
      %s232 = sphi 0, %s230
      %s233 = sphi 0, %s232
      %s247 = sphi 0, %s233
      %s251 = sphi 0, %s251
      %s253 = sphi 0, %s251
      %s254 = sphi 0, %s253
      %s268 = sphi 0, %s254
      %s272 = sphi 0, %s272
      %s274 = sphi 0, %s272
      %s275 = sphi 0, %s274
      %s289 = sphi 0, %s275
      %s295 = sphi 0, %s297
      %s298 = sphi 0, %s295
      %s299 = sphi 0, %s298
      %s315 = sphi 0, %s299
      %s321 = sphi 0, %s323
      %s324 = sphi 0, %s321
      %s325 = sphi 0, %s324
      %s341 = sphi 0, %s325
    $region4: #{decoder_forward.8} parent=1 // loop_header_branch
      %26 = sbr.rel (%p24) target = $region8
    $region5: #{decoder_forward.8} parent=1 // loop_body
      %s28 = ssub.s32 %s23, 1
      %s29 = ssub.s32 %s23, 2
      %s30 = sadd.s32 %s23, 1
      %s31 = ssub.s32 %s23, %s30
      %p32 = scmp.eq.s32.totalorder %s31, 0
      %s34 = sadd.s32 %s33, 1
      %s35 = scalar_select %p32, %s33, %s34
      %p38 = pneg %p32
      %p39 = scmp.eq.s32.totalorder %s23, 1
      %p40 = por %p38, %p39
      %p41 = scmp.ne.s32.totalorder %s33, %s36
      %p42 = scmp.eq.s32.totalorder %s23, 0
      %p43 = por %p41, %p42
      %p44 = scmp.ne.s32.totalorder %s33, %s36
      %p45 = scmp.eq.s32.totalorder %s28, 1
      %p46 = por %p44, %p45
      %p47 = scmp.ne.s32.totalorder %s36, %s37
      %p48 = scmp.eq.s32.totalorder %s28, 0
      %p49 = por %p47, %p48
      %p50 = scmp.ne.s32.totalorder %s36, %s37
      %p51 = scmp.eq.s32.totalorder %s29, 1
      %p52 = por %p50, %p51
      %p54 = scmp.ne.s32.totalorder %s37, %s53
      %p55 = scmp.eq.s32.totalorder %s29, 0
      %p56 = por %p54, %p55
      %s57 = ssub.s32 %s23, %s30
      %p58 = scmp.eq.s32.totalorder %s57, 0
      %s60 = sadd.s32 %s59, 1
      %s61 = scalar_select %p58, %s59, %s60
      %p64 = pneg %p58
      %p65 = scmp.eq.s32.totalorder %s23, 1
      %p66 = por %p64, %p65
      %p67 = scmp.ne.s32.totalorder %s59, %s62
      %p68 = scmp.eq.s32.totalorder %s23, 0
      %p69 = por %p67, %p68
      %p70 = scmp.ne.s32.totalorder %s59, %s62
      %p71 = scmp.eq.s32.totalorder %s28, 1
      %p72 = por %p70, %p71
      %p73 = scmp.ne.s32.totalorder %s62, %s63
      %p74 = scmp.eq.s32.totalorder %s28, 0
      %p75 = por %p73, %p74
      %p76 = scmp.ne.s32.totalorder %s62, %s63
      %p77 = scmp.eq.s32.totalorder %s29, 1
      %p78 = por %p76, %p77
      %p80 = scmp.ne.s32.totalorder %s63, %s79
      %p81 = scmp.eq.s32.totalorder %s29, 0
      %p82 = por %p80, %p81
      %s84 = sadd.s32 %s83, 1
      %p87 = scmp.eq.s32.totalorder %s23, 1
      %p88 = scmp.ne.s32.totalorder %s83, %s85
      %p89 = scmp.eq.s32.totalorder %s23, 0
      %p90 = por %p88, %p89
      %p91 = scmp.ne.s32.totalorder %s83, %s85
      %p92 = scmp.eq.s32.totalorder %s28, 1
      %p93 = por %p91, %p92
      %p94 = scmp.ne.s32.totalorder %s85, %s86
      %p95 = scmp.eq.s32.totalorder %s28, 0
      %p96 = por %p94, %p95
      %p97 = scmp.ne.s32.totalorder %s85, %s86
      %p98 = scmp.eq.s32.totalorder %s29, 1
      %p99 = por %p97, %p98
      %p101 = scmp.ne.s32.totalorder %s86, %s100
      %p102 = scmp.eq.s32.totalorder %s29, 0
      %p103 = por %p101, %p102
      %s105 = sadd.s32 %s104, 1
      %p108 = scmp.eq.s32.totalorder %s23, 1
      %p109 = scmp.ne.s32.totalorder %s104, %s106
      %p110 = scmp.eq.s32.totalorder %s23, 0
      %p111 = por %p109, %p110
      %p112 = scmp.ne.s32.totalorder %s104, %s106
      %p113 = scmp.eq.s32.totalorder %s28, 1
      %p114 = por %p112, %p113
      %p115 = scmp.ne.s32.totalorder %s106, %s107
      %p116 = scmp.eq.s32.totalorder %s28, 0
      %p117 = por %p115, %p116
      %p118 = scmp.ne.s32.totalorder %s106, %s107
      %p119 = scmp.eq.s32.totalorder %s29, 1
      %p120 = por %p118, %p119
      %p122 = scmp.ne.s32.totalorder %s107, %s121
      %p123 = scmp.eq.s32.totalorder %s29, 0
      %p124 = por %p122, %p123
      %s126 = sadd.s32 %s125, 1
      %p129 = scmp.eq.s32.totalorder %s23, 1
      %p130 = scmp.ne.s32.totalorder %s125, %s127
      %p131 = scmp.eq.s32.totalorder %s23, 0
      %p132 = por %p130, %p131
      %p133 = scmp.ne.s32.totalorder %s125, %s127
      %p134 = scmp.eq.s32.totalorder %s28, 1
      %p135 = por %p133, %p134
      %p136 = scmp.ne.s32.totalorder %s127, %s128
      %p137 = scmp.eq.s32.totalorder %s28, 0
      %p138 = por %p136, %p137
      %p139 = scmp.ne.s32.totalorder %s127, %s128
      %p140 = scmp.eq.s32.totalorder %s29, 1
      %p141 = por %p139, %p140
      %p143 = scmp.ne.s32.totalorder %s128, %s142
      %p144 = scmp.eq.s32.totalorder %s29, 0
      %p145 = por %p143, %p144
      %s147 = sadd.s32 %s146, 1
      %p150 = scmp.eq.s32.totalorder %s23, 1
      %p151 = scmp.ne.s32.totalorder %s146, %s148
      %p152 = scmp.eq.s32.totalorder %s23, 0
      %p153 = por %p151, %p152
      %p154 = scmp.ne.s32.totalorder %s146, %s148
      %p155 = scmp.eq.s32.totalorder %s28, 1
      %p156 = por %p154, %p155
      %p157 = scmp.ne.s32.totalorder %s148, %s149
      %p158 = scmp.eq.s32.totalorder %s28, 0
      %p159 = por %p157, %p158
      %p160 = scmp.ne.s32.totalorder %s148, %s149
      %p161 = scmp.eq.s32.totalorder %s29, 1
      %p162 = por %p160, %p161
      %p164 = scmp.ne.s32.totalorder %s149, %s163
      %p165 = scmp.eq.s32.totalorder %s29, 0
      %p166 = por %p164, %p165
      %s168 = sadd.s32 %s167, 1
      %p171 = scmp.eq.s32.totalorder %s23, 1
      %p172 = scmp.ne.s32.totalorder %s167, %s169
      %p173 = scmp.eq.s32.totalorder %s23, 0
      %p174 = por %p172, %p173
      %p175 = scmp.ne.s32.totalorder %s167, %s169
      %p176 = scmp.eq.s32.totalorder %s28, 1
      %p177 = por %p175, %p176
      %p178 = scmp.ne.s32.totalorder %s169, %s170
      %p179 = scmp.eq.s32.totalorder %s28, 0
      %p180 = por %p178, %p179
      %p181 = scmp.ne.s32.totalorder %s169, %s170
      %p182 = scmp.eq.s32.totalorder %s29, 1
      %p183 = por %p181, %p182
      %p185 = scmp.ne.s32.totalorder %s170, %s184
      %p186 = scmp.eq.s32.totalorder %s29, 0
      %p187 = por %p185, %p186
      %s189 = sadd.s32 %s188, 1
      %p192 = scmp.eq.s32.totalorder %s23, 1
      %p193 = scmp.ne.s32.totalorder %s188, %s190
      %p194 = scmp.eq.s32.totalorder %s23, 0
      %p195 = por %p193, %p194
      %p196 = scmp.ne.s32.totalorder %s188, %s190
      %p197 = scmp.eq.s32.totalorder %s28, 1
      %p198 = por %p196, %p197
      %p199 = scmp.ne.s32.totalorder %s190, %s191
      %p200 = scmp.eq.s32.totalorder %s28, 0
      %p201 = por %p199, %p200
      %p202 = scmp.ne.s32.totalorder %s190, %s191
      %p203 = scmp.eq.s32.totalorder %s29, 1
      %p204 = por %p202, %p203
      %p206 = scmp.ne.s32.totalorder %s191, %s205
      %p207 = scmp.eq.s32.totalorder %s29, 0
      %p208 = por %p206, %p207
      %s210 = sadd.s32 %s209, 1
      %p213 = scmp.eq.s32.totalorder %s23, 1
      %p214 = scmp.ne.s32.totalorder %s209, %s211
      %p215 = scmp.eq.s32.totalorder %s23, 0
      %p216 = por %p214, %p215
      %p217 = scmp.ne.s32.totalorder %s209, %s211
      %p218 = scmp.eq.s32.totalorder %s28, 1
      %p219 = por %p217, %p218
      %p220 = scmp.ne.s32.totalorder %s211, %s212
      %p221 = scmp.eq.s32.totalorder %s28, 0
      %p222 = por %p220, %p221
      %p223 = scmp.ne.s32.totalorder %s211, %s212
      %p224 = scmp.eq.s32.totalorder %s29, 1
      %p225 = por %p223, %p224
      %p227 = scmp.ne.s32.totalorder %s212, %s226
      %p228 = scmp.eq.s32.totalorder %s29, 0
      %p229 = por %p227, %p228
      %s231 = sadd.s32 %s230, 1
      %p234 = scmp.eq.s32.totalorder %s23, 1
      %p235 = scmp.ne.s32.totalorder %s230, %s232
      %p236 = scmp.eq.s32.totalorder %s23, 0
      %p237 = por %p235, %p236
      %p238 = scmp.ne.s32.totalorder %s230, %s232
      %p239 = scmp.eq.s32.totalorder %s28, 1
      %p240 = por %p238, %p239
      %p241 = scmp.ne.s32.totalorder %s232, %s233
      %p242 = scmp.eq.s32.totalorder %s28, 0
      %p243 = por %p241, %p242
      %p244 = scmp.ne.s32.totalorder %s232, %s233
      %p245 = scmp.eq.s32.totalorder %s29, 1
      %p246 = por %p244, %p245
      %p248 = scmp.ne.s32.totalorder %s233, %s247
      %p249 = scmp.eq.s32.totalorder %s29, 0
      %p250 = por %p248, %p249
      %s252 = sadd.s32 %s251, 1
      %p255 = scmp.eq.s32.totalorder %s23, 1
      %p256 = scmp.ne.s32.totalorder %s251, %s253
      %p257 = scmp.eq.s32.totalorder %s23, 0
      %p258 = por %p256, %p257
      %p259 = scmp.ne.s32.totalorder %s251, %s253
      %p260 = scmp.eq.s32.totalorder %s28, 1
      %p261 = por %p259, %p260
      %p262 = scmp.ne.s32.totalorder %s253, %s254
      %p263 = scmp.eq.s32.totalorder %s28, 0
      %p264 = por %p262, %p263
      %p265 = scmp.ne.s32.totalorder %s253, %s254
      %p266 = scmp.eq.s32.totalorder %s29, 1
      %p267 = por %p265, %p266
      %p269 = scmp.ne.s32.totalorder %s254, %s268
      %p270 = scmp.eq.s32.totalorder %s29, 0
      %p271 = por %p269, %p270
      %s273 = sadd.s32 %s272, 1
      %p276 = scmp.eq.s32.totalorder %s23, 1
      %p277 = scmp.ne.s32.totalorder %s272, %s274
      %p278 = scmp.eq.s32.totalorder %s23, 0
      %p279 = por %p277, %p278
      %p280 = scmp.ne.s32.totalorder %s272, %s274
      %p281 = scmp.eq.s32.totalorder %s28, 1
      %p282 = por %p280, %p281
      %p283 = scmp.ne.s32.totalorder %s274, %s275
      %p284 = scmp.eq.s32.totalorder %s28, 0
      %p285 = por %p283, %p284
      %p286 = scmp.ne.s32.totalorder %s274, %s275
      %p287 = scmp.eq.s32.totalorder %s29, 1
      %p288 = por %p286, %p287
      %p290 = scmp.ne.s32.totalorder %s275, %s289
      %p291 = scmp.eq.s32.totalorder %s29, 0
      %p292 = por %p290, %p291
      %s293 = ssub.s32 %s23, %s30
      %p294 = scmp.eq.s32.totalorder %s293, 0
      %s296 = sadd.s32 %s295, 1
      %s297 = scalar_select %p294, %s295, %s296
      %p300 = pneg %p294
      %p301 = scmp.eq.s32.totalorder %s23, 1
      %p302 = por %p300, %p301
      %p303 = scmp.ne.s32.totalorder %s295, %s298
      %p304 = scmp.eq.s32.totalorder %s23, 0
      %p305 = por %p303, %p304
      %p306 = scmp.ne.s32.totalorder %s295, %s298
      %p307 = scmp.eq.s32.totalorder %s28, 1
      %p308 = por %p306, %p307
      %p309 = scmp.ne.s32.totalorder %s298, %s299
      %p310 = scmp.eq.s32.totalorder %s28, 0
      %p311 = por %p309, %p310
      %p312 = scmp.ne.s32.totalorder %s298, %s299
      %p313 = scmp.eq.s32.totalorder %s29, 1
      %p314 = por %p312, %p313
      %p316 = scmp.ne.s32.totalorder %s299, %s315
      %p317 = scmp.eq.s32.totalorder %s29, 0
      %p318 = por %p316, %p317
      %s319 = ssub.s32 %s23, %s30
      %p320 = scmp.eq.s32.totalorder %s319, 0
      %s322 = sadd.s32 %s321, 1
      %s323 = scalar_select %p320, %s321, %s322
      %p326 = pneg %p320
      %p327 = scmp.eq.s32.totalorder %s23, 1
      %p328 = por %p326, %p327
      %p329 = scmp.ne.s32.totalorder %s321, %s324
      %p330 = scmp.eq.s32.totalorder %s23, 0
      %p331 = por %p329, %p330
      %p332 = scmp.ne.s32.totalorder %s321, %s324
      %p333 = scmp.eq.s32.totalorder %s28, 1
      %p334 = por %p332, %p333
      %p335 = scmp.ne.s32.totalorder %s324, %s325
      %p336 = scmp.eq.s32.totalorder %s28, 0
      %p337 = por %p335, %p336
      %p338 = scmp.ne.s32.totalorder %s324, %s325
      %p339 = scmp.eq.s32.totalorder %s29, 1
      %p340 = por %p338, %p339
      %p342 = scmp.ne.s32.totalorder %s325, %s341
      %p343 = scmp.eq.s32.totalorder %s29, 0
      %p344 = por %p342, %p343
      %p345 = scmp.le.s32.totalorder 1, %s23
      %p346 = scmp.lt.s32.totalorder %s23, 3
      %p347 = pnand %p345, %p346
      %p348 = pneg %p347
      // Predicated region
      $region9: #{decoder_forward.8} parent=5 // pred_check
        _
      $region10: #{decoder_forward.8} parent=5 // pred_check_branch
        %350 = sbr.rel (%p347) target = $region12
      $region11: #{decoder_forward.8} parent=5 // pred_region
        %s351 = ssub.s32 %s23, 1
        // Predicated region
        $region13: #{decoder_forward.8} parent=11 // pred_check
          %p352 = pneg %p96
        $region14: #{decoder_forward.8} parent=11 // pred_check_branch
          %354 = sbr.rel (%p352) target = $region16
        $region15: #{decoder_forward.8} parent=11 // pred_region
          _
        $region16: #{decoder_forward.8} parent=11 // pred_fallthru
          _
        // Predicated region
        $region17: #{decoder_forward.8} parent=11 // pred_check
          %p355 = pneg %p117
        $region18: #{decoder_forward.8} parent=11 // pred_check_branch
          %357 = sbr.rel (%p355) target = $region20
        $region19: #{decoder_forward.8} parent=11 // pred_region
          _
        $region20: #{decoder_forward.8} parent=11 // pred_fallthru
          _
        // Predicated region
        $region21: #{decoder_forward.8} parent=11 // pred_check
          %p358 = pneg %p138
        $region22: #{decoder_forward.8} parent=11 // pred_check_branch
          %360 = sbr.rel (%p358) target = $region24
        $region23: #{decoder_forward.8} parent=11 // pred_region
          _
        $region24: #{decoder_forward.8} parent=11 // pred_fallthru
          _
        // Predicated region
        $region25: #{decoder_forward.8} parent=11 // pred_check
          %p361 = pneg %p159
        $region26: #{decoder_forward.8} parent=11 // pred_check_branch
          %363 = sbr.rel (%p361) target = $region28
        $region27: #{decoder_forward.8} parent=11 // pred_region
          _
        $region28: #{decoder_forward.8} parent=11 // pred_fallthru
          _
        // Predicated region
        $region29: #{decoder_forward.8} parent=11 // pred_check
          %p364 = pneg %p180
        $region30: #{decoder_forward.8} parent=11 // pred_check_branch
          %366 = sbr.rel (%p364) target = $region32
        $region31: #{decoder_forward.8} parent=11 // pred_region
          _
        $region32: #{decoder_forward.8} parent=11 // pred_fallthru
          _
        // Predicated region
        $region33: #{decoder_forward.8} parent=11 // pred_check
          %p367 = pneg %p201
        $region34: #{decoder_forward.8} parent=11 // pred_check_branch
          %369 = sbr.rel (%p367) target = $region36
        $region35: #{decoder_forward.8} parent=11 // pred_region
          _
        $region36: #{decoder_forward.8} parent=11 // pred_fallthru
          _
        // Predicated region
        $region37: #{decoder_forward.8} parent=11 // pred_check
          %p370 = pneg %p222
        $region38: #{decoder_forward.8} parent=11 // pred_check_branch
          %372 = sbr.rel (%p370) target = $region40
        $region39: #{decoder_forward.8} parent=11 // pred_region
          _
        $region40: #{decoder_forward.8} parent=11 // pred_fallthru
          _
        // Predicated region
        $region41: #{decoder_forward.8} parent=11 // pred_check
          %p373 = pneg %p243
        $region42: #{decoder_forward.8} parent=11 // pred_check_branch
          %375 = sbr.rel (%p373) target = $region44
        $region43: #{decoder_forward.8} parent=11 // pred_region
          _
        $region44: #{decoder_forward.8} parent=11 // pred_fallthru
          _
        // Predicated region
        $region45: #{decoder_forward.8} parent=11 // pred_check
          %p376 = pneg %p264
        $region46: #{decoder_forward.8} parent=11 // pred_check_branch
          %378 = sbr.rel (%p376) target = $region48
        $region47: #{decoder_forward.8} parent=11 // pred_region
          _
        $region48: #{decoder_forward.8} parent=11 // pred_fallthru
          _
        // Predicated region
        $region49: #{decoder_forward.8} parent=11 // pred_check
          %p379 = pneg %p285
        $region50: #{decoder_forward.8} parent=11 // pred_check_branch
          %381 = sbr.rel (%p379) target = $region52
        $region51: #{decoder_forward.8} parent=11 // pred_region
          _
        $region52: #{decoder_forward.8} parent=11 // pred_fallthru
          _
      $region12: #{decoder_forward.8} parent=5 // pred_fallthru
        _
      %p382 = scmp.lt.s32.totalorder %s23, 2
      // Predicated region
      $region53: #{decoder_forward.8} parent=5 // pred_check
        %p383 = pneg %p382
      $region54: #{decoder_forward.8} parent=5 // pred_check_branch
        %385 = sbr.rel (%p383) target = $region56
      $region55: #{decoder_forward.8} parent=5 // pred_region
        // Predicated region
        $region57: #{decoder_forward.8} parent=55 // pred_check
          %p386 = pneg %p43
        $region58: #{decoder_forward.8} parent=55 // pred_check_branch
          %388 = sbr.rel (%p386) target = $region60
        $region59: #{decoder_forward.8} parent=55 // pred_region
          %p389 = scmp.lt.s32.totalorder %s23, 1
          %s390 = scalar_select %p389, %s23, 1
          %s391 = smul.addr %s390, 8
          %s392 = scalar_lea.vmem %s0, %s391
        $region60: #{decoder_forward.8} parent=55 // pred_fallthru
          _
        // Predicated region
        $region61: #{decoder_forward.8} parent=55 // pred_check
          %p393 = pneg %p69
        $region62: #{decoder_forward.8} parent=55 // pred_check_branch
          %395 = sbr.rel (%p393) target = $region64
        $region63: #{decoder_forward.8} parent=55 // pred_region
          %p396 = scmp.lt.s32.totalorder %s23, 1
          %s397 = scalar_select %p396, %s23, 1
          %s398 = smul.addr %s397, 8
          %s399 = scalar_lea.vmem %s1, %s398
        $region64: #{decoder_forward.8} parent=55 // pred_fallthru
          _
      $region56: #{decoder_forward.8} parent=5 // pred_fallthru
        _
      %p400 = scmp.le.s32.totalorder 1, %s23
      %p401 = scmp.lt.s32.totalorder %s23, 3
      %p402 = pnand %p400, %p401
      %p403 = pneg %p402
      // Predicated region
      $region65: #{decoder_forward.8} parent=5 // pred_check
        _
      $region66: #{decoder_forward.8} parent=5 // pred_check_branch
        %405 = sbr.rel (%p402) target = $region68
      $region67: #{decoder_forward.8} parent=5 // pred_region
        %s406 = ssub.s32 %s23, 1
        %p407 = scmp.lt.s32.totalorder %s28, 1
        %s408 = scalar_select %p407, %s28, 1
        %s409 = smul.addr %s408, 8
        %s410 = scalar_lea.vmem %s0, %s409
        %p411 = pneg %p49
        %p412 = pneg %p46
        %p413 = scmp.lt.s32.totalorder %s28, 1
        %s414 = scalar_select %p413, %s28, 1
        %s415 = smul.addr %s414, 8
        %s416 = scalar_lea.vmem %s1, %s415
        %p417 = pneg %p75
        %p418 = pneg %p72
        %p419 = pneg %p96
        %p420 = pneg %p93
        %p421 = pneg %p117
        %p422 = pneg %p114
        %p423 = pneg %p138
        %p424 = pneg %p135
        %p425 = pneg %p159
        %p426 = pneg %p156
        %p427 = pneg %p180
        %p428 = pneg %p177
        %p429 = pneg %p201
        %p430 = pneg %p198
        %p431 = pneg %p222
        %p432 = pneg %p219
        %p433 = pneg %p243
        %p434 = pneg %p240
        %p435 = pneg %p264
        %p436 = pneg %p261
        %p437 = pneg %p285
        %p438 = pneg %p282
        %p439 = pneg %p311
        %p440 = pneg %p308
        %p441 = scmp.lt.s32.totalorder %s28, 1
        %s442 = scalar_select %p441, %s28, 1
        %s443 = smul.addr %s442, 8
        %s444 = scalar_lea.vmem %s12, %s443
        %p445 = pneg %p337
        %p446 = pneg %p334
        %s447 = sand.u32 %s324, 1
        %s448 = scalar_lea.sflag [#allocation3], %s447
        %s449 = sand.u32 %s324, 1
        %s450 = smul.addr %s449, 32
        %s451 = scalar_lea.vmem [#allocation2], %s450
        %p452 = scmp.lt.s32.totalorder %s28, 1
        %s453 = scalar_select %p452, %s28, 1
        %s454 = smul.addr %s453, 8
        %s455 = scalar_lea.vmem %s0, %s454
        %p456 = scmp.lt.s32.totalorder %s28, 1
        %s457 = scalar_select %p456, %s28, 1
        %s458 = smul.addr %s457, 8
        %s459 = scalar_lea.vmem %s1, %s458
        %p460 = scmp.lt.s32.totalorder %s28, 1
        %s461 = scalar_select %p460, %s28, 1
        %s462 = smul.addr %s461, 8
        %s463 = scalar_lea.vmem %s12, %s462
        %s464 = smul.u32 4, %s28
        %v466 = vld [vmem:[%s455] sm:$0xff]
        %v467 = vld [vmem:[%s459] sm:$0xff]
        %v468 = vld [vmem:[%s2] sm:$0xf]
        %v469 = vld [vmem:[%s2 + $0x4] sm:$0xf]
        %v470 = vld [vmem:[%s2 + $0x8] sm:$0xf]
        %v471 = vld [vmem:[%s2 + $0xc] sm:$0xf]
        %v472 = vld [vmem:[%s2 + $0x10] sm:$0xf]
        %v473 = vld [vmem:[%s2 + $0x14] sm:$0xf]
        %v474 = vld [vmem:[%s2 + $0x18] sm:$0xf]
        %v475 = vld [vmem:[%s2 + $0x1c] sm:$0xf]
        %v476 = vld [vmem:[%s2 + $0x20] sm:$0xf]
        %v477 = vld [vmem:[%s2 + $0x24] sm:$0xf]
        %v478 = vld [vmem:[%s2 + $0x28] sm:$0xf]
        %v479 = vld [vmem:[%s2 + $0x2c] sm:$0xf]
        %v480 = vld [vmem:[%s2 + $0x30] sm:$0xf]
        %v481 = vld [vmem:[%s2 + $0x34] sm:$0xf]
        %v482 = vld [vmem:[%s2 + $0x38] sm:$0xf]
        %v483 = vld [vmem:[%s2 + $0x3c] sm:$0xf]
        %v484 = vld [vmem:[%s3] sm:$0xf]
        %v485 = vld [vmem:[%s3 + $0x4] sm:$0xf]
        %v486 = vld [vmem:[%s3 + $0x8] sm:$0xf]
        %v487 = vld [vmem:[%s3 + $0xc] sm:$0xf]
        %v488 = vld [vmem:[%s3 + $0x10] sm:$0xf]
        %v489 = vld [vmem:[%s3 + $0x14] sm:$0xf]
        %v490 = vld [vmem:[%s3 + $0x18] sm:$0xf]
        %v491 = vld [vmem:[%s3 + $0x1c] sm:$0xf]
        %v492 = vld [vmem:[%s3 + $0x20] sm:$0xf]
        %v493 = vld [vmem:[%s3 + $0x24] sm:$0xf]
        %v494 = vld [vmem:[%s3 + $0x28] sm:$0xf]
        %v495 = vld [vmem:[%s3 + $0x2c] sm:$0xf]
        %v496 = vld [vmem:[%s3 + $0x30] sm:$0xf]
        %v497 = vld [vmem:[%s3 + $0x34] sm:$0xf]
        %v498 = vld [vmem:[%s3 + $0x38] sm:$0xf]
        %v499 = vld [vmem:[%s3 + $0x3c] sm:$0xf]
        %v500 = vld [vmem:[%s4] sm:$0xf]
        %v501 = vld [vmem:[%s4 + $0x4] sm:$0xf]
        %v502 = vld [vmem:[%s4 + $0x8] sm:$0xf]
        %v503 = vld [vmem:[%s4 + $0xc] sm:$0xf]
        %v504 = vld [vmem:[%s4 + $0x10] sm:$0xf]
        %v505 = vld [vmem:[%s4 + $0x14] sm:$0xf]
        %v506 = vld [vmem:[%s4 + $0x18] sm:$0xf]
        %v507 = vld [vmem:[%s4 + $0x1c] sm:$0xf]
        %v508 = vld [vmem:[%s4 + $0x20] sm:$0xf]
        %v509 = vld [vmem:[%s4 + $0x24] sm:$0xf]
        %v510 = vld [vmem:[%s4 + $0x28] sm:$0xf]
        %v511 = vld [vmem:[%s4 + $0x2c] sm:$0xf]
        %v512 = vld [vmem:[%s4 + $0x30] sm:$0xf]
        %v513 = vld [vmem:[%s4 + $0x34] sm:$0xf]
        %v514 = vld [vmem:[%s4 + $0x38] sm:$0xf]
        %v515 = vld [vmem:[%s4 + $0x3c] sm:$0xf]
        %v516 = vld [vmem:[%s5] sm:$0x1]
        %v517 = vld [vmem:[%s5 + $0x1] sm:$0x1]
        %v518 = vld [vmem:[%s5 + $0x2] sm:$0x1]
        %v519 = vld [vmem:[%s5 + $0x3] sm:$0x1]
        %v520 = vld [vmem:[%s6] sm:$0x1]
        %v521 = vld [vmem:[%s6 + $0x1] sm:$0x1]
        %v522 = vld [vmem:[%s6 + $0x2] sm:$0x1]
        %v523 = vld [vmem:[%s6 + $0x3] sm:$0x1]
        %v524 = vld [vmem:[%s7] sm:$0x1]
        %v525 = vld [vmem:[%s7 + $0x1] sm:$0x1]
        %v526 = vld [vmem:[%s7 + $0x2] sm:$0x1]
        %v527 = vld [vmem:[%s7 + $0x3] sm:$0x1]
        %v528 = vld [vmem:[%s8] sm:$0xf]
        %v529 = vld [vmem:[%s8 + $0x4] sm:$0xf]
        %v530 = vld [vmem:[%s8 + $0x8] sm:$0xf]
        %v531 = vld [vmem:[%s8 + $0xc] sm:$0xf]
        %v532 = vld [vmem:[%s9] sm:$0x1]
        %v533 = vld [vmem:[%s10] sm:$0x1]
        %v534 = vld [vmem:[%s11] sm:$0x1]
        %v535 = vpack.c.bf16 %v466, %v466
        %v536 = vpack.c.bf16 %v467, %v467
        %v541 = vlaneseq
        %v542 = vshrl.u32 %v541, 7
        %v543 = vsub.s32 0, %v542
        %v544 = vrot.slane %v516, %v543
        %v545 = vlaneseq
        %v546 = vshrl.u32 %v545, 7
        %v547 = vsub.s32 0, %v546
        %v548 = vrot.slane %v517, %v547
        %v549 = vlaneseq
        %v550 = vshrl.u32 %v549, 7
        %v551 = vsub.s32 0, %v550
        %v552 = vrot.slane %v518, %v551
        %v553 = vlaneseq
        %v554 = vshrl.u32 %v553, 7
        %v555 = vsub.s32 0, %v554
        %v556 = vrot.slane %v519, %v555
        %v565 = vunpack.c.l.b16 %v468
        %v566 = vunpack.c.l.b16 %v469
        %v567 = vunpack.c.l.b16 %v470
        %v568 = vunpack.c.l.b16 %v471
        %v569 = vpack.c.b16 %v566, %v565
        %v570 = vpack.c.b16 %v568, %v567
        %vm573 = vcmask 261120
        %v575 = vsel %vm573, %v535, 0
        %577 = vmatprep.subr.bf16.mxu0 0
        %578 = vmatpush1.bf16.msra.mxu0 %v569
        %579 = vmatprep.subr.bf16.mxu0 0
        %580 = vmatpush1.bf16.msra.mxu0 %v570
        %581 = vmatprep.subr.bf16.mxu0 0
        %582 = vmatpush1.bf16.msra.mxu0 0
        %583 = vmatprep.subr.bf16.mxu0 0
        %584 = vmatpush1.bf16.msra.mxu0 0
        %585 = vmatprep.subr.bf16.mxu0 0
        %586 = vmatpush1.bf16.msra.mxu0 0
        %587 = vmatprep.subr.bf16.mxu0 0
        %588 = vmatpush1.bf16.msra.mxu0 0
        %589 = vmatprep.subr.bf16.mxu0 0
        %590 = vmatpush1.bf16.msra.mxu0 0
        %591 = vmatprep.subr.bf16.mxu0 0
        %592 = vmatpush1.bf16.msra.mxu0 0
        %593 = vmatprep.subr.bf16.mxu0 0
        %594 = vmatpush1.bf16.msra.mxu0 0
        %595 = vmatprep.subr.bf16.mxu0 0
        %596 = vmatpush1.bf16.msra.mxu0 0
        %597 = vmatprep.subr.bf16.mxu0 0
        %598 = vmatpush1.bf16.msra.mxu0 0
        %599 = vmatprep.subr.bf16.mxu0 0
        %600 = vmatpush1.bf16.msra.mxu0 0
        %601 = vmatprep.subr.bf16.mxu0 0
        %602 = vmatpush1.bf16.msra.mxu0 0
        %603 = vmatprep.subr.bf16.mxu0 0
        %604 = vmatpush1.bf16.msra.mxu0 0
        %605 = vmatprep.subr.bf16.mxu0 0
        %606 = vmatpush1.bf16.msra.mxu0 0
        %607 = vmatprep.subr.bf16.mxu0 0
        %608 = vmatpush1.bf16.msra.mxu0 0
        %609 = vmatprep.mubr.bf16.mxu0 0
        %610 = vmatmul.mubr.bf16.gmra.mrb[0].mxu0 %v575
        %v611 = vpop.f32.mrb[0].mxu0
        %v612 = vadd.f32 %v544, %v611
        %v613 = vpop.f32.mrb[0].mxu0
        %v614 = vpop.f32.mrb[0].mxu0
        %v615 = vpop.f32.mrb[0].mxu0
        %616 = vdwg.mxu0
        %v621 = vunpack.c.l.b16 %v472
        %v622 = vunpack.c.l.b16 %v473
        %v623 = vunpack.c.l.b16 %v474
        %v624 = vunpack.c.l.b16 %v475
        %v625 = vpack.c.b16 %v622, %v621
        %v626 = vpack.c.b16 %v624, %v623
        %629 = vmatprep.subr.bf16.mxu0 0
        %630 = vmatpush1.bf16.msra.mxu0 %v625
        %631 = vmatprep.subr.bf16.mxu0 0
        %632 = vmatpush1.bf16.msra.mxu0 %v626
        %633 = vmatprep.subr.bf16.mxu0 0
        %634 = vmatpush1.bf16.msra.mxu0 0
        %635 = vmatprep.subr.bf16.mxu0 0
        %636 = vmatpush1.bf16.msra.mxu0 0
        %637 = vmatprep.subr.bf16.mxu0 0
        %638 = vmatpush1.bf16.msra.mxu0 0
        %639 = vmatprep.subr.bf16.mxu0 0
        %640 = vmatpush1.bf16.msra.mxu0 0
        %641 = vmatprep.subr.bf16.mxu0 0
        %642 = vmatpush1.bf16.msra.mxu0 0
        %643 = vmatprep.subr.bf16.mxu0 0
        %644 = vmatpush1.bf16.msra.mxu0 0
        %645 = vmatprep.subr.bf16.mxu0 0
        %646 = vmatpush1.bf16.msra.mxu0 0
        %647 = vmatprep.subr.bf16.mxu0 0
        %648 = vmatpush1.bf16.msra.mxu0 0
        %649 = vmatprep.subr.bf16.mxu0 0
        %650 = vmatpush1.bf16.msra.mxu0 0
        %651 = vmatprep.subr.bf16.mxu0 0
        %652 = vmatpush1.bf16.msra.mxu0 0
        %653 = vmatprep.subr.bf16.mxu0 0
        %654 = vmatpush1.bf16.msra.mxu0 0
        %655 = vmatprep.subr.bf16.mxu0 0
        %656 = vmatpush1.bf16.msra.mxu0 0
        %657 = vmatprep.subr.bf16.mxu0 0
        %658 = vmatpush1.bf16.msra.mxu0 0
        %659 = vmatprep.subr.bf16.mxu0 0
        %660 = vmatpush1.bf16.msra.mxu0 0
        %661 = vmatprep.mubr.bf16.mxu0 0
        %662 = vmatmul.mubr.bf16.gmra.mrb[0].mxu0 %v575
        %v663 = vpop.f32.mrb[0].mxu0
        %v664 = vadd.f32 %v548, %v663
        %v665 = vpop.f32.mrb[0].mxu0
        %v666 = vpop.f32.mrb[0].mxu0
        %v667 = vpop.f32.mrb[0].mxu0
        %668 = vdwg.mxu0
        %v673 = vunpack.c.l.b16 %v476
        %v674 = vunpack.c.l.b16 %v477
        %v675 = vunpack.c.l.b16 %v478
        %v676 = vunpack.c.l.b16 %v479
        %v677 = vpack.c.b16 %v674, %v673
        %v678 = vpack.c.b16 %v676, %v675
        %681 = vmatprep.subr.bf16.mxu0 0
        %682 = vmatpush1.bf16.msra.mxu0 %v677
        %683 = vmatprep.subr.bf16.mxu0 0
        %684 = vmatpush1.bf16.msra.mxu0 %v678
        %685 = vmatprep.subr.bf16.mxu0 0
        %686 = vmatpush1.bf16.msra.mxu0 0
        %687 = vmatprep.subr.bf16.mxu0 0
        %688 = vmatpush1.bf16.msra.mxu0 0
        %689 = vmatprep.subr.bf16.mxu0 0
        %690 = vmatpush1.bf16.msra.mxu0 0
        %691 = vmatprep.subr.bf16.mxu0 0
        %692 = vmatpush1.bf16.msra.mxu0 0
        %693 = vmatprep.subr.bf16.mxu0 0
        %694 = vmatpush1.bf16.msra.mxu0 0
        %695 = vmatprep.subr.bf16.mxu0 0
        %696 = vmatpush1.bf16.msra.mxu0 0
        %697 = vmatprep.subr.bf16.mxu0 0
        %698 = vmatpush1.bf16.msra.mxu0 0
        %699 = vmatprep.subr.bf16.mxu0 0
        %700 = vmatpush1.bf16.msra.mxu0 0
        %701 = vmatprep.subr.bf16.mxu0 0
        %702 = vmatpush1.bf16.msra.mxu0 0
        %703 = vmatprep.subr.bf16.mxu0 0
        %704 = vmatpush1.bf16.msra.mxu0 0
        %705 = vmatprep.subr.bf16.mxu0 0
        %706 = vmatpush1.bf16.msra.mxu0 0
        %707 = vmatprep.subr.bf16.mxu0 0
        %708 = vmatpush1.bf16.msra.mxu0 0
        %709 = vmatprep.subr.bf16.mxu0 0
        %710 = vmatpush1.bf16.msra.mxu0 0
        %711 = vmatprep.subr.bf16.mxu0 0
        %712 = vmatpush1.bf16.msra.mxu0 0
        %713 = vmatprep.mubr.bf16.mxu0 0
        %714 = vmatmul.mubr.bf16.gmra.mrb[0].mxu0 %v575
        %v715 = vpop.f32.mrb[0].mxu0
        %v716 = vadd.f32 %v552, %v715
        %v717 = vpop.f32.mrb[0].mxu0
        %v718 = vpop.f32.mrb[0].mxu0
        %v719 = vpop.f32.mrb[0].mxu0
        %720 = vdwg.mxu0
        %v725 = vunpack.c.l.b16 %v480
        %v726 = vunpack.c.l.b16 %v481
        %v727 = vunpack.c.l.b16 %v482
        %v728 = vunpack.c.l.b16 %v483
        %v729 = vpack.c.b16 %v726, %v725
        %v730 = vpack.c.b16 %v728, %v727
        %733 = vmatprep.subr.bf16.mxu0 0
        %734 = vmatpush1.bf16.msra.mxu0 %v729
        %735 = vmatprep.subr.bf16.mxu0 0
        %736 = vmatpush1.bf16.msra.mxu0 %v730
        %737 = vmatprep.subr.bf16.mxu0 0
        %738 = vmatpush1.bf16.msra.mxu0 0
        %739 = vmatprep.subr.bf16.mxu0 0
        %740 = vmatpush1.bf16.msra.mxu0 0
        %741 = vmatprep.subr.bf16.mxu0 0
        %742 = vmatpush1.bf16.msra.mxu0 0
        %743 = vmatprep.subr.bf16.mxu0 0
        %744 = vmatpush1.bf16.msra.mxu0 0
        %745 = vmatprep.subr.bf16.mxu0 0
        %746 = vmatpush1.bf16.msra.mxu0 0
        %747 = vmatprep.subr.bf16.mxu0 0
        %748 = vmatpush1.bf16.msra.mxu0 0
        %749 = vmatprep.subr.bf16.mxu0 0
        %750 = vmatpush1.bf16.msra.mxu0 0
        %751 = vmatprep.subr.bf16.mxu0 0
        %752 = vmatpush1.bf16.msra.mxu0 0
        %753 = vmatprep.subr.bf16.mxu0 0
        %754 = vmatpush1.bf16.msra.mxu0 0
        %755 = vmatprep.subr.bf16.mxu0 0
        %756 = vmatpush1.bf16.msra.mxu0 0
        %757 = vmatprep.subr.bf16.mxu0 0
        %758 = vmatpush1.bf16.msra.mxu0 0
        %759 = vmatprep.subr.bf16.mxu0 0
        %760 = vmatpush1.bf16.msra.mxu0 0
        %761 = vmatprep.subr.bf16.mxu0 0
        %762 = vmatpush1.bf16.msra.mxu0 0
        %763 = vmatprep.subr.bf16.mxu0 0
        %764 = vmatpush1.bf16.msra.mxu0 0
        %765 = vmatprep.mubr.bf16.mxu0 0
        %766 = vmatmul.mubr.bf16.gmra.mrb[0].mxu0 %v575
        %v767 = vpop.f32.mrb[0].mxu0
        %v768 = vadd.f32 %v556, %v767
        %v769 = vpop.f32.mrb[0].mxu0
        %v770 = vpop.f32.mrb[0].mxu0
        %v771 = vpop.f32.mrb[0].mxu0
        %772 = vdwg.mxu0
        %v777 = vlaneseq
        %v778 = vshrl.u32 %v777, 7
        %v779 = vsub.s32 0, %v778
        %v780 = vrot.slane %v520, %v779
        %v781 = vlaneseq
        %v782 = vshrl.u32 %v781, 7
        %v783 = vsub.s32 0, %v782
        %v784 = vrot.slane %v521, %v783
        %v785 = vlaneseq
        %v786 = vshrl.u32 %v785, 7
        %v787 = vsub.s32 0, %v786
        %v788 = vrot.slane %v522, %v787
        %v789 = vlaneseq
        %v790 = vshrl.u32 %v789, 7
        %v791 = vsub.s32 0, %v790
        %v792 = vrot.slane %v523, %v791
        %v801 = vunpack.c.l.b16 %v484
        %v802 = vunpack.c.l.b16 %v485
        %v803 = vunpack.c.l.b16 %v486
        %v804 = vunpack.c.l.b16 %v487
        %v805 = vpack.c.b16 %v802, %v801
        %v806 = vpack.c.b16 %v804, %v803
        %v810 = vsel %vm573, %v536, 0
        %812 = vmatprep.subr.bf16.mxu0 0
        %813 = vmatpush1.bf16.msra.mxu0 %v805
        %814 = vmatprep.subr.bf16.mxu0 0
        %815 = vmatpush1.bf16.msra.mxu0 %v806
        %816 = vmatprep.subr.bf16.mxu0 0
        %817 = vmatpush1.bf16.msra.mxu0 0
        %818 = vmatprep.subr.bf16.mxu0 0
        %819 = vmatpush1.bf16.msra.mxu0 0
        %820 = vmatprep.subr.bf16.mxu0 0
        %821 = vmatpush1.bf16.msra.mxu0 0
        %822 = vmatprep.subr.bf16.mxu0 0
        %823 = vmatpush1.bf16.msra.mxu0 0
        %824 = vmatprep.subr.bf16.mxu0 0
        %825 = vmatpush1.bf16.msra.mxu0 0
        %826 = vmatprep.subr.bf16.mxu0 0
        %827 = vmatpush1.bf16.msra.mxu0 0
        %828 = vmatprep.subr.bf16.mxu0 0
        %829 = vmatpush1.bf16.msra.mxu0 0
        %830 = vmatprep.subr.bf16.mxu0 0
        %831 = vmatpush1.bf16.msra.mxu0 0
        %832 = vmatprep.subr.bf16.mxu0 0
        %833 = vmatpush1.bf16.msra.mxu0 0
        %834 = vmatprep.subr.bf16.mxu0 0
        %835 = vmatpush1.bf16.msra.mxu0 0
        %836 = vmatprep.subr.bf16.mxu0 0
        %837 = vmatpush1.bf16.msra.mxu0 0
        %838 = vmatprep.subr.bf16.mxu0 0
        %839 = vmatpush1.bf16.msra.mxu0 0
        %840 = vmatprep.subr.bf16.mxu0 0
        %841 = vmatpush1.bf16.msra.mxu0 0
        %842 = vmatprep.subr.bf16.mxu0 0
        %843 = vmatpush1.bf16.msra.mxu0 0
        %844 = vmatprep.mubr.bf16.mxu0 0
        %845 = vmatmul.mubr.bf16.gmra.mrb[0].mxu0 %v810
        %v846 = vpop.f32.mrb[0].mxu0
        %v847 = vadd.f32 %v780, %v846
        %v848 = vpop.f32.mrb[0].mxu0
        %v849 = vpop.f32.mrb[0].mxu0
        %v850 = vpop.f32.mrb[0].mxu0
        %851 = vdwg.mxu0
        %v856 = vunpack.c.l.b16 %v488
        %v857 = vunpack.c.l.b16 %v489
        %v858 = vunpack.c.l.b16 %v490
        %v859 = vunpack.c.l.b16 %v491
        %v860 = vpack.c.b16 %v857, %v856
        %v861 = vpack.c.b16 %v859, %v858
        %864 = vmatprep.subr.bf16.mxu0 0
        %865 = vmatpush1.bf16.msra.mxu0 %v860
        %866 = vmatprep.subr.bf16.mxu0 0
        %867 = vmatpush1.bf16.msra.mxu0 %v861
        %868 = vmatprep.subr.bf16.mxu0 0
        %869 = vmatpush1.bf16.msra.mxu0 0
        %870 = vmatprep.subr.bf16.mxu0 0
        %871 = vmatpush1.bf16.msra.mxu0 0
        %872 = vmatprep.subr.bf16.mxu0 0
        %873 = vmatpush1.bf16.msra.mxu0 0
        %874 = vmatprep.subr.bf16.mxu0 0
        %875 = vmatpush1.bf16.msra.mxu0 0
        %876 = vmatprep.subr.bf16.mxu0 0
        %877 = vmatpush1.bf16.msra.mxu0 0
        %878 = vmatprep.subr.bf16.mxu0 0
        %879 = vmatpush1.bf16.msra.mxu0 0
        %880 = vmatprep.subr.bf16.mxu0 0
        %881 = vmatpush1.bf16.msra.mxu0 0
        %882 = vmatprep.subr.bf16.mxu0 0
        %883 = vmatpush1.bf16.msra.mxu0 0
        %884 = vmatprep.subr.bf16.mxu0 0
        %885 = vmatpush1.bf16.msra.mxu0 0
        %886 = vmatprep.subr.bf16.mxu0 0
        %887 = vmatpush1.bf16.msra.mxu0 0
        %888 = vmatprep.subr.bf16.mxu0 0
        %889 = vmatpush1.bf16.msra.mxu0 0
        %890 = vmatprep.subr.bf16.mxu0 0
        %891 = vmatpush1.bf16.msra.mxu0 0
        %892 = vmatprep.subr.bf16.mxu0 0
        %893 = vmatpush1.bf16.msra.mxu0 0
        %894 = vmatprep.subr.bf16.mxu0 0
        %895 = vmatpush1.bf16.msra.mxu0 0
        %896 = vmatprep.mubr.bf16.mxu0 0
        %897 = vmatmul.mubr.bf16.gmra.mrb[0].mxu0 %v810
        %v898 = vpop.f32.mrb[0].mxu0
        %v899 = vadd.f32 %v784, %v898
        %v900 = vpop.f32.mrb[0].mxu0
        %v901 = vpop.f32.mrb[0].mxu0
        %v902 = vpop.f32.mrb[0].mxu0
        %903 = vdwg.mxu0
        %v908 = vunpack.c.l.b16 %v492
        %v909 = vunpack.c.l.b16 %v493
        %v910 = vunpack.c.l.b16 %v494
        %v911 = vunpack.c.l.b16 %v495
        %v912 = vpack.c.b16 %v909, %v908
        %v913 = vpack.c.b16 %v911, %v910
        %916 = vmatprep.subr.bf16.mxu0 0
        %917 = vmatpush1.bf16.msra.mxu0 %v912
        %918 = vmatprep.subr.bf16.mxu0 0
        %919 = vmatpush1.bf16.msra.mxu0 %v913
        %920 = vmatprep.subr.bf16.mxu0 0
        %921 = vmatpush1.bf16.msra.mxu0 0
        %922 = vmatprep.subr.bf16.mxu0 0
        %923 = vmatpush1.bf16.msra.mxu0 0
        %924 = vmatprep.subr.bf16.mxu0 0
        %925 = vmatpush1.bf16.msra.mxu0 0
        %926 = vmatprep.subr.bf16.mxu0 0
        %927 = vmatpush1.bf16.msra.mxu0 0
        %928 = vmatprep.subr.bf16.mxu0 0
        %929 = vmatpush1.bf16.msra.mxu0 0
        %930 = vmatprep.subr.bf16.mxu0 0
        %931 = vmatpush1.bf16.msra.mxu0 0
        %932 = vmatprep.subr.bf16.mxu0 0
        %933 = vmatpush1.bf16.msra.mxu0 0
        %934 = vmatprep.subr.bf16.mxu0 0
        %935 = vmatpush1.bf16.msra.mxu0 0
        %936 = vmatprep.subr.bf16.mxu0 0
        %937 = vmatpush1.bf16.msra.mxu0 0
        %938 = vmatprep.subr.bf16.mxu0 0
        %939 = vmatpush1.bf16.msra.mxu0 0
        %940 = vmatprep.subr.bf16.mxu0 0
        %941 = vmatpush1.bf16.msra.mxu0 0
        %942 = vmatprep.subr.bf16.mxu0 0
        %943 = vmatpush1.bf16.msra.mxu0 0
        %944 = vmatprep.subr.bf16.mxu0 0
        %945 = vmatpush1.bf16.msra.mxu0 0
        %946 = vmatprep.subr.bf16.mxu0 0
        %947 = vmatpush1.bf16.msra.mxu0 0
        %948 = vmatprep.mubr.bf16.mxu0 0
        %949 = vmatmul.mubr.bf16.gmra.mrb[0].mxu0 %v810
        %v950 = vpop.f32.mrb[0].mxu0
        %v951 = vadd.f32 %v788, %v950
        %v952 = vpop.f32.mrb[0].mxu0
        %v953 = vpop.f32.mrb[0].mxu0
        %v954 = vpop.f32.mrb[0].mxu0
        %955 = vdwg.mxu0
        %v960 = vunpack.c.l.b16 %v496
        %v961 = vunpack.c.l.b16 %v497
        %v962 = vunpack.c.l.b16 %v498
        %v963 = vunpack.c.l.b16 %v499
        %v964 = vpack.c.b16 %v961, %v960
        %v965 = vpack.c.b16 %v963, %v962
        %968 = vmatprep.subr.bf16.mxu0 0
        %969 = vmatpush1.bf16.msra.mxu0 %v964
        %970 = vmatprep.subr.bf16.mxu0 0
        %971 = vmatpush1.bf16.msra.mxu0 %v965
        %972 = vmatprep.subr.bf16.mxu0 0
        %973 = vmatpush1.bf16.msra.mxu0 0
        %974 = vmatprep.subr.bf16.mxu0 0
        %975 = vmatpush1.bf16.msra.mxu0 0
        %976 = vmatprep.subr.bf16.mxu0 0
        %977 = vmatpush1.bf16.msra.mxu0 0
        %978 = vmatprep.subr.bf16.mxu0 0
        %979 = vmatpush1.bf16.msra.mxu0 0
        %980 = vmatprep.subr.bf16.mxu0 0
        %981 = vmatpush1.bf16.msra.mxu0 0
        %982 = vmatprep.subr.bf16.mxu0 0
        %983 = vmatpush1.bf16.msra.mxu0 0
        %984 = vmatprep.subr.bf16.mxu0 0
        %985 = vmatpush1.bf16.msra.mxu0 0
        %986 = vmatprep.subr.bf16.mxu0 0
        %987 = vmatpush1.bf16.msra.mxu0 0
        %988 = vmatprep.subr.bf16.mxu0 0
        %989 = vmatpush1.bf16.msra.mxu0 0
        %990 = vmatprep.subr.bf16.mxu0 0
        %991 = vmatpush1.bf16.msra.mxu0 0
        %992 = vmatprep.subr.bf16.mxu0 0
        %993 = vmatpush1.bf16.msra.mxu0 0
        %994 = vmatprep.subr.bf16.mxu0 0
        %995 = vmatpush1.bf16.msra.mxu0 0
        %996 = vmatprep.subr.bf16.mxu0 0
        %997 = vmatpush1.bf16.msra.mxu0 0
        %998 = vmatprep.subr.bf16.mxu0 0
        %999 = vmatpush1.bf16.msra.mxu0 0
        %1000 = vmatprep.mubr.bf16.mxu0 0
        %1001 = vmatmul.mubr.bf16.gmra.mrb[0].mxu0 %v810
        %v1002 = vpop.f32.mrb[0].mxu0
        %v1003 = vadd.f32 %v792, %v1002
        %v1004 = vpop.f32.mrb[0].mxu0
        %v1005 = vpop.f32.mrb[0].mxu0
        %v1006 = vpop.f32.mrb[0].mxu0
        %1007 = vdwg.mxu0
        %v1012 = vlaneseq
        %v1013 = vshrl.u32 %v1012, 7
        %v1014 = vsub.s32 0, %v1013
        %v1015 = vrot.slane %v524, %v1014
        %v1016 = vlaneseq
        %v1017 = vshrl.u32 %v1016, 7
        %v1018 = vsub.s32 0, %v1017
        %v1019 = vrot.slane %v525, %v1018
        %v1020 = vlaneseq
        %v1021 = vshrl.u32 %v1020, 7
        %v1022 = vsub.s32 0, %v1021
        %v1023 = vrot.slane %v526, %v1022
        %v1024 = vlaneseq
        %v1025 = vshrl.u32 %v1024, 7
        %v1026 = vsub.s32 0, %v1025
        %v1027 = vrot.slane %v527, %v1026
        %v1036 = vunpack.c.l.b16 %v500
        %v1037 = vunpack.c.l.b16 %v501
        %v1038 = vunpack.c.l.b16 %v502
        %v1039 = vunpack.c.l.b16 %v503
        %v1040 = vpack.c.b16 %v1037, %v1036
        %v1041 = vpack.c.b16 %v1039, %v1038
        %1044 = vmatprep.subr.bf16.mxu0 0
        %1045 = vmatpush1.bf16.msra.mxu0 %v1040
        %1046 = vmatprep.subr.bf16.mxu0 0
        %1047 = vmatpush1.bf16.msra.mxu0 %v1041
        %1048 = vmatprep.subr.bf16.mxu0 0
        %1049 = vmatpush1.bf16.msra.mxu0 0
        %1050 = vmatprep.subr.bf16.mxu0 0
        %1051 = vmatpush1.bf16.msra.mxu0 0
        %1052 = vmatprep.subr.bf16.mxu0 0
        %1053 = vmatpush1.bf16.msra.mxu0 0
        %1054 = vmatprep.subr.bf16.mxu0 0
        %1055 = vmatpush1.bf16.msra.mxu0 0
        %1056 = vmatprep.subr.bf16.mxu0 0
        %1057 = vmatpush1.bf16.msra.mxu0 0
        %1058 = vmatprep.subr.bf16.mxu0 0
        %1059 = vmatpush1.bf16.msra.mxu0 0
        %1060 = vmatprep.subr.bf16.mxu0 0
        %1061 = vmatpush1.bf16.msra.mxu0 0
        %1062 = vmatprep.subr.bf16.mxu0 0
        %1063 = vmatpush1.bf16.msra.mxu0 0
        %1064 = vmatprep.subr.bf16.mxu0 0
        %1065 = vmatpush1.bf16.msra.mxu0 0
        %1066 = vmatprep.subr.bf16.mxu0 0
        %1067 = vmatpush1.bf16.msra.mxu0 0
        %1068 = vmatprep.subr.bf16.mxu0 0
        %1069 = vmatpush1.bf16.msra.mxu0 0
        %1070 = vmatprep.subr.bf16.mxu0 0
        %1071 = vmatpush1.bf16.msra.mxu0 0
        %1072 = vmatprep.subr.bf16.mxu0 0
        %1073 = vmatpush1.bf16.msra.mxu0 0
        %1074 = vmatprep.subr.bf16.mxu0 0
        %1075 = vmatpush1.bf16.msra.mxu0 0
        %1076 = vmatprep.mubr.bf16.mxu0 0
        %1077 = vmatmul.mubr.bf16.gmra.mrb[0].mxu0 %v810
        %v1078 = vpop.f32.mrb[0].mxu0
        %v1079 = vadd.f32 %v1015, %v1078
        %v1080 = vpop.f32.mrb[0].mxu0
        %v1081 = vpop.f32.mrb[0].mxu0
        %v1082 = vpop.f32.mrb[0].mxu0
        %1083 = vdwg.mxu0
        %v1088 = vunpack.c.l.b16 %v504
        %v1089 = vunpack.c.l.b16 %v505
        %v1090 = vunpack.c.l.b16 %v506
        %v1091 = vunpack.c.l.b16 %v507
        %v1092 = vpack.c.b16 %v1089, %v1088
        %v1093 = vpack.c.b16 %v1091, %v1090
        %1096 = vmatprep.subr.bf16.mxu0 0
        %1097 = vmatpush1.bf16.msra.mxu0 %v1092
        %1098 = vmatprep.subr.bf16.mxu0 0
        %1099 = vmatpush1.bf16.msra.mxu0 %v1093
        %1100 = vmatprep.subr.bf16.mxu0 0
        %1101 = vmatpush1.bf16.msra.mxu0 0
        %1102 = vmatprep.subr.bf16.mxu0 0
        %1103 = vmatpush1.bf16.msra.mxu0 0
        %1104 = vmatprep.subr.bf16.mxu0 0
        %1105 = vmatpush1.bf16.msra.mxu0 0
        %1106 = vmatprep.subr.bf16.mxu0 0
        %1107 = vmatpush1.bf16.msra.mxu0 0
        %1108 = vmatprep.subr.bf16.mxu0 0
        %1109 = vmatpush1.bf16.msra.mxu0 0
        %1110 = vmatprep.subr.bf16.mxu0 0
        %1111 = vmatpush1.bf16.msra.mxu0 0
        %1112 = vmatprep.subr.bf16.mxu0 0
        %1113 = vmatpush1.bf16.msra.mxu0 0
        %1114 = vmatprep.subr.bf16.mxu0 0
        %1115 = vmatpush1.bf16.msra.mxu0 0
        %1116 = vmatprep.subr.bf16.mxu0 0
        %1117 = vmatpush1.bf16.msra.mxu0 0
        %1118 = vmatprep.subr.bf16.mxu0 0
        %1119 = vmatpush1.bf16.msra.mxu0 0
        %1120 = vmatprep.subr.bf16.mxu0 0
        %1121 = vmatpush1.bf16.msra.mxu0 0
        %1122 = vmatprep.subr.bf16.mxu0 0
        %1123 = vmatpush1.bf16.msra.mxu0 0
        %1124 = vmatprep.subr.bf16.mxu0 0
        %1125 = vmatpush1.bf16.msra.mxu0 0
        %1126 = vmatprep.subr.bf16.mxu0 0
        %1127 = vmatpush1.bf16.msra.mxu0 0
        %1128 = vmatprep.mubr.bf16.mxu0 0
        %1129 = vmatmul.mubr.bf16.gmra.mrb[0].mxu0 %v810
        %v1130 = vpop.f32.mrb[0].mxu0
        %v1131 = vadd.f32 %v1019, %v1130
        %v1132 = vpop.f32.mrb[0].mxu0
        %v1133 = vpop.f32.mrb[0].mxu0
        %v1134 = vpop.f32.mrb[0].mxu0
        %1135 = vdwg.mxu0
        %v1140 = vunpack.c.l.b16 %v508
        %v1141 = vunpack.c.l.b16 %v509
        %v1142 = vunpack.c.l.b16 %v510
        %v1143 = vunpack.c.l.b16 %v511
        %v1144 = vpack.c.b16 %v1141, %v1140
        %v1145 = vpack.c.b16 %v1143, %v1142
        %1148 = vmatprep.subr.bf16.mxu0 0
        %1149 = vmatpush1.bf16.msra.mxu0 %v1144
        %1150 = vmatprep.subr.bf16.mxu0 0
        %1151 = vmatpush1.bf16.msra.mxu0 %v1145
        %1152 = vmatprep.subr.bf16.mxu0 0
        %1153 = vmatpush1.bf16.msra.mxu0 0
        %1154 = vmatprep.subr.bf16.mxu0 0
        %1155 = vmatpush1.bf16.msra.mxu0 0
        %1156 = vmatprep.subr.bf16.mxu0 0
        %1157 = vmatpush1.bf16.msra.mxu0 0
        %1158 = vmatprep.subr.bf16.mxu0 0
        %1159 = vmatpush1.bf16.msra.mxu0 0
        %1160 = vmatprep.subr.bf16.mxu0 0
        %1161 = vmatpush1.bf16.msra.mxu0 0
        %1162 = vmatprep.subr.bf16.mxu0 0
        %1163 = vmatpush1.bf16.msra.mxu0 0
        %1164 = vmatprep.subr.bf16.mxu0 0
        %1165 = vmatpush1.bf16.msra.mxu0 0
        %1166 = vmatprep.subr.bf16.mxu0 0
        %1167 = vmatpush1.bf16.msra.mxu0 0
        %1168 = vmatprep.subr.bf16.mxu0 0
        %1169 = vmatpush1.bf16.msra.mxu0 0
        %1170 = vmatprep.subr.bf16.mxu0 0
        %1171 = vmatpush1.bf16.msra.mxu0 0
        %1172 = vmatprep.subr.bf16.mxu0 0
        %1173 = vmatpush1.bf16.msra.mxu0 0
        %1174 = vmatprep.subr.bf16.mxu0 0
        %1175 = vmatpush1.bf16.msra.mxu0 0
        %1176 = vmatprep.subr.bf16.mxu0 0
        %1177 = vmatpush1.bf16.msra.mxu0 0
        %1178 = vmatprep.subr.bf16.mxu0 0
        %1179 = vmatpush1.bf16.msra.mxu0 0
        %1180 = vmatprep.mubr.bf16.mxu0 0
        %1181 = vmatmul.mubr.bf16.gmra.mrb[0].mxu0 %v810
        %v1182 = vpop.f32.mrb[0].mxu0
        %v1183 = vadd.f32 %v1023, %v1182
        %v1184 = vpop.f32.mrb[0].mxu0
        %v1185 = vpop.f32.mrb[0].mxu0
        %v1186 = vpop.f32.mrb[0].mxu0
        %1187 = vdwg.mxu0
        %v1192 = vunpack.c.l.b16 %v512
        %v1193 = vunpack.c.l.b16 %v513
        %v1194 = vunpack.c.l.b16 %v514
        %v1195 = vunpack.c.l.b16 %v515
        %v1196 = vpack.c.b16 %v1193, %v1192
        %v1197 = vpack.c.b16 %v1195, %v1194
        %1200 = vmatprep.subr.bf16.mxu0 0
        %1201 = vmatpush1.bf16.msra.mxu0 %v1196
        %1202 = vmatprep.subr.bf16.mxu0 0
        %1203 = vmatpush1.bf16.msra.mxu0 %v1197
        %1204 = vmatprep.subr.bf16.mxu0 0
        %1205 = vmatpush1.bf16.msra.mxu0 0
        %1206 = vmatprep.subr.bf16.mxu0 0
        %1207 = vmatpush1.bf16.msra.mxu0 0
        %1208 = vmatprep.subr.bf16.mxu0 0
        %1209 = vmatpush1.bf16.msra.mxu0 0
        %1210 = vmatprep.subr.bf16.mxu0 0
        %1211 = vmatpush1.bf16.msra.mxu0 0
        %1212 = vmatprep.subr.bf16.mxu0 0
        %1213 = vmatpush1.bf16.msra.mxu0 0
        %1214 = vmatprep.subr.bf16.mxu0 0
        %1215 = vmatpush1.bf16.msra.mxu0 0
        %1216 = vmatprep.subr.bf16.mxu0 0
        %1217 = vmatpush1.bf16.msra.mxu0 0
        %1218 = vmatprep.subr.bf16.mxu0 0
        %1219 = vmatpush1.bf16.msra.mxu0 0
        %1220 = vmatprep.subr.bf16.mxu0 0
        %1221 = vmatpush1.bf16.msra.mxu0 0
        %1222 = vmatprep.subr.bf16.mxu0 0
        %1223 = vmatpush1.bf16.msra.mxu0 0
        %1224 = vmatprep.subr.bf16.mxu0 0
        %1225 = vmatpush1.bf16.msra.mxu0 0
        %1226 = vmatprep.subr.bf16.mxu0 0
        %1227 = vmatpush1.bf16.msra.mxu0 0
        %1228 = vmatprep.subr.bf16.mxu0 0
        %1229 = vmatpush1.bf16.msra.mxu0 0
        %1230 = vmatprep.subr.bf16.mxu0 0
        %1231 = vmatpush1.bf16.msra.mxu0 0
        %1232 = vmatprep.mubr.bf16.mxu0 0
        %1233 = vmatmul.mubr.bf16.gmra.mrb[0].mxu0 %v810
        %v1234 = vpop.f32.mrb[0].mxu0
        %v1235 = vadd.f32 %v1027, %v1234
        %v1236 = vpop.f32.mrb[0].mxu0
        %v1237 = vpop.f32.mrb[0].mxu0
        %v1238 = vpop.f32.mrb[0].mxu0
        %1239 = vdwg.mxu0
        %v1240 = vpack.c.bf16 %v612, %v612
        %v1241 = vpack.c.bf16 %v664, %v664
        %v1242 = vpack.c.bf16 %v716, %v716
        %v1243 = vpack.c.bf16 %v768, %v768
        %v1244 = vpack.c.bf16 %v847, %v847
        %v1245 = vpack.c.bf16 %v899, %v899
        %v1246 = vpack.c.bf16 %v951, %v951
        %v1247 = vpack.c.bf16 %v1003, %v1003
        %vm1248 = vcmask 64512
        %v1250 = vsel %vm1248, %v1240, 0
        %v1253 = vsel %vm1248, %v1244, 0
        %1255 = vmatprep.subr.bf16.mxu0 0
        %1256 = vmatpush1.bf16.xpose.msra.mxu0 %v1253
        %1257 = vmatprep.subr.bf16.mxu0 0
        %1258 = vmatpush1.bf16.xpose.msra.mxu0 0
        %1259 = vmatprep.subr.bf16.mxu0 0
        %1260 = vmatpush1.bf16.xpose.msra.mxu0 0
        %1261 = vmatprep.subr.bf16.mxu0 0
        %1262 = vmatpush1.bf16.xpose.msra.mxu0 0
        %1263 = vmatprep.subr.bf16.mxu0 0
        %1264 = vmatpush1.bf16.xpose.msra.mxu0 0
        %1265 = vmatprep.subr.bf16.mxu0 0
        %1266 = vmatpush1.bf16.xpose.msra.mxu0 0
        %1267 = vmatprep.subr.bf16.mxu0 0
        %1268 = vmatpush1.bf16.xpose.msra.mxu0 0
        %1269 = vmatprep.subr.bf16.mxu0 0
        %1270 = vmatpush1.bf16.xpose.msra.mxu0 0
        %1271 = vmatprep.subr.bf16.mxu0 0
        %1272 = vmatpush1.bf16.xpose.msra.mxu0 0
        %1273 = vmatprep.subr.bf16.mxu0 0
        %1274 = vmatpush1.bf16.xpose.msra.mxu0 0
        %1275 = vmatprep.subr.bf16.mxu0 0
        %1276 = vmatpush1.bf16.xpose.msra.mxu0 0
        %1277 = vmatprep.subr.bf16.mxu0 0
        %1278 = vmatpush1.bf16.xpose.msra.mxu0 0
        %1279 = vmatprep.subr.bf16.mxu0 0
        %1280 = vmatpush1.bf16.xpose.msra.mxu0 0
        %1281 = vmatprep.subr.bf16.mxu0 0
        %1282 = vmatpush1.bf16.xpose.msra.mxu0 0
        %1283 = vmatprep.subr.bf16.mxu0 0
        %1284 = vmatpush1.bf16.xpose.msra.mxu0 0
        %1285 = vmatprep.subr.bf16.mxu0 0
        %1286 = vmatpush1.bf16.xpose.msra.mxu0 0
        %1287 = vmatprep.mubr.bf16.mxu0 0
        %1288 = vmatmul.mubr.bf16.gmra.mrb[0].mxu0 %v1250
        %v1289 = vpop.f32.mrb[0].mxu0
        %v1290 = vadd.f32 0.0, %v1289
        %v1291 = vpop.f32.mrb[0].mxu0
        %v1292 = vpop.f32.mrb[0].mxu0
        %v1293 = vpop.f32.mrb[0].mxu0
        %1294 = vdwg.mxu0
        %v1296 = vsel %vm1248, %v1241, 0
        %v1299 = vsel %vm1248, %v1245, 0
        %1301 = vmatprep.subr.bf16.mxu0 0
        %1302 = vmatpush1.bf16.xpose.msra.mxu0 %v1299
        %1303 = vmatprep.subr.bf16.mxu0 0
        %1304 = vmatpush1.bf16.xpose.msra.mxu0 0
        %1305 = vmatprep.subr.bf16.mxu0 0
        %1306 = vmatpush1.bf16.xpose.msra.mxu0 0
        %1307 = vmatprep.subr.bf16.mxu0 0
        %1308 = vmatpush1.bf16.xpose.msra.mxu0 0
        %1309 = vmatprep.subr.bf16.mxu0 0
        %1310 = vmatpush1.bf16.xpose.msra.mxu0 0
        %1311 = vmatprep.subr.bf16.mxu0 0
        %1312 = vmatpush1.bf16.xpose.msra.mxu0 0
        %1313 = vmatprep.subr.bf16.mxu0 0
        %1314 = vmatpush1.bf16.xpose.msra.mxu0 0
        %1315 = vmatprep.subr.bf16.mxu0 0
        %1316 = vmatpush1.bf16.xpose.msra.mxu0 0
        %1317 = vmatprep.subr.bf16.mxu0 0
        %1318 = vmatpush1.bf16.xpose.msra.mxu0 0
        %1319 = vmatprep.subr.bf16.mxu0 0
        %1320 = vmatpush1.bf16.xpose.msra.mxu0 0
        %1321 = vmatprep.subr.bf16.mxu0 0
        %1322 = vmatpush1.bf16.xpose.msra.mxu0 0
        %1323 = vmatprep.subr.bf16.mxu0 0
        %1324 = vmatpush1.bf16.xpose.msra.mxu0 0
        %1325 = vmatprep.subr.bf16.mxu0 0
        %1326 = vmatpush1.bf16.xpose.msra.mxu0 0
        %1327 = vmatprep.subr.bf16.mxu0 0
        %1328 = vmatpush1.bf16.xpose.msra.mxu0 0
        %1329 = vmatprep.subr.bf16.mxu0 0
        %1330 = vmatpush1.bf16.xpose.msra.mxu0 0
        %1331 = vmatprep.subr.bf16.mxu0 0
        %1332 = vmatpush1.bf16.xpose.msra.mxu0 0
        %1333 = vmatprep.mubr.bf16.mxu0 0
        %1334 = vmatmul.mubr.bf16.gmra.mrb[0].mxu0 %v1296
        %v1335 = vpop.f32.mrb[0].mxu0
        %v1336 = vadd.f32 0.0, %v1335
        %v1337 = vpop.f32.mrb[0].mxu0
        %v1338 = vpop.f32.mrb[0].mxu0
        %v1339 = vpop.f32.mrb[0].mxu0
        %1340 = vdwg.mxu0
        %v1342 = vsel %vm1248, %v1242, 0
        %v1345 = vsel %vm1248, %v1246, 0
        %1347 = vmatprep.subr.bf16.mxu0 0
        %1348 = vmatpush1.bf16.xpose.msra.mxu0 %v1345
        %1349 = vmatprep.subr.bf16.mxu0 0
        %1350 = vmatpush1.bf16.xpose.msra.mxu0 0
        %1351 = vmatprep.subr.bf16.mxu0 0
        %1352 = vmatpush1.bf16.xpose.msra.mxu0 0
        %1353 = vmatprep.subr.bf16.mxu0 0
        %1354 = vmatpush1.bf16.xpose.msra.mxu0 0
        %1355 = vmatprep.subr.bf16.mxu0 0
        %1356 = vmatpush1.bf16.xpose.msra.mxu0 0
        %1357 = vmatprep.subr.bf16.mxu0 0
        %1358 = vmatpush1.bf16.xpose.msra.mxu0 0
        %1359 = vmatprep.subr.bf16.mxu0 0
        %1360 = vmatpush1.bf16.xpose.msra.mxu0 0
        %1361 = vmatprep.subr.bf16.mxu0 0
        %1362 = vmatpush1.bf16.xpose.msra.mxu0 0
        %1363 = vmatprep.subr.bf16.mxu0 0
        %1364 = vmatpush1.bf16.xpose.msra.mxu0 0
        %1365 = vmatprep.subr.bf16.mxu0 0
        %1366 = vmatpush1.bf16.xpose.msra.mxu0 0
        %1367 = vmatprep.subr.bf16.mxu0 0
        %1368 = vmatpush1.bf16.xpose.msra.mxu0 0
        %1369 = vmatprep.subr.bf16.mxu0 0
        %1370 = vmatpush1.bf16.xpose.msra.mxu0 0
        %1371 = vmatprep.subr.bf16.mxu0 0
        %1372 = vmatpush1.bf16.xpose.msra.mxu0 0
        %1373 = vmatprep.subr.bf16.mxu0 0
        %1374 = vmatpush1.bf16.xpose.msra.mxu0 0
        %1375 = vmatprep.subr.bf16.mxu0 0
        %1376 = vmatpush1.bf16.xpose.msra.mxu0 0
        %1377 = vmatprep.subr.bf16.mxu0 0
        %1378 = vmatpush1.bf16.xpose.msra.mxu0 0
        %1379 = vmatprep.mubr.bf16.mxu0 0
        %1380 = vmatmul.mubr.bf16.gmra.mrb[0].mxu0 %v1342
        %v1381 = vpop.f32.mrb[0].mxu0
        %v1382 = vadd.f32 0.0, %v1381
        %v1383 = vpop.f32.mrb[0].mxu0
        %v1384 = vpop.f32.mrb[0].mxu0
        %v1385 = vpop.f32.mrb[0].mxu0
        %1386 = vdwg.mxu0
        %v1388 = vsel %vm1248, %v1243, 0
        %v1391 = vsel %vm1248, %v1247, 0
        %1393 = vmatprep.subr.bf16.mxu0 0
        %1394 = vmatpush1.bf16.xpose.msra.mxu0 %v1391
        %1395 = vmatprep.subr.bf16.mxu0 0
        %1396 = vmatpush1.bf16.xpose.msra.mxu0 0
        %1397 = vmatprep.subr.bf16.mxu0 0
        %1398 = vmatpush1.bf16.xpose.msra.mxu0 0
        %1399 = vmatprep.subr.bf16.mxu0 0
        %1400 = vmatpush1.bf16.xpose.msra.mxu0 0
        %1401 = vmatprep.subr.bf16.mxu0 0
        %1402 = vmatpush1.bf16.xpose.msra.mxu0 0
        %1403 = vmatprep.subr.bf16.mxu0 0
        %1404 = vmatpush1.bf16.xpose.msra.mxu0 0
        %1405 = vmatprep.subr.bf16.mxu0 0
        %1406 = vmatpush1.bf16.xpose.msra.mxu0 0
        %1407 = vmatprep.subr.bf16.mxu0 0
        %1408 = vmatpush1.bf16.xpose.msra.mxu0 0
        %1409 = vmatprep.subr.bf16.mxu0 0
        %1410 = vmatpush1.bf16.xpose.msra.mxu0 0
        %1411 = vmatprep.subr.bf16.mxu0 0
        %1412 = vmatpush1.bf16.xpose.msra.mxu0 0
        %1413 = vmatprep.subr.bf16.mxu0 0
        %1414 = vmatpush1.bf16.xpose.msra.mxu0 0
        %1415 = vmatprep.subr.bf16.mxu0 0
        %1416 = vmatpush1.bf16.xpose.msra.mxu0 0
        %1417 = vmatprep.subr.bf16.mxu0 0
        %1418 = vmatpush1.bf16.xpose.msra.mxu0 0
        %1419 = vmatprep.subr.bf16.mxu0 0
        %1420 = vmatpush1.bf16.xpose.msra.mxu0 0
        %1421 = vmatprep.subr.bf16.mxu0 0
        %1422 = vmatpush1.bf16.xpose.msra.mxu0 0
        %1423 = vmatprep.subr.bf16.mxu0 0
        %1424 = vmatpush1.bf16.xpose.msra.mxu0 0
        %1425 = vmatprep.mubr.bf16.mxu0 0
        %1426 = vmatmul.mubr.bf16.gmra.mrb[0].mxu0 %v1388
        %v1427 = vpop.f32.mrb[0].mxu0
        %v1428 = vadd.f32 0.0, %v1427
        %v1429 = vpop.f32.mrb[0].mxu0
        %v1430 = vpop.f32.mrb[0].mxu0
        %v1431 = vpop.f32.mrb[0].mxu0
        %1432 = vdwg.mxu0
        %v1433 = vsel %vm1248, %v1290, -inf
        %1434 = vmax.xlane.f32.xlu0 %v1433
        %v1435 = vpop.xlane.xlu0 %1434
        %v1436 = vsel %vm1248, %v1336, -inf
        %1437 = vmax.xlane.f32.xlu0 %v1436
        %v1438 = vpop.xlane.xlu0 %1437
        %v1439 = vsel %vm1248, %v1382, -inf
        %1440 = vmax.xlane.f32.xlu0 %v1439
        %v1441 = vpop.xlane.xlu0 %1440
        %v1442 = vsel %vm1248, %v1428, -inf
        %1443 = vmax.xlane.f32.xlu0 %v1442
        %v1444 = vpop.xlane.xlu0 %1443
        %v1445 = vsub.f32 %v1290, %v1435
        %v1446 = vsub.f32 %v1336, %v1438
        %v1447 = vsub.f32 %v1382, %v1441
        %v1448 = vsub.f32 %v1428, %v1444
        %v1449 = vmul.f32 %v1445, 1.442695
        %v1450 = vpow.pop %v1449
        %v1451 = vmul.f32 %v1446, 1.442695
        %v1452 = vpow.pop %v1451
        %v1453 = vmul.f32 %v1447, 1.442695
        %v1454 = vpow.pop %v1453
        %v1455 = vmul.f32 %v1448, 1.442695
        %v1456 = vpow.pop %v1455
        %v1457 = vsel %vm1248, %v1450, 0.0
        %1458 = vadd.xlane.f32.xlu0 %v1457
        %v1459 = vpop.xlane.xlu0 %1458
        %v1460 = vsel %vm1248, %v1452, 0.0
        %1461 = vadd.xlane.f32.xlu0 %v1460
        %v1462 = vpop.xlane.xlu0 %1461
        %v1463 = vsel %vm1248, %v1454, 0.0
        %1464 = vadd.xlane.f32.xlu0 %v1463
        %v1465 = vpop.xlane.xlu0 %1464
        %v1466 = vsel %vm1248, %v1456, 0.0
        %1467 = vadd.xlane.f32.xlu0 %v1466
        %v1468 = vpop.xlane.xlu0 %1467
        %v1469 = vrcp.pop %v1459
        %v1470 = vrcp.pop %v1462
        %v1471 = vrcp.pop %v1465
        %v1472 = vrcp.pop %v1468
        %v1473 = vmul.f32 %v1450, %v1469
        %v1474 = vmul.f32 %v1452, %v1470
        %v1475 = vmul.f32 %v1454, %v1471
        %v1476 = vmul.f32 %v1456, %v1472
        %1477 = vst.msk [vmem:[%s451] sm:$0xff] %vm1248, %v1473
        %1478 = vst.msk [vmem:[%s451 + $0x8] sm:$0xff] %vm1248, %v1474
        %1479 = vst.msk [vmem:[%s451 + $0x10] sm:$0xff] %vm1248, %v1475
        %1480 = vst.msk [vmem:[%s451 + $0x18] sm:$0xff] %vm1248, %v1476
        %v1481 = vpack.c.bf16 %v1473, %v1473
        %v1482 = vpack.c.bf16 %v1474, %v1474
        %v1483 = vpack.c.bf16 %v1475, %v1475
        %v1484 = vpack.c.bf16 %v1476, %v1476
        %v1485 = vpack.c.bf16 %v1079, %v1079
        %v1486 = vpack.c.bf16 %v1131, %v1131
        %v1487 = vpack.c.bf16 %v1183, %v1183
        %v1488 = vpack.c.bf16 %v1235, %v1235
        %v1490 = vsel %vm1248, %v1481, 0
        %vm1492 = vcmask 1043456
        %v1494 = vsel %vm1492, %v1485, 0
        %1496 = vmatprep.subr.bf16.mxu0 0
        %1497 = vmatpush1.bf16.msra.mxu0 %v1494
        %1498 = vmatprep.subr.bf16.mxu0 0
        %1499 = vmatpush1.bf16.msra.mxu0 0
        %1500 = vmatprep.subr.bf16.mxu0 0
        %1501 = vmatpush1.bf16.msra.mxu0 0
        %1502 = vmatprep.subr.bf16.mxu0 0
        %1503 = vmatpush1.bf16.msra.mxu0 0
        %1504 = vmatprep.subr.bf16.mxu0 0
        %1505 = vmatpush1.bf16.msra.mxu0 0
        %1506 = vmatprep.subr.bf16.mxu0 0
        %1507 = vmatpush1.bf16.msra.mxu0 0
        %1508 = vmatprep.subr.bf16.mxu0 0
        %1509 = vmatpush1.bf16.msra.mxu0 0
        %1510 = vmatprep.subr.bf16.mxu0 0
        %1511 = vmatpush1.bf16.msra.mxu0 0
        %1512 = vmatprep.subr.bf16.mxu0 0
        %1513 = vmatpush1.bf16.msra.mxu0 0
        %1514 = vmatprep.subr.bf16.mxu0 0
        %1515 = vmatpush1.bf16.msra.mxu0 0
        %1516 = vmatprep.subr.bf16.mxu0 0
        %1517 = vmatpush1.bf16.msra.mxu0 0
        %1518 = vmatprep.subr.bf16.mxu0 0
        %1519 = vmatpush1.bf16.msra.mxu0 0
        %1520 = vmatprep.subr.bf16.mxu0 0
        %1521 = vmatpush1.bf16.msra.mxu0 0
        %1522 = vmatprep.subr.bf16.mxu0 0
        %1523 = vmatpush1.bf16.msra.mxu0 0
        %1524 = vmatprep.subr.bf16.mxu0 0
        %1525 = vmatpush1.bf16.msra.mxu0 0
        %1526 = vmatprep.subr.bf16.mxu0 0
        %1527 = vmatpush1.bf16.msra.mxu0 0
        %1528 = vmatprep.mubr.bf16.mxu0 0
        %1529 = vmatmul.mubr.bf16.gmra.mrb[0].mxu0 %v1490
        %v1530 = vpop.f32.mrb[0].mxu0
        %v1531 = vadd.f32 0.0, %v1530
        %v1532 = vpop.f32.mrb[0].mxu0
        %v1533 = vpop.f32.mrb[0].mxu0
        %v1534 = vpop.f32.mrb[0].mxu0
        %1535 = vdwg.mxu0
        %v1537 = vsel %vm1248, %v1482, 0
        %v1540 = vsel %vm1492, %v1486, 0
        %1542 = vmatprep.subr.bf16.mxu0 0
        %1543 = vmatpush1.bf16.msra.mxu0 %v1540
        %1544 = vmatprep.subr.bf16.mxu0 0
        %1545 = vmatpush1.bf16.msra.mxu0 0
        %1546 = vmatprep.subr.bf16.mxu0 0
        %1547 = vmatpush1.bf16.msra.mxu0 0
        %1548 = vmatprep.subr.bf16.mxu0 0
        %1549 = vmatpush1.bf16.msra.mxu0 0
        %1550 = vmatprep.subr.bf16.mxu0 0
        %1551 = vmatpush1.bf16.msra.mxu0 0
        %1552 = vmatprep.subr.bf16.mxu0 0
        %1553 = vmatpush1.bf16.msra.mxu0 0
        %1554 = vmatprep.subr.bf16.mxu0 0
        %1555 = vmatpush1.bf16.msra.mxu0 0
        %1556 = vmatprep.subr.bf16.mxu0 0
        %1557 = vmatpush1.bf16.msra.mxu0 0
        %1558 = vmatprep.subr.bf16.mxu0 0
        %1559 = vmatpush1.bf16.msra.mxu0 0
        %1560 = vmatprep.subr.bf16.mxu0 0
        %1561 = vmatpush1.bf16.msra.mxu0 0
        %1562 = vmatprep.subr.bf16.mxu0 0
        %1563 = vmatpush1.bf16.msra.mxu0 0
        %1564 = vmatprep.subr.bf16.mxu0 0
        %1565 = vmatpush1.bf16.msra.mxu0 0
        %1566 = vmatprep.subr.bf16.mxu0 0
        %1567 = vmatpush1.bf16.msra.mxu0 0
        %1568 = vmatprep.subr.bf16.mxu0 0
        %1569 = vmatpush1.bf16.msra.mxu0 0
        %1570 = vmatprep.subr.bf16.mxu0 0
        %1571 = vmatpush1.bf16.msra.mxu0 0
        %1572 = vmatprep.subr.bf16.mxu0 0
        %1573 = vmatpush1.bf16.msra.mxu0 0
        %1574 = vmatprep.mubr.bf16.mxu0 0
        %1575 = vmatmul.mubr.bf16.gmra.mrb[0].mxu0 %v1537
        %v1576 = vpop.f32.mrb[0].mxu0
        %v1577 = vadd.f32 0.0, %v1576
        %v1578 = vpop.f32.mrb[0].mxu0
        %v1579 = vpop.f32.mrb[0].mxu0
        %v1580 = vpop.f32.mrb[0].mxu0
        %1581 = vdwg.mxu0
        %v1583 = vsel %vm1248, %v1483, 0
        %v1586 = vsel %vm1492, %v1487, 0
        %1588 = vmatprep.subr.bf16.mxu0 0
        %1589 = vmatpush1.bf16.msra.mxu0 %v1586
        %1590 = vmatprep.subr.bf16.mxu0 0
        %1591 = vmatpush1.bf16.msra.mxu0 0
        %1592 = vmatprep.subr.bf16.mxu0 0
        %1593 = vmatpush1.bf16.msra.mxu0 0
        %1594 = vmatprep.subr.bf16.mxu0 0
        %1595 = vmatpush1.bf16.msra.mxu0 0
        %1596 = vmatprep.subr.bf16.mxu0 0
        %1597 = vmatpush1.bf16.msra.mxu0 0
        %1598 = vmatprep.subr.bf16.mxu0 0
        %1599 = vmatpush1.bf16.msra.mxu0 0
        %1600 = vmatprep.subr.bf16.mxu0 0
        %1601 = vmatpush1.bf16.msra.mxu0 0
        %1602 = vmatprep.subr.bf16.mxu0 0
        %1603 = vmatpush1.bf16.msra.mxu0 0
        %1604 = vmatprep.subr.bf16.mxu0 0
        %1605 = vmatpush1.bf16.msra.mxu0 0
        %1606 = vmatprep.subr.bf16.mxu0 0
        %1607 = vmatpush1.bf16.msra.mxu0 0
        %1608 = vmatprep.subr.bf16.mxu0 0
        %1609 = vmatpush1.bf16.msra.mxu0 0
        %1610 = vmatprep.subr.bf16.mxu0 0
        %1611 = vmatpush1.bf16.msra.mxu0 0
        %1612 = vmatprep.subr.bf16.mxu0 0
        %1613 = vmatpush1.bf16.msra.mxu0 0
        %1614 = vmatprep.subr.bf16.mxu0 0
        %1615 = vmatpush1.bf16.msra.mxu0 0
        %1616 = vmatprep.subr.bf16.mxu0 0
        %1617 = vmatpush1.bf16.msra.mxu0 0
        %1618 = vmatprep.subr.bf16.mxu0 0
        %1619 = vmatpush1.bf16.msra.mxu0 0
        %1620 = vmatprep.mubr.bf16.mxu0 0
        %1621 = vmatmul.mubr.bf16.gmra.mrb[0].mxu0 %v1583
        %v1622 = vpop.f32.mrb[0].mxu0
        %v1623 = vadd.f32 0.0, %v1622
        %v1624 = vpop.f32.mrb[0].mxu0
        %v1625 = vpop.f32.mrb[0].mxu0
        %v1626 = vpop.f32.mrb[0].mxu0
        %1627 = vdwg.mxu0
        %v1629 = vsel %vm1248, %v1484, 0
        %v1632 = vsel %vm1492, %v1488, 0
        %1634 = vmatprep.subr.bf16.mxu0 0
        %1635 = vmatpush1.bf16.msra.mxu0 %v1632
        %1636 = vmatprep.subr.bf16.mxu0 0
        %1637 = vmatpush1.bf16.msra.mxu0 0
        %1638 = vmatprep.subr.bf16.mxu0 0
        %1639 = vmatpush1.bf16.msra.mxu0 0
        %1640 = vmatprep.subr.bf16.mxu0 0
        %1641 = vmatpush1.bf16.msra.mxu0 0
        %1642 = vmatprep.subr.bf16.mxu0 0
        %1643 = vmatpush1.bf16.msra.mxu0 0
        %1644 = vmatprep.subr.bf16.mxu0 0
        %1645 = vmatpush1.bf16.msra.mxu0 0
        %1646 = vmatprep.subr.bf16.mxu0 0
        %1647 = vmatpush1.bf16.msra.mxu0 0
        %1648 = vmatprep.subr.bf16.mxu0 0
        %1649 = vmatpush1.bf16.msra.mxu0 0
        %1650 = vmatprep.subr.bf16.mxu0 0
        %1651 = vmatpush1.bf16.msra.mxu0 0
        %1652 = vmatprep.subr.bf16.mxu0 0
        %1653 = vmatpush1.bf16.msra.mxu0 0
        %1654 = vmatprep.subr.bf16.mxu0 0
        %1655 = vmatpush1.bf16.msra.mxu0 0
        %1656 = vmatprep.subr.bf16.mxu0 0
        %1657 = vmatpush1.bf16.msra.mxu0 0
        %1658 = vmatprep.subr.bf16.mxu0 0
        %1659 = vmatpush1.bf16.msra.mxu0 0
        %1660 = vmatprep.subr.bf16.mxu0 0
        %1661 = vmatpush1.bf16.msra.mxu0 0
        %1662 = vmatprep.subr.bf16.mxu0 0
        %1663 = vmatpush1.bf16.msra.mxu0 0
        %1664 = vmatprep.subr.bf16.mxu0 0
        %1665 = vmatpush1.bf16.msra.mxu0 0
        %1666 = vmatprep.mubr.bf16.mxu0 0
        %1667 = vmatmul.mubr.bf16.gmra.mrb[0].mxu0 %v1629
        %v1668 = vpop.f32.mrb[0].mxu0
        %v1669 = vadd.f32 0.0, %v1668
        %v1670 = vpop.f32.mrb[0].mxu0
        %v1671 = vpop.f32.mrb[0].mxu0
        %v1672 = vpop.f32.mrb[0].mxu0
        %1673 = vdwg.mxu0
        %v1674 = vpack.c.bf16 %v1531, %v1531
        %v1676 = vsel %vm1248, %v1674, 0
        %v1679 = vsel %vm1492, %v528, 0
        %1681 = vmatprep.subr.bf16.mxu0 0
        %1682 = vmatpush1.bf16.msra.mxu0 %v1679
        %1683 = vmatprep.subr.bf16.mxu0 0
        %1684 = vmatpush1.bf16.msra.mxu0 0
        %1685 = vmatprep.subr.bf16.mxu0 0
        %1686 = vmatpush1.bf16.msra.mxu0 0
        %1687 = vmatprep.subr.bf16.mxu0 0
        %1688 = vmatpush1.bf16.msra.mxu0 0
        %1689 = vmatprep.subr.bf16.mxu0 0
        %1690 = vmatpush1.bf16.msra.mxu0 0
        %1691 = vmatprep.subr.bf16.mxu0 0
        %1692 = vmatpush1.bf16.msra.mxu0 0
        %1693 = vmatprep.subr.bf16.mxu0 0
        %1694 = vmatpush1.bf16.msra.mxu0 0
        %1695 = vmatprep.subr.bf16.mxu0 0
        %1696 = vmatpush1.bf16.msra.mxu0 0
        %1697 = vmatprep.subr.bf16.mxu0 0
        %1698 = vmatpush1.bf16.msra.mxu0 0
        %1699 = vmatprep.subr.bf16.mxu0 0
        %1700 = vmatpush1.bf16.msra.mxu0 0
        %1701 = vmatprep.subr.bf16.mxu0 0
        %1702 = vmatpush1.bf16.msra.mxu0 0
        %1703 = vmatprep.subr.bf16.mxu0 0
        %1704 = vmatpush1.bf16.msra.mxu0 0
        %1705 = vmatprep.subr.bf16.mxu0 0
        %1706 = vmatpush1.bf16.msra.mxu0 0
        %1707 = vmatprep.subr.bf16.mxu0 0
        %1708 = vmatpush1.bf16.msra.mxu0 0
        %1709 = vmatprep.subr.bf16.mxu0 0
        %1710 = vmatpush1.bf16.msra.mxu0 0
        %1711 = vmatprep.subr.bf16.mxu0 0
        %1712 = vmatpush1.bf16.msra.mxu0 0
        %1713 = vmatprep.mubr.bf16.mxu0 0
        %1714 = vmatmul.mubr.bf16.gmra.mrb[0].mxu0 %v1676
        %v1715 = vpop.f32.mrb[0].mxu0
        %v1716 = vadd.f32 0.0, %v1715
        %v1717 = vpop.f32.mrb[0].mxu0
        %v1718 = vpop.f32.mrb[0].mxu0
        %v1719 = vpop.f32.mrb[0].mxu0
        %1720 = vdwg.mxu0
        %v1722 = vlaneseq
        %v1723 = vshrl.u32 %v1722, 7
        %v1724 = vsub.s32 0, %v1723
        %v1725 = vrot.slane %v532, %v1724
        %v1727 = vadd.f32 %v1725, %v1716
        %v1728 = vpack.c.bf16 %v1577, %v1577
        %v1730 = vsel %vm1248, %v1728, 0
        %v1733 = vsel %vm1492, %v529, 0
        %1735 = vmatprep.subr.bf16.mxu0 0
        %1736 = vmatpush1.bf16.msra.mxu0 %v1733
        %1737 = vmatprep.subr.bf16.mxu0 0
        %1738 = vmatpush1.bf16.msra.mxu0 0
        %1739 = vmatprep.subr.bf16.mxu0 0
        %1740 = vmatpush1.bf16.msra.mxu0 0
        %1741 = vmatprep.subr.bf16.mxu0 0
        %1742 = vmatpush1.bf16.msra.mxu0 0
        %1743 = vmatprep.subr.bf16.mxu0 0
        %1744 = vmatpush1.bf16.msra.mxu0 0
        %1745 = vmatprep.subr.bf16.mxu0 0
        %1746 = vmatpush1.bf16.msra.mxu0 0
        %1747 = vmatprep.subr.bf16.mxu0 0
        %1748 = vmatpush1.bf16.msra.mxu0 0
        %1749 = vmatprep.subr.bf16.mxu0 0
        %1750 = vmatpush1.bf16.msra.mxu0 0
        %1751 = vmatprep.subr.bf16.mxu0 0
        %1752 = vmatpush1.bf16.msra.mxu0 0
        %1753 = vmatprep.subr.bf16.mxu0 0
        %1754 = vmatpush1.bf16.msra.mxu0 0
        %1755 = vmatprep.subr.bf16.mxu0 0
        %1756 = vmatpush1.bf16.msra.mxu0 0
        %1757 = vmatprep.subr.bf16.mxu0 0
        %1758 = vmatpush1.bf16.msra.mxu0 0
        %1759 = vmatprep.subr.bf16.mxu0 0
        %1760 = vmatpush1.bf16.msra.mxu0 0
        %1761 = vmatprep.subr.bf16.mxu0 0
        %1762 = vmatpush1.bf16.msra.mxu0 0
        %1763 = vmatprep.subr.bf16.mxu0 0
        %1764 = vmatpush1.bf16.msra.mxu0 0
        %1765 = vmatprep.subr.bf16.mxu0 0
        %1766 = vmatpush1.bf16.msra.mxu0 0
        %1767 = vmatprep.mubr.bf16.mxu0 0
        %1768 = vmatmul.mubr.bf16.gmra.mrb[0].mxu0 %v1730
        %v1769 = vpop.f32.mrb[0].mxu0
        %v1770 = vadd.f32 0.0, %v1769
        %v1771 = vpop.f32.mrb[0].mxu0
        %v1772 = vpop.f32.mrb[0].mxu0
        %v1773 = vpop.f32.mrb[0].mxu0
        %1774 = vdwg.mxu0
        %v1775 = vadd.f32 %v1727, %v1770
        %v1776 = vpack.c.bf16 %v1623, %v1623
        %v1778 = vsel %vm1248, %v1776, 0
        %v1781 = vsel %vm1492, %v530, 0
        %1783 = vmatprep.subr.bf16.mxu0 0
        %1784 = vmatpush1.bf16.msra.mxu0 %v1781
        %1785 = vmatprep.subr.bf16.mxu0 0
        %1786 = vmatpush1.bf16.msra.mxu0 0
        %1787 = vmatprep.subr.bf16.mxu0 0
        %1788 = vmatpush1.bf16.msra.mxu0 0
        %1789 = vmatprep.subr.bf16.mxu0 0
        %1790 = vmatpush1.bf16.msra.mxu0 0
        %1791 = vmatprep.subr.bf16.mxu0 0
        %1792 = vmatpush1.bf16.msra.mxu0 0
        %1793 = vmatprep.subr.bf16.mxu0 0
        %1794 = vmatpush1.bf16.msra.mxu0 0
        %1795 = vmatprep.subr.bf16.mxu0 0
        %1796 = vmatpush1.bf16.msra.mxu0 0
        %1797 = vmatprep.subr.bf16.mxu0 0
        %1798 = vmatpush1.bf16.msra.mxu0 0
        %1799 = vmatprep.subr.bf16.mxu0 0
        %1800 = vmatpush1.bf16.msra.mxu0 0
        %1801 = vmatprep.subr.bf16.mxu0 0
        %1802 = vmatpush1.bf16.msra.mxu0 0
        %1803 = vmatprep.subr.bf16.mxu0 0
        %1804 = vmatpush1.bf16.msra.mxu0 0
        %1805 = vmatprep.subr.bf16.mxu0 0
        %1806 = vmatpush1.bf16.msra.mxu0 0
        %1807 = vmatprep.subr.bf16.mxu0 0
        %1808 = vmatpush1.bf16.msra.mxu0 0
        %1809 = vmatprep.subr.bf16.mxu0 0
        %1810 = vmatpush1.bf16.msra.mxu0 0
        %1811 = vmatprep.subr.bf16.mxu0 0
        %1812 = vmatpush1.bf16.msra.mxu0 0
        %1813 = vmatprep.subr.bf16.mxu0 0
        %1814 = vmatpush1.bf16.msra.mxu0 0
        %1815 = vmatprep.mubr.bf16.mxu0 0
        %1816 = vmatmul.mubr.bf16.gmra.mrb[0].mxu0 %v1778
        %v1817 = vpop.f32.mrb[0].mxu0
        %v1818 = vadd.f32 0.0, %v1817
        %v1819 = vpop.f32.mrb[0].mxu0
        %v1820 = vpop.f32.mrb[0].mxu0
        %v1821 = vpop.f32.mrb[0].mxu0
        %1822 = vdwg.mxu0
        %v1823 = vadd.f32 %v1775, %v1818
        %v1824 = vpack.c.bf16 %v1669, %v1669
        %v1826 = vsel %vm1248, %v1824, 0
        %v1829 = vsel %vm1492, %v531, 0
        %1831 = vmatprep.subr.bf16.mxu0 0
        %1832 = vmatpush1.bf16.msra.mxu0 %v1829
        %1833 = vmatprep.subr.bf16.mxu0 0
        %1834 = vmatpush1.bf16.msra.mxu0 0
        %1835 = vmatprep.subr.bf16.mxu0 0
        %1836 = vmatpush1.bf16.msra.mxu0 0
        %1837 = vmatprep.subr.bf16.mxu0 0
        %1838 = vmatpush1.bf16.msra.mxu0 0
        %1839 = vmatprep.subr.bf16.mxu0 0
        %1840 = vmatpush1.bf16.msra.mxu0 0
        %1841 = vmatprep.subr.bf16.mxu0 0
        %1842 = vmatpush1.bf16.msra.mxu0 0
        %1843 = vmatprep.subr.bf16.mxu0 0
        %1844 = vmatpush1.bf16.msra.mxu0 0
        %1845 = vmatprep.subr.bf16.mxu0 0
        %1846 = vmatpush1.bf16.msra.mxu0 0
        %1847 = vmatprep.subr.bf16.mxu0 0
        %1848 = vmatpush1.bf16.msra.mxu0 0
        %1849 = vmatprep.subr.bf16.mxu0 0
        %1850 = vmatpush1.bf16.msra.mxu0 0
        %1851 = vmatprep.subr.bf16.mxu0 0
        %1852 = vmatpush1.bf16.msra.mxu0 0
        %1853 = vmatprep.subr.bf16.mxu0 0
        %1854 = vmatpush1.bf16.msra.mxu0 0
        %1855 = vmatprep.subr.bf16.mxu0 0
        %1856 = vmatpush1.bf16.msra.mxu0 0
        %1857 = vmatprep.subr.bf16.mxu0 0
        %1858 = vmatpush1.bf16.msra.mxu0 0
        %1859 = vmatprep.subr.bf16.mxu0 0
        %1860 = vmatpush1.bf16.msra.mxu0 0
        %1861 = vmatprep.subr.bf16.mxu0 0
        %1862 = vmatpush1.bf16.msra.mxu0 0
        %1863 = vmatprep.mubr.bf16.mxu0 0
        %1864 = vmatmul.mubr.bf16.gmra.mrb[0].mxu0 %v1826
        %v1865 = vpop.f32.mrb[0].mxu0
        %v1866 = vadd.f32 0.0, %v1865
        %v1867 = vpop.f32.mrb[0].mxu0
        %v1868 = vpop.f32.mrb[0].mxu0
        %v1869 = vpop.f32.mrb[0].mxu0
        %1870 = vdwg.mxu0
        %v1871 = vadd.f32 %v1823, %v1866
        %v1872 = vadd.f32 %v466, %v1871
        %v1873 = vsel %vm573, %v1872, 0.0
        %1874 = vadd.xlane.f32.xlu0 %v1873
        %v1875 = vpop.xlane.xlu0 %1874
        %v1876 = vrcp.pop 32.0
        %v1877 = vmul.f32 %v1875, %v1876
        %v1878 = vsub.f32 %v1872, %v1877
        %v1879 = vmul.f32 %v1878, %v1878
        %v1880 = vsel %vm573, %v1879, 0.0
        %1881 = vadd.xlane.f32.xlu0 %v1880
        %v1882 = vpop.xlane.xlu0 %1881
        %v1883 = vmul.f32 %v1882, %v1876
        %v1884 = vadd.f32 %v1883, 1e-05
        %v1885 = vrsqrt.pop %v1884
        %v1886 = vmul.f32 %v1878, %v1885
        %v1888 = vlaneseq
        %v1889 = vshrl.u32 %v1888, 7
        %v1890 = vsub.s32 0, %v1889
        %v1891 = vrot.slane %v533, %v1890
        %v1893 = vmul.f32 %v1886, %v1891
        %v1895 = vlaneseq
        %v1896 = vshrl.u32 %v1895, 7
        %v1897 = vsub.s32 0, %v1896
        %v1898 = vrot.slane %v534, %v1897
        %v1900 = vadd.f32 %v1893, %v1898
        %1901 = vst.msk [vmem:[%s463] sm:$0xff] %vm573, %v1900
        %p1902 = scmp.lt.s32.totalorder %s28, 1
        %s1903 = scalar_select %p1902, %s28, 1
        %s1904 = smul.addr %s1903, 8
        %s1905 = scalar_lea.vmem %s12, %s1904
        %s1906 = sand.u32 %s324, 1
        %s1907 = scalar_lea.sflag [#allocation3], %s1906
        %s1908 = sand.u32 %s324, 1
        %s1909 = smul.addr %s1908, 32
        %s1910 = scalar_lea.vmem [#allocation2], %s1909
        // Predicated region
        $region69: #{decoder_forward.8} parent=67 // pred_check
          %p1911 = pneg %p308
        $region70: #{decoder_forward.8} parent=67 // pred_check_branch
          %1913 = sbr.rel (%p1911) target = $region72
        $region71: #{decoder_forward.8} parent=67 // pred_region
          _
        $region72: #{decoder_forward.8} parent=67 // pred_fallthru
          _
        // Predicated region
        $region73: #{decoder_forward.8} parent=67 // pred_check
          %p1914 = pneg %p334
        $region74: #{decoder_forward.8} parent=67 // pred_check_branch
          %1916 = sbr.rel (%p1914) target = $region76
        $region75: #{decoder_forward.8} parent=67 // pred_region
          %s1917 = smul.u32 4, %s28
          %s1919 = ssub.s32 512, 512
          %1920 = vsyncadd %s1907, %s1919
          %s1921 = smul.addr %s1917, 128
          %s1922 = scalar_lea.hbm %s13, %s1921
          %s1923 = sshll.u32 %s1910, 4
          %s1924 = int_to_ptr.vmem [resolvable:$true] %s1923
          %1929 = dma.vmem_to_hbm [thread:$0]  %s1924, 512, %s1922, %s1907, 128, 128, 8
        $region76: #{decoder_forward.8} parent=67 // pred_fallthru
          _
      $region68: #{decoder_forward.8} parent=5 // pred_fallthru
        _
      %p1930 = scmp.le.s32.totalorder 2, %s23
      // Predicated region
      $region77: #{decoder_forward.8} parent=5 // pred_check
        %p1931 = pneg %p1930
      $region78: #{decoder_forward.8} parent=5 // pred_check_branch
        %1933 = sbr.rel (%p1931) target = $region80
      $region79: #{decoder_forward.8} parent=5 // pred_region
        %s1934 = ssub.s32 %s23, 2
        // Predicated region
        $region81: #{decoder_forward.8} parent=79 // pred_check
          %p1935 = pneg %p314
        $region82: #{decoder_forward.8} parent=79 // pred_check_branch
          %1937 = sbr.rel (%p1935) target = $region84
        $region83: #{decoder_forward.8} parent=79 // pred_region
          %p1938 = scmp.lt.s32.totalorder %s29, 1
          %s1939 = scalar_select %p1938, %s29, 1
          %s1940 = smul.addr %s1939, 8
          %s1941 = scalar_lea.vmem %s12, %s1940
        $region84: #{decoder_forward.8} parent=79 // pred_fallthru
          _
        // Predicated region
        $region85: #{decoder_forward.8} parent=79 // pred_check
          %p1942 = pneg %p340
        $region86: #{decoder_forward.8} parent=79 // pred_check_branch
          %1944 = sbr.rel (%p1942) target = $region88
        $region87: #{decoder_forward.8} parent=79 // pred_region
          %s1945 = sand.u32 %s325, 1
          %s1946 = scalar_lea.sflag [#allocation3], %s1945
          %s1947 = sand.u32 %s325, 1
          %s1948 = smul.addr %s1947, 32
          %s1949 = scalar_lea.vmem [#allocation2], %s1948
          %1950 = dma.done %s1946, 512
        $region88: #{decoder_forward.8} parent=79 // pred_fallthru
          _
      $region80: #{decoder_forward.8} parent=5 // pred_fallthru
        _
    $region6: #{decoder_forward.8} parent=1 // loop_footer
      %s27 = sadd.s32 1, %s23
    $region7: #{decoder_forward.8} parent=1 // loop_footer_branch
      %22 = sbr.rel target = $region3
    $region8: #{decoder_forward.8} parent=1 // loop_exit
      _
    %1951 = vsyncpa [#allocation3], 1
    %s1952 = scalar_lea.sflag [#allocation3], 1
    %1953 = vsyncpa %s1952, 1

// kernel: decoder_forward.7
$region0: #{decoder_forward.7}
  #allocation0 [shape = 'u32[]', space=smem, size = 0x4, offset = 0x4, fixed_abs, tag = 'smem constant byte address 0x4 - core index']
  #allocation1 [shape = 'u32[144,128]{1,0:T(1,128)}', space=vmem, size = 0x12000, scoped, tag = 'internal scratch']
  %s0 = inlined_call_operand.vmem [shape: f32[2,8,32], index: 0, kind: input, shape index: {}]
  %s1 = inlined_call_operand.vmem [shape: bf16[4,32,8], index: 1, kind: input, shape index: {}]
  %s2 = inlined_call_operand.vmem [shape: bf16[4,32,8], index: 2, kind: input, shape index: {}]
  %s3 = inlined_call_operand.vmem [shape: bf16[4,32,8], index: 3, kind: input, shape index: {}]
  %s4 = inlined_call_operand.vmem [shape: f32[4,1,8], index: 4, kind: input, shape index: {}]
  %s5 = inlined_call_operand.vmem [shape: f32[4,1,8], index: 5, kind: input, shape index: {}]
  %s6 = inlined_call_operand.vmem [shape: f32[4,1,8], index: 6, kind: input, shape index: {}]
  %s7 = inlined_call_operand.vmem [shape: bf16[4,8,32], index: 7, kind: input, shape index: {}]
  %s8 = inlined_call_operand.vmem [shape: f32[1,32], index: 8, kind: input, shape index: {}]
  %s9 = inlined_call_operand.vmem [shape: f32[1,32], index: 9, kind: input, shape index: {}]
  %s10 = inlined_call_operand.vmem [shape: f32[1,32], index: 10, kind: input, shape index: {}]
  %s11 = inlined_call_operand.vmem [shape: f32[2,8,32], index: 11, kind: output, shape index: {0}]
  %s12 = inlined_call_operand.hbm [shape: f32[8,8,8], index: 12, kind: output, shape index: {1}]
  %13 = xla_tuple %s11, %s12
  %s14 = sld [smem:[#allocation0]]
  $region85: #{decoder_forward.7} parent=0
    _
  %s16 = ssub.s32 1, %s14
  %s17 = scalar_select 0, %s16, %s14
  $region1: #{decoder_forward.7} parent=0
    #allocation2 [shape = 'u8[32768]{0}', space=vmem, size = 0x8000, scoped, tag = 'output window, operand 1']
    #allocation3 [shape = 's32[2]{0}', space=sflag, size = 0x8, scoped, tag = 'scoped memory for decoder_forward.7']
    %18 = vsyncpa [#allocation3], 0
    %s19 = scalar_lea.sflag [#allocation3], 1
    %20 = vsyncpa %s19, 0
    loop: start=0, step=1, limit=4
    $region2: #{decoder_forward.7} parent=1 // loop_pre_header
      _
    $region3: #{decoder_forward.7} parent=1 // loop_header
      %s22 = sphi 0, %s26
      %p23 = scmp.ge.s32.totalorder %s22, 4
      %s32 = sphi 0, %s34
      %s35 = sphi 0, %s32
      %s36 = sphi 0, %s35
      %s52 = sphi 0, %s36
      %s56 = sphi 0, %s56
      %s58 = sphi 0, %s56
      %s59 = sphi 0, %s58
      %s73 = sphi 0, %s59
      %s77 = sphi 0, %s77
      %s79 = sphi 0, %s77
      %s80 = sphi 0, %s79
      %s94 = sphi 0, %s80
      %s98 = sphi 0, %s98
      %s100 = sphi 0, %s98
      %s101 = sphi 0, %s100
      %s115 = sphi 0, %s101
      %s119 = sphi 0, %s119
      %s121 = sphi 0, %s119
      %s122 = sphi 0, %s121
      %s136 = sphi 0, %s122
      %s140 = sphi 0, %s140
      %s142 = sphi 0, %s140
      %s143 = sphi 0, %s142
      %s157 = sphi 0, %s143
      %s161 = sphi 0, %s161
      %s163 = sphi 0, %s161
      %s164 = sphi 0, %s163
      %s178 = sphi 0, %s164
      %s182 = sphi 0, %s182
      %s184 = sphi 0, %s182
      %s185 = sphi 0, %s184
      %s199 = sphi 0, %s185
      %s203 = sphi 0, %s203
      %s205 = sphi 0, %s203
      %s206 = sphi 0, %s205
      %s220 = sphi 0, %s206
      %s224 = sphi 0, %s224
      %s226 = sphi 0, %s224
      %s227 = sphi 0, %s226
      %s241 = sphi 0, %s227
      %s245 = sphi 0, %s245
      %s247 = sphi 0, %s245
      %s248 = sphi 0, %s247
      %s262 = sphi 0, %s248
      %s268 = sphi 0, %s270
      %s271 = sphi 0, %s268
      %s272 = sphi 0, %s271
      %s288 = sphi 0, %s272
      %s294 = sphi 0, %s296
      %s297 = sphi 0, %s294
      %s298 = sphi 0, %s297
      %s314 = sphi 0, %s298
    $region4: #{decoder_forward.7} parent=1 // loop_header_branch
      %25 = sbr.rel (%p23) target = $region8
    $region5: #{decoder_forward.7} parent=1 // loop_body
      %s27 = ssub.s32 %s22, 1
      %s28 = ssub.s32 %s22, 2
      %s29 = sadd.s32 %s22, 1
      %s30 = ssub.s32 %s22, %s29
      %p31 = scmp.eq.s32.totalorder %s30, 0
      %s33 = sadd.s32 %s32, 1
      %s34 = scalar_select %p31, %s32, %s33
      %p37 = pneg %p31
      %p38 = scmp.eq.s32.totalorder %s22, 1
      %p39 = por %p37, %p38
      %p40 = scmp.ne.s32.totalorder %s32, %s35
      %p41 = scmp.eq.s32.totalorder %s22, 0
      %p42 = por %p40, %p41
      %p43 = scmp.ne.s32.totalorder %s32, %s35
      %p44 = scmp.eq.s32.totalorder %s27, 1
      %p45 = por %p43, %p44
      %p46 = scmp.ne.s32.totalorder %s35, %s36
      %p47 = scmp.eq.s32.totalorder %s27, 0
      %p48 = por %p46, %p47
      %p49 = scmp.ne.s32.totalorder %s35, %s36
      %p50 = scmp.eq.s32.totalorder %s28, 1
      %p51 = por %p49, %p50
      %p53 = scmp.ne.s32.totalorder %s36, %s52
      %p54 = scmp.eq.s32.totalorder %s28, 0
      %p55 = por %p53, %p54
      %s57 = sadd.s32 %s56, 1
      %p60 = scmp.eq.s32.totalorder %s22, 1
      %p61 = scmp.ne.s32.totalorder %s56, %s58
      %p62 = scmp.eq.s32.totalorder %s22, 0
      %p63 = por %p61, %p62
      %p64 = scmp.ne.s32.totalorder %s56, %s58
      %p65 = scmp.eq.s32.totalorder %s27, 1
      %p66 = por %p64, %p65
      %p67 = scmp.ne.s32.totalorder %s58, %s59
      %p68 = scmp.eq.s32.totalorder %s27, 0
      %p69 = por %p67, %p68
      %p70 = scmp.ne.s32.totalorder %s58, %s59
      %p71 = scmp.eq.s32.totalorder %s28, 1
      %p72 = por %p70, %p71
      %p74 = scmp.ne.s32.totalorder %s59, %s73
      %p75 = scmp.eq.s32.totalorder %s28, 0
      %p76 = por %p74, %p75
      %s78 = sadd.s32 %s77, 1
      %p81 = scmp.eq.s32.totalorder %s22, 1
      %p82 = scmp.ne.s32.totalorder %s77, %s79
      %p83 = scmp.eq.s32.totalorder %s22, 0
      %p84 = por %p82, %p83
      %p85 = scmp.ne.s32.totalorder %s77, %s79
      %p86 = scmp.eq.s32.totalorder %s27, 1
      %p87 = por %p85, %p86
      %p88 = scmp.ne.s32.totalorder %s79, %s80
      %p89 = scmp.eq.s32.totalorder %s27, 0
      %p90 = por %p88, %p89
      %p91 = scmp.ne.s32.totalorder %s79, %s80
      %p92 = scmp.eq.s32.totalorder %s28, 1
      %p93 = por %p91, %p92
      %p95 = scmp.ne.s32.totalorder %s80, %s94
      %p96 = scmp.eq.s32.totalorder %s28, 0
      %p97 = por %p95, %p96
      %s99 = sadd.s32 %s98, 1
      %p102 = scmp.eq.s32.totalorder %s22, 1
      %p103 = scmp.ne.s32.totalorder %s98, %s100
      %p104 = scmp.eq.s32.totalorder %s22, 0
      %p105 = por %p103, %p104
      %p106 = scmp.ne.s32.totalorder %s98, %s100
      %p107 = scmp.eq.s32.totalorder %s27, 1
      %p108 = por %p106, %p107
      %p109 = scmp.ne.s32.totalorder %s100, %s101
      %p110 = scmp.eq.s32.totalorder %s27, 0
      %p111 = por %p109, %p110
      %p112 = scmp.ne.s32.totalorder %s100, %s101
      %p113 = scmp.eq.s32.totalorder %s28, 1
      %p114 = por %p112, %p113
      %p116 = scmp.ne.s32.totalorder %s101, %s115
      %p117 = scmp.eq.s32.totalorder %s28, 0
      %p118 = por %p116, %p117
      %s120 = sadd.s32 %s119, 1
      %p123 = scmp.eq.s32.totalorder %s22, 1
      %p124 = scmp.ne.s32.totalorder %s119, %s121
      %p125 = scmp.eq.s32.totalorder %s22, 0
      %p126 = por %p124, %p125
      %p127 = scmp.ne.s32.totalorder %s119, %s121
      %p128 = scmp.eq.s32.totalorder %s27, 1
      %p129 = por %p127, %p128
      %p130 = scmp.ne.s32.totalorder %s121, %s122
      %p131 = scmp.eq.s32.totalorder %s27, 0
      %p132 = por %p130, %p131
      %p133 = scmp.ne.s32.totalorder %s121, %s122
      %p134 = scmp.eq.s32.totalorder %s28, 1
      %p135 = por %p133, %p134
      %p137 = scmp.ne.s32.totalorder %s122, %s136
      %p138 = scmp.eq.s32.totalorder %s28, 0
      %p139 = por %p137, %p138
      %s141 = sadd.s32 %s140, 1
      %p144 = scmp.eq.s32.totalorder %s22, 1
      %p145 = scmp.ne.s32.totalorder %s140, %s142
      %p146 = scmp.eq.s32.totalorder %s22, 0
      %p147 = por %p145, %p146
      %p148 = scmp.ne.s32.totalorder %s140, %s142
      %p149 = scmp.eq.s32.totalorder %s27, 1
      %p150 = por %p148, %p149
      %p151 = scmp.ne.s32.totalorder %s142, %s143
      %p152 = scmp.eq.s32.totalorder %s27, 0
      %p153 = por %p151, %p152
      %p154 = scmp.ne.s32.totalorder %s142, %s143
      %p155 = scmp.eq.s32.totalorder %s28, 1
      %p156 = por %p154, %p155
      %p158 = scmp.ne.s32.totalorder %s143, %s157
      %p159 = scmp.eq.s32.totalorder %s28, 0
      %p160 = por %p158, %p159
      %s162 = sadd.s32 %s161, 1
      %p165 = scmp.eq.s32.totalorder %s22, 1
      %p166 = scmp.ne.s32.totalorder %s161, %s163
      %p167 = scmp.eq.s32.totalorder %s22, 0
      %p168 = por %p166, %p167
      %p169 = scmp.ne.s32.totalorder %s161, %s163
      %p170 = scmp.eq.s32.totalorder %s27, 1
      %p171 = por %p169, %p170
      %p172 = scmp.ne.s32.totalorder %s163, %s164
      %p173 = scmp.eq.s32.totalorder %s27, 0
      %p174 = por %p172, %p173
      %p175 = scmp.ne.s32.totalorder %s163, %s164
      %p176 = scmp.eq.s32.totalorder %s28, 1
      %p177 = por %p175, %p176
      %p179 = scmp.ne.s32.totalorder %s164, %s178
      %p180 = scmp.eq.s32.totalorder %s28, 0
      %p181 = por %p179, %p180
      %s183 = sadd.s32 %s182, 1
      %p186 = scmp.eq.s32.totalorder %s22, 1
      %p187 = scmp.ne.s32.totalorder %s182, %s184
      %p188 = scmp.eq.s32.totalorder %s22, 0
      %p189 = por %p187, %p188
      %p190 = scmp.ne.s32.totalorder %s182, %s184
      %p191 = scmp.eq.s32.totalorder %s27, 1
      %p192 = por %p190, %p191
      %p193 = scmp.ne.s32.totalorder %s184, %s185
      %p194 = scmp.eq.s32.totalorder %s27, 0
      %p195 = por %p193, %p194
      %p196 = scmp.ne.s32.totalorder %s184, %s185
      %p197 = scmp.eq.s32.totalorder %s28, 1
      %p198 = por %p196, %p197
      %p200 = scmp.ne.s32.totalorder %s185, %s199
      %p201 = scmp.eq.s32.totalorder %s28, 0
      %p202 = por %p200, %p201
      %s204 = sadd.s32 %s203, 1
      %p207 = scmp.eq.s32.totalorder %s22, 1
      %p208 = scmp.ne.s32.totalorder %s203, %s205
      %p209 = scmp.eq.s32.totalorder %s22, 0
      %p210 = por %p208, %p209
      %p211 = scmp.ne.s32.totalorder %s203, %s205
      %p212 = scmp.eq.s32.totalorder %s27, 1
      %p213 = por %p211, %p212
      %p214 = scmp.ne.s32.totalorder %s205, %s206
      %p215 = scmp.eq.s32.totalorder %s27, 0
      %p216 = por %p214, %p215
      %p217 = scmp.ne.s32.totalorder %s205, %s206
      %p218 = scmp.eq.s32.totalorder %s28, 1
      %p219 = por %p217, %p218
      %p221 = scmp.ne.s32.totalorder %s206, %s220
      %p222 = scmp.eq.s32.totalorder %s28, 0
      %p223 = por %p221, %p222
      %s225 = sadd.s32 %s224, 1
      %p228 = scmp.eq.s32.totalorder %s22, 1
      %p229 = scmp.ne.s32.totalorder %s224, %s226
      %p230 = scmp.eq.s32.totalorder %s22, 0
      %p231 = por %p229, %p230
      %p232 = scmp.ne.s32.totalorder %s224, %s226
      %p233 = scmp.eq.s32.totalorder %s27, 1
      %p234 = por %p232, %p233
      %p235 = scmp.ne.s32.totalorder %s226, %s227
      %p236 = scmp.eq.s32.totalorder %s27, 0
      %p237 = por %p235, %p236
      %p238 = scmp.ne.s32.totalorder %s226, %s227
      %p239 = scmp.eq.s32.totalorder %s28, 1
      %p240 = por %p238, %p239
      %p242 = scmp.ne.s32.totalorder %s227, %s241
      %p243 = scmp.eq.s32.totalorder %s28, 0
      %p244 = por %p242, %p243
      %s246 = sadd.s32 %s245, 1
      %p249 = scmp.eq.s32.totalorder %s22, 1
      %p250 = scmp.ne.s32.totalorder %s245, %s247
      %p251 = scmp.eq.s32.totalorder %s22, 0
      %p252 = por %p250, %p251
      %p253 = scmp.ne.s32.totalorder %s245, %s247
      %p254 = scmp.eq.s32.totalorder %s27, 1
      %p255 = por %p253, %p254
      %p256 = scmp.ne.s32.totalorder %s247, %s248
      %p257 = scmp.eq.s32.totalorder %s27, 0
      %p258 = por %p256, %p257
      %p259 = scmp.ne.s32.totalorder %s247, %s248
      %p260 = scmp.eq.s32.totalorder %s28, 1
      %p261 = por %p259, %p260
      %p263 = scmp.ne.s32.totalorder %s248, %s262
      %p264 = scmp.eq.s32.totalorder %s28, 0
      %p265 = por %p263, %p264
      %s266 = ssub.s32 %s22, %s29
      %p267 = scmp.eq.s32.totalorder %s266, 0
      %s269 = sadd.s32 %s268, 1
      %s270 = scalar_select %p267, %s268, %s269
      %p273 = pneg %p267
      %p274 = scmp.eq.s32.totalorder %s22, 1
      %p275 = por %p273, %p274
      %p276 = scmp.ne.s32.totalorder %s268, %s271
      %p277 = scmp.eq.s32.totalorder %s22, 0
      %p278 = por %p276, %p277
      %p279 = scmp.ne.s32.totalorder %s268, %s271
      %p280 = scmp.eq.s32.totalorder %s27, 1
      %p281 = por %p279, %p280
      %p282 = scmp.ne.s32.totalorder %s271, %s272
      %p283 = scmp.eq.s32.totalorder %s27, 0
      %p284 = por %p282, %p283
      %p285 = scmp.ne.s32.totalorder %s271, %s272
      %p286 = scmp.eq.s32.totalorder %s28, 1
      %p287 = por %p285, %p286
      %p289 = scmp.ne.s32.totalorder %s272, %s288
      %p290 = scmp.eq.s32.totalorder %s28, 0
      %p291 = por %p289, %p290
      %s292 = ssub.s32 %s22, %s29
      %p293 = scmp.eq.s32.totalorder %s292, 0
      %s295 = sadd.s32 %s294, 1
      %s296 = scalar_select %p293, %s294, %s295
      %p299 = pneg %p293
      %p300 = scmp.eq.s32.totalorder %s22, 1
      %p301 = por %p299, %p300
      %p302 = scmp.ne.s32.totalorder %s294, %s297
      %p303 = scmp.eq.s32.totalorder %s22, 0
      %p304 = por %p302, %p303
      %p305 = scmp.ne.s32.totalorder %s294, %s297
      %p306 = scmp.eq.s32.totalorder %s27, 1
      %p307 = por %p305, %p306
      %p308 = scmp.ne.s32.totalorder %s297, %s298
      %p309 = scmp.eq.s32.totalorder %s27, 0
      %p310 = por %p308, %p309
      %p311 = scmp.ne.s32.totalorder %s297, %s298
      %p312 = scmp.eq.s32.totalorder %s28, 1
      %p313 = por %p311, %p312
      %p315 = scmp.ne.s32.totalorder %s298, %s314
      %p316 = scmp.eq.s32.totalorder %s28, 0
      %p317 = por %p315, %p316
      %p318 = scmp.le.s32.totalorder 1, %s22
      %p319 = scmp.lt.s32.totalorder %s22, 3
      %p320 = pnand %p318, %p319
      %p321 = pneg %p320
      // Predicated region
      $region9: #{decoder_forward.7} parent=5 // pred_check
        _
      $region10: #{decoder_forward.7} parent=5 // pred_check_branch
        %323 = sbr.rel (%p320) target = $region12
      $region11: #{decoder_forward.7} parent=5 // pred_region
        %s324 = ssub.s32 %s22, 1
        // Predicated region
        $region13: #{decoder_forward.7} parent=11 // pred_check
          %p325 = pneg %p69
        $region14: #{decoder_forward.7} parent=11 // pred_check_branch
          %327 = sbr.rel (%p325) target = $region16
        $region15: #{decoder_forward.7} parent=11 // pred_region
          _
        $region16: #{decoder_forward.7} parent=11 // pred_fallthru
          _
        // Predicated region
        $region17: #{decoder_forward.7} parent=11 // pred_check
          %p328 = pneg %p90
        $region18: #{decoder_forward.7} parent=11 // pred_check_branch
          %330 = sbr.rel (%p328) target = $region20
        $region19: #{decoder_forward.7} parent=11 // pred_region
          _
        $region20: #{decoder_forward.7} parent=11 // pred_fallthru
          _
        // Predicated region
        $region21: #{decoder_forward.7} parent=11 // pred_check
          %p331 = pneg %p111
        $region22: #{decoder_forward.7} parent=11 // pred_check_branch
          %333 = sbr.rel (%p331) target = $region24
        $region23: #{decoder_forward.7} parent=11 // pred_region
          _
        $region24: #{decoder_forward.7} parent=11 // pred_fallthru
          _
        // Predicated region
        $region25: #{decoder_forward.7} parent=11 // pred_check
          %p334 = pneg %p132
        $region26: #{decoder_forward.7} parent=11 // pred_check_branch
          %336 = sbr.rel (%p334) target = $region28
        $region27: #{decoder_forward.7} parent=11 // pred_region
          _
        $region28: #{decoder_forward.7} parent=11 // pred_fallthru
          _
        // Predicated region
        $region29: #{decoder_forward.7} parent=11 // pred_check
          %p337 = pneg %p153
        $region30: #{decoder_forward.7} parent=11 // pred_check_branch
          %339 = sbr.rel (%p337) target = $region32
        $region31: #{decoder_forward.7} parent=11 // pred_region
          _
        $region32: #{decoder_forward.7} parent=11 // pred_fallthru
          _
        // Predicated region
        $region33: #{decoder_forward.7} parent=11 // pred_check
          %p340 = pneg %p174
        $region34: #{decoder_forward.7} parent=11 // pred_check_branch
          %342 = sbr.rel (%p340) target = $region36
        $region35: #{decoder_forward.7} parent=11 // pred_region
          _
        $region36: #{decoder_forward.7} parent=11 // pred_fallthru
          _
        // Predicated region
        $region37: #{decoder_forward.7} parent=11 // pred_check
          %p343 = pneg %p195
        $region38: #{decoder_forward.7} parent=11 // pred_check_branch
          %345 = sbr.rel (%p343) target = $region40
        $region39: #{decoder_forward.7} parent=11 // pred_region
          _
        $region40: #{decoder_forward.7} parent=11 // pred_fallthru
          _
        // Predicated region
        $region41: #{decoder_forward.7} parent=11 // pred_check
          %p346 = pneg %p216
        $region42: #{decoder_forward.7} parent=11 // pred_check_branch
          %348 = sbr.rel (%p346) target = $region44
        $region43: #{decoder_forward.7} parent=11 // pred_region
          _
        $region44: #{decoder_forward.7} parent=11 // pred_fallthru
          _
        // Predicated region
        $region45: #{decoder_forward.7} parent=11 // pred_check
          %p349 = pneg %p237
        $region46: #{decoder_forward.7} parent=11 // pred_check_branch
          %351 = sbr.rel (%p349) target = $region48
        $region47: #{decoder_forward.7} parent=11 // pred_region
          _
        $region48: #{decoder_forward.7} parent=11 // pred_fallthru
          _
        // Predicated region
        $region49: #{decoder_forward.7} parent=11 // pred_check
          %p352 = pneg %p258
        $region50: #{decoder_forward.7} parent=11 // pred_check_branch
          %354 = sbr.rel (%p352) target = $region52
        $region51: #{decoder_forward.7} parent=11 // pred_region
          _
        $region52: #{decoder_forward.7} parent=11 // pred_fallthru
          _
      $region12: #{decoder_forward.7} parent=5 // pred_fallthru
        _
      %p355 = scmp.lt.s32.totalorder %s22, 2
      // Predicated region
      $region53: #{decoder_forward.7} parent=5 // pred_check
        %p356 = pneg %p355
      $region54: #{decoder_forward.7} parent=5 // pred_check_branch
        %358 = sbr.rel (%p356) target = $region56
      $region55: #{decoder_forward.7} parent=5 // pred_region
        // Predicated region
        $region57: #{decoder_forward.7} parent=55 // pred_check
          %p359 = pneg %p42
        $region58: #{decoder_forward.7} parent=55 // pred_check_branch
          %361 = sbr.rel (%p359) target = $region60
        $region59: #{decoder_forward.7} parent=55 // pred_region
          %p362 = scmp.lt.s32.totalorder %s22, 1
          %s363 = scalar_select %p362, %s22, 1
          %s364 = smul.addr %s363, 8
          %s365 = scalar_lea.vmem %s0, %s364
        $region60: #{decoder_forward.7} parent=55 // pred_fallthru
          _
      $region56: #{decoder_forward.7} parent=5 // pred_fallthru
        _
      %p366 = scmp.le.s32.totalorder 1, %s22
      %p367 = scmp.lt.s32.totalorder %s22, 3
      %p368 = pnand %p366, %p367
      %p369 = pneg %p368
      // Predicated region
      $region61: #{decoder_forward.7} parent=5 // pred_check
        _
      $region62: #{decoder_forward.7} parent=5 // pred_check_branch
        %371 = sbr.rel (%p368) target = $region64
      $region63: #{decoder_forward.7} parent=5 // pred_region
        %s372 = ssub.s32 %s22, 1
        %p373 = scmp.lt.s32.totalorder %s27, 1
        %s374 = scalar_select %p373, %s27, 1
        %s375 = smul.addr %s374, 8
        %s376 = scalar_lea.vmem %s0, %s375
        %p377 = pneg %p48
        %p378 = pneg %p45
        %p379 = pneg %p69
        %p380 = pneg %p66
        %p381 = pneg %p90
        %p382 = pneg %p87
        %p383 = pneg %p111
        %p384 = pneg %p108
        %p385 = pneg %p132
        %p386 = pneg %p129
        %p387 = pneg %p153
        %p388 = pneg %p150
        %p389 = pneg %p174
        %p390 = pneg %p171
        %p391 = pneg %p195
        %p392 = pneg %p192
        %p393 = pneg %p216
        %p394 = pneg %p213
        %p395 = pneg %p237
        %p396 = pneg %p234
        %p397 = pneg %p258
        %p398 = pneg %p255
        %p399 = pneg %p284
        %p400 = pneg %p281
        %p401 = scmp.lt.s32.totalorder %s27, 1
        %s402 = scalar_select %p401, %s27, 1
        %s403 = smul.addr %s402, 8
        %s404 = scalar_lea.vmem %s11, %s403
        %p405 = pneg %p310
        %p406 = pneg %p307
        %s407 = sand.u32 %s297, 1
        %s408 = scalar_lea.sflag [#allocation3], %s407
        %s409 = sand.u32 %s297, 1
        %s410 = smul.addr %s409, 32
        %s411 = scalar_lea.vmem [#allocation2], %s410
        %p412 = scmp.lt.s32.totalorder %s27, 1
        %s413 = scalar_select %p412, %s27, 1
        %s414 = smul.addr %s413, 8
        %s415 = scalar_lea.vmem %s0, %s414
        %p416 = scmp.lt.s32.totalorder %s27, 1
        %s417 = scalar_select %p416, %s27, 1
        %s418 = smul.addr %s417, 8
        %s419 = scalar_lea.vmem %s11, %s418
        %s420 = smul.u32 4, %s27
        %v422 = vld [vmem:[%s415] sm:$0xff]
        %v423 = vld [vmem:[%s1] sm:$0xf]
        %v424 = vld [vmem:[%s1 + $0x4] sm:$0xf]
        %v425 = vld [vmem:[%s1 + $0x8] sm:$0xf]
        %v426 = vld [vmem:[%s1 + $0xc] sm:$0xf]
        %v427 = vld [vmem:[%s1 + $0x10] sm:$0xf]
        %v428 = vld [vmem:[%s1 + $0x14] sm:$0xf]
        %v429 = vld [vmem:[%s1 + $0x18] sm:$0xf]
        %v430 = vld [vmem:[%s1 + $0x1c] sm:$0xf]
        %v431 = vld [vmem:[%s1 + $0x20] sm:$0xf]
        %v432 = vld [vmem:[%s1 + $0x24] sm:$0xf]
        %v433 = vld [vmem:[%s1 + $0x28] sm:$0xf]
        %v434 = vld [vmem:[%s1 + $0x2c] sm:$0xf]
        %v435 = vld [vmem:[%s1 + $0x30] sm:$0xf]
        %v436 = vld [vmem:[%s1 + $0x34] sm:$0xf]
        %v437 = vld [vmem:[%s1 + $0x38] sm:$0xf]
        %v438 = vld [vmem:[%s1 + $0x3c] sm:$0xf]
        %v439 = vld [vmem:[%s2] sm:$0xf]
        %v440 = vld [vmem:[%s2 + $0x4] sm:$0xf]
        %v441 = vld [vmem:[%s2 + $0x8] sm:$0xf]
        %v442 = vld [vmem:[%s2 + $0xc] sm:$0xf]
        %v443 = vld [vmem:[%s2 + $0x10] sm:$0xf]
        %v444 = vld [vmem:[%s2 + $0x14] sm:$0xf]
        %v445 = vld [vmem:[%s2 + $0x18] sm:$0xf]
        %v446 = vld [vmem:[%s2 + $0x1c] sm:$0xf]
        %v447 = vld [vmem:[%s2 + $0x20] sm:$0xf]
        %v448 = vld [vmem:[%s2 + $0x24] sm:$0xf]
        %v449 = vld [vmem:[%s2 + $0x28] sm:$0xf]
        %v450 = vld [vmem:[%s2 + $0x2c] sm:$0xf]
        %v451 = vld [vmem:[%s2 + $0x30] sm:$0xf]
        %v452 = vld [vmem:[%s2 + $0x34] sm:$0xf]
        %v453 = vld [vmem:[%s2 + $0x38] sm:$0xf]
        %v454 = vld [vmem:[%s2 + $0x3c] sm:$0xf]
        %v455 = vld [vmem:[%s3] sm:$0xf]
        %v456 = vld [vmem:[%s3 + $0x4] sm:$0xf]
        %v457 = vld [vmem:[%s3 + $0x8] sm:$0xf]
        %v458 = vld [vmem:[%s3 + $0xc] sm:$0xf]
        %v459 = vld [vmem:[%s3 + $0x10] sm:$0xf]
        %v460 = vld [vmem:[%s3 + $0x14] sm:$0xf]
        %v461 = vld [vmem:[%s3 + $0x18] sm:$0xf]
        %v462 = vld [vmem:[%s3 + $0x1c] sm:$0xf]
        %v463 = vld [vmem:[%s3 + $0x20] sm:$0xf]
        %v464 = vld [vmem:[%s3 + $0x24] sm:$0xf]
        %v465 = vld [vmem:[%s3 + $0x28] sm:$0xf]
        %v466 = vld [vmem:[%s3 + $0x2c] sm:$0xf]
        %v467 = vld [vmem:[%s3 + $0x30] sm:$0xf]
        %v468 = vld [vmem:[%s3 + $0x34] sm:$0xf]
        %v469 = vld [vmem:[%s3 + $0x38] sm:$0xf]
        %v470 = vld [vmem:[%s3 + $0x3c] sm:$0xf]
        %v471 = vld [vmem:[%s4] sm:$0x1]
        %v472 = vld [vmem:[%s4 + $0x1] sm:$0x1]
        %v473 = vld [vmem:[%s4 + $0x2] sm:$0x1]
        %v474 = vld [vmem:[%s4 + $0x3] sm:$0x1]
        %v475 = vld [vmem:[%s5] sm:$0x1]
        %v476 = vld [vmem:[%s5 + $0x1] sm:$0x1]
        %v477 = vld [vmem:[%s5 + $0x2] sm:$0x1]
        %v478 = vld [vmem:[%s5 + $0x3] sm:$0x1]
        %v479 = vld [vmem:[%s6] sm:$0x1]
        %v480 = vld [vmem:[%s6 + $0x1] sm:$0x1]
        %v481 = vld [vmem:[%s6 + $0x2] sm:$0x1]
        %v482 = vld [vmem:[%s6 + $0x3] sm:$0x1]
        %v483 = vld [vmem:[%s7] sm:$0xf]
        %v484 = vld [vmem:[%s7 + $0x4] sm:$0xf]
        %v485 = vld [vmem:[%s7 + $0x8] sm:$0xf]
        %v486 = vld [vmem:[%s7 + $0xc] sm:$0xf]
        %v487 = vld [vmem:[%s8] sm:$0x1]
        %v488 = vld [vmem:[%s9] sm:$0x1]
        %v489 = vld [vmem:[%s10] sm:$0x1]
        %v490 = vpack.c.bf16 %v422, %v422
        %v495 = vlaneseq
        %v496 = vshrl.u32 %v495, 7
        %v497 = vsub.s32 0, %v496
        %v498 = vrot.slane %v471, %v497
        %v499 = vlaneseq
        %v500 = vshrl.u32 %v499, 7
        %v501 = vsub.s32 0, %v500
        %v502 = vrot.slane %v472, %v501
        %v503 = vlaneseq
        %v504 = vshrl.u32 %v503, 7
        %v505 = vsub.s32 0, %v504
        %v506 = vrot.slane %v473, %v505
        %v507 = vlaneseq
        %v508 = vshrl.u32 %v507, 7
        %v509 = vsub.s32 0, %v508
        %v510 = vrot.slane %v474, %v509
        %v519 = vunpack.c.l.b16 %v423
        %v520 = vunpack.c.l.b16 %v424
        %v521 = vunpack.c.l.b16 %v425
        %v522 = vunpack.c.l.b16 %v426
        %v523 = vpack.c.b16 %v520, %v519
        %v524 = vpack.c.b16 %v522, %v521
        %vm527 = vcmask 261120
        %v529 = vsel %vm527, %v490, 0
        %531 = vmatprep.subr.bf16.mxu0 0
        %532 = vmatpush1.bf16.msra.mxu0 %v523
        %533 = vmatprep.subr.bf16.mxu0 0
        %534 = vmatpush1.bf16.msra.mxu0 %v524
        %535 = vmatprep.subr.bf16.mxu0 0
        %536 = vmatpush1.bf16.msra.mxu0 0
        %537 = vmatprep.subr.bf16.mxu0 0
        %538 = vmatpush1.bf16.msra.mxu0 0
        %539 = vmatprep.subr.bf16.mxu0 0
        %540 = vmatpush1.bf16.msra.mxu0 0
        %541 = vmatprep.subr.bf16.mxu0 0
        %542 = vmatpush1.bf16.msra.mxu0 0
        %543 = vmatprep.subr.bf16.mxu0 0
        %544 = vmatpush1.bf16.msra.mxu0 0
        %545 = vmatprep.subr.bf16.mxu0 0
        %546 = vmatpush1.bf16.msra.mxu0 0
        %547 = vmatprep.subr.bf16.mxu0 0
        %548 = vmatpush1.bf16.msra.mxu0 0
        %549 = vmatprep.subr.bf16.mxu0 0
        %550 = vmatpush1.bf16.msra.mxu0 0
        %551 = vmatprep.subr.bf16.mxu0 0
        %552 = vmatpush1.bf16.msra.mxu0 0
        %553 = vmatprep.subr.bf16.mxu0 0
        %554 = vmatpush1.bf16.msra.mxu0 0
        %555 = vmatprep.subr.bf16.mxu0 0
        %556 = vmatpush1.bf16.msra.mxu0 0
        %557 = vmatprep.subr.bf16.mxu0 0
        %558 = vmatpush1.bf16.msra.mxu0 0
        %559 = vmatprep.subr.bf16.mxu0 0
        %560 = vmatpush1.bf16.msra.mxu0 0
        %561 = vmatprep.subr.bf16.mxu0 0
        %562 = vmatpush1.bf16.msra.mxu0 0
        %563 = vmatprep.mubr.bf16.mxu0 0
        %564 = vmatmul.mubr.bf16.gmra.mrb[0].mxu0 %v529
        %v565 = vpop.f32.mrb[0].mxu0
        %v566 = vadd.f32 %v498, %v565
        %v567 = vpop.f32.mrb[0].mxu0
        %v568 = vpop.f32.mrb[0].mxu0
        %v569 = vpop.f32.mrb[0].mxu0
        %570 = vdwg.mxu0
        %v575 = vunpack.c.l.b16 %v427
        %v576 = vunpack.c.l.b16 %v428
        %v577 = vunpack.c.l.b16 %v429
        %v578 = vunpack.c.l.b16 %v430
        %v579 = vpack.c.b16 %v576, %v575
        %v580 = vpack.c.b16 %v578, %v577
        %583 = vmatprep.subr.bf16.mxu0 0
        %584 = vmatpush1.bf16.msra.mxu0 %v579
        %585 = vmatprep.subr.bf16.mxu0 0
        %586 = vmatpush1.bf16.msra.mxu0 %v580
        %587 = vmatprep.subr.bf16.mxu0 0
        %588 = vmatpush1.bf16.msra.mxu0 0
        %589 = vmatprep.subr.bf16.mxu0 0
        %590 = vmatpush1.bf16.msra.mxu0 0
        %591 = vmatprep.subr.bf16.mxu0 0
        %592 = vmatpush1.bf16.msra.mxu0 0
        %593 = vmatprep.subr.bf16.mxu0 0
        %594 = vmatpush1.bf16.msra.mxu0 0
        %595 = vmatprep.subr.bf16.mxu0 0
        %596 = vmatpush1.bf16.msra.mxu0 0
        %597 = vmatprep.subr.bf16.mxu0 0
        %598 = vmatpush1.bf16.msra.mxu0 0
        %599 = vmatprep.subr.bf16.mxu0 0
        %600 = vmatpush1.bf16.msra.mxu0 0
        %601 = vmatprep.subr.bf16.mxu0 0
        %602 = vmatpush1.bf16.msra.mxu0 0
        %603 = vmatprep.subr.bf16.mxu0 0
        %604 = vmatpush1.bf16.msra.mxu0 0
        %605 = vmatprep.subr.bf16.mxu0 0
        %606 = vmatpush1.bf16.msra.mxu0 0
        %607 = vmatprep.subr.bf16.mxu0 0
        %608 = vmatpush1.bf16.msra.mxu0 0
        %609 = vmatprep.subr.bf16.mxu0 0
        %610 = vmatpush1.bf16.msra.mxu0 0
        %611 = vmatprep.subr.bf16.mxu0 0
        %612 = vmatpush1.bf16.msra.mxu0 0
        %613 = vmatprep.subr.bf16.mxu0 0
        %614 = vmatpush1.bf16.msra.mxu0 0
        %615 = vmatprep.mubr.bf16.mxu0 0
        %616 = vmatmul.mubr.bf16.gmra.mrb[0].mxu0 %v529
        %v617 = vpop.f32.mrb[0].mxu0
        %v618 = vadd.f32 %v502, %v617
        %v619 = vpop.f32.mrb[0].mxu0
        %v620 = vpop.f32.mrb[0].mxu0
        %v621 = vpop.f32.mrb[0].mxu0
        %622 = vdwg.mxu0
        %v627 = vunpack.c.l.b16 %v431
        %v628 = vunpack.c.l.b16 %v432
        %v629 = vunpack.c.l.b16 %v433
        %v630 = vunpack.c.l.b16 %v434
        %v631 = vpack.c.b16 %v628, %v627
        %v632 = vpack.c.b16 %v630, %v629
        %635 = vmatprep.subr.bf16.mxu0 0
        %636 = vmatpush1.bf16.msra.mxu0 %v631
        %637 = vmatprep.subr.bf16.mxu0 0
        %638 = vmatpush1.bf16.msra.mxu0 %v632
        %639 = vmatprep.subr.bf16.mxu0 0
        %640 = vmatpush1.bf16.msra.mxu0 0
        %641 = vmatprep.subr.bf16.mxu0 0
        %642 = vmatpush1.bf16.msra.mxu0 0
        %643 = vmatprep.subr.bf16.mxu0 0
        %644 = vmatpush1.bf16.msra.mxu0 0
        %645 = vmatprep.subr.bf16.mxu0 0
        %646 = vmatpush1.bf16.msra.mxu0 0
        %647 = vmatprep.subr.bf16.mxu0 0
        %648 = vmatpush1.bf16.msra.mxu0 0
        %649 = vmatprep.subr.bf16.mxu0 0
        %650 = vmatpush1.bf16.msra.mxu0 0
        %651 = vmatprep.subr.bf16.mxu0 0
        %652 = vmatpush1.bf16.msra.mxu0 0
        %653 = vmatprep.subr.bf16.mxu0 0
        %654 = vmatpush1.bf16.msra.mxu0 0
        %655 = vmatprep.subr.bf16.mxu0 0
        %656 = vmatpush1.bf16.msra.mxu0 0
        %657 = vmatprep.subr.bf16.mxu0 0
        %658 = vmatpush1.bf16.msra.mxu0 0
        %659 = vmatprep.subr.bf16.mxu0 0
        %660 = vmatpush1.bf16.msra.mxu0 0
        %661 = vmatprep.subr.bf16.mxu0 0
        %662 = vmatpush1.bf16.msra.mxu0 0
        %663 = vmatprep.subr.bf16.mxu0 0
        %664 = vmatpush1.bf16.msra.mxu0 0
        %665 = vmatprep.subr.bf16.mxu0 0
        %666 = vmatpush1.bf16.msra.mxu0 0
        %667 = vmatprep.mubr.bf16.mxu0 0
        %668 = vmatmul.mubr.bf16.gmra.mrb[0].mxu0 %v529
        %v669 = vpop.f32.mrb[0].mxu0
        %v670 = vadd.f32 %v506, %v669
        %v671 = vpop.f32.mrb[0].mxu0
        %v672 = vpop.f32.mrb[0].mxu0
        %v673 = vpop.f32.mrb[0].mxu0
        %674 = vdwg.mxu0
        %v679 = vunpack.c.l.b16 %v435
        %v680 = vunpack.c.l.b16 %v436
        %v681 = vunpack.c.l.b16 %v437
        %v682 = vunpack.c.l.b16 %v438
        %v683 = vpack.c.b16 %v680, %v679
        %v684 = vpack.c.b16 %v682, %v681
        %687 = vmatprep.subr.bf16.mxu0 0
        %688 = vmatpush1.bf16.msra.mxu0 %v683
        %689 = vmatprep.subr.bf16.mxu0 0
        %690 = vmatpush1.bf16.msra.mxu0 %v684
        %691 = vmatprep.subr.bf16.mxu0 0
        %692 = vmatpush1.bf16.msra.mxu0 0
        %693 = vmatprep.subr.bf16.mxu0 0
        %694 = vmatpush1.bf16.msra.mxu0 0
        %695 = vmatprep.subr.bf16.mxu0 0
        %696 = vmatpush1.bf16.msra.mxu0 0
        %697 = vmatprep.subr.bf16.mxu0 0
        %698 = vmatpush1.bf16.msra.mxu0 0
        %699 = vmatprep.subr.bf16.mxu0 0
        %700 = vmatpush1.bf16.msra.mxu0 0
        %701 = vmatprep.subr.bf16.mxu0 0
        %702 = vmatpush1.bf16.msra.mxu0 0
        %703 = vmatprep.subr.bf16.mxu0 0
        %704 = vmatpush1.bf16.msra.mxu0 0
        %705 = vmatprep.subr.bf16.mxu0 0
        %706 = vmatpush1.bf16.msra.mxu0 0
        %707 = vmatprep.subr.bf16.mxu0 0
        %708 = vmatpush1.bf16.msra.mxu0 0
        %709 = vmatprep.subr.bf16.mxu0 0
        %710 = vmatpush1.bf16.msra.mxu0 0
        %711 = vmatprep.subr.bf16.mxu0 0
        %712 = vmatpush1.bf16.msra.mxu0 0
        %713 = vmatprep.subr.bf16.mxu0 0
        %714 = vmatpush1.bf16.msra.mxu0 0
        %715 = vmatprep.subr.bf16.mxu0 0
        %716 = vmatpush1.bf16.msra.mxu0 0
        %717 = vmatprep.subr.bf16.mxu0 0
        %718 = vmatpush1.bf16.msra.mxu0 0
        %719 = vmatprep.mubr.bf16.mxu0 0
        %720 = vmatmul.mubr.bf16.gmra.mrb[0].mxu0 %v529
        %v721 = vpop.f32.mrb[0].mxu0
        %v722 = vadd.f32 %v510, %v721
        %v723 = vpop.f32.mrb[0].mxu0
        %v724 = vpop.f32.mrb[0].mxu0
        %v725 = vpop.f32.mrb[0].mxu0
        %726 = vdwg.mxu0
        %v731 = vlaneseq
        %v732 = vshrl.u32 %v731, 7
        %v733 = vsub.s32 0, %v732
        %v734 = vrot.slane %v475, %v733
        %v735 = vlaneseq
        %v736 = vshrl.u32 %v735, 7
        %v737 = vsub.s32 0, %v736
        %v738 = vrot.slane %v476, %v737
        %v739 = vlaneseq
        %v740 = vshrl.u32 %v739, 7
        %v741 = vsub.s32 0, %v740
        %v742 = vrot.slane %v477, %v741
        %v743 = vlaneseq
        %v744 = vshrl.u32 %v743, 7
        %v745 = vsub.s32 0, %v744
        %v746 = vrot.slane %v478, %v745
        %v755 = vunpack.c.l.b16 %v439
        %v756 = vunpack.c.l.b16 %v440
        %v757 = vunpack.c.l.b16 %v441
        %v758 = vunpack.c.l.b16 %v442
        %v759 = vpack.c.b16 %v756, %v755
        %v760 = vpack.c.b16 %v758, %v757
        %763 = vmatprep.subr.bf16.mxu0 0
        %764 = vmatpush1.bf16.msra.mxu0 %v759
        %765 = vmatprep.subr.bf16.mxu0 0
        %766 = vmatpush1.bf16.msra.mxu0 %v760
        %767 = vmatprep.subr.bf16.mxu0 0
        %768 = vmatpush1.bf16.msra.mxu0 0
        %769 = vmatprep.subr.bf16.mxu0 0
        %770 = vmatpush1.bf16.msra.mxu0 0
        %771 = vmatprep.subr.bf16.mxu0 0
        %772 = vmatpush1.bf16.msra.mxu0 0
        %773 = vmatprep.subr.bf16.mxu0 0
        %774 = vmatpush1.bf16.msra.mxu0 0
        %775 = vmatprep.subr.bf16.mxu0 0
        %776 = vmatpush1.bf16.msra.mxu0 0
        %777 = vmatprep.subr.bf16.mxu0 0
        %778 = vmatpush1.bf16.msra.mxu0 0
        %779 = vmatprep.subr.bf16.mxu0 0
        %780 = vmatpush1.bf16.msra.mxu0 0
        %781 = vmatprep.subr.bf16.mxu0 0
        %782 = vmatpush1.bf16.msra.mxu0 0
        %783 = vmatprep.subr.bf16.mxu0 0
        %784 = vmatpush1.bf16.msra.mxu0 0
        %785 = vmatprep.subr.bf16.mxu0 0
        %786 = vmatpush1.bf16.msra.mxu0 0
        %787 = vmatprep.subr.bf16.mxu0 0
        %788 = vmatpush1.bf16.msra.mxu0 0
        %789 = vmatprep.subr.bf16.mxu0 0
        %790 = vmatpush1.bf16.msra.mxu0 0
        %791 = vmatprep.subr.bf16.mxu0 0
        %792 = vmatpush1.bf16.msra.mxu0 0
        %793 = vmatprep.subr.bf16.mxu0 0
        %794 = vmatpush1.bf16.msra.mxu0 0
        %795 = vmatprep.mubr.bf16.mxu0 0
        %796 = vmatmul.mubr.bf16.gmra.mrb[0].mxu0 %v529
        %v797 = vpop.f32.mrb[0].mxu0
        %v798 = vadd.f32 %v734, %v797
        %v799 = vpop.f32.mrb[0].mxu0
        %v800 = vpop.f32.mrb[0].mxu0
        %v801 = vpop.f32.mrb[0].mxu0
        %802 = vdwg.mxu0
        %v807 = vunpack.c.l.b16 %v443
        %v808 = vunpack.c.l.b16 %v444
        %v809 = vunpack.c.l.b16 %v445
        %v810 = vunpack.c.l.b16 %v446
        %v811 = vpack.c.b16 %v808, %v807
        %v812 = vpack.c.b16 %v810, %v809
        %815 = vmatprep.subr.bf16.mxu0 0
        %816 = vmatpush1.bf16.msra.mxu0 %v811
        %817 = vmatprep.subr.bf16.mxu0 0
        %818 = vmatpush1.bf16.msra.mxu0 %v812
        %819 = vmatprep.subr.bf16.mxu0 0
        %820 = vmatpush1.bf16.msra.mxu0 0
        %821 = vmatprep.subr.bf16.mxu0 0
        %822 = vmatpush1.bf16.msra.mxu0 0
        %823 = vmatprep.subr.bf16.mxu0 0
        %824 = vmatpush1.bf16.msra.mxu0 0
        %825 = vmatprep.subr.bf16.mxu0 0
        %826 = vmatpush1.bf16.msra.mxu0 0
        %827 = vmatprep.subr.bf16.mxu0 0
        %828 = vmatpush1.bf16.msra.mxu0 0
        %829 = vmatprep.subr.bf16.mxu0 0
        %830 = vmatpush1.bf16.msra.mxu0 0
        %831 = vmatprep.subr.bf16.mxu0 0
        %832 = vmatpush1.bf16.msra.mxu0 0
        %833 = vmatprep.subr.bf16.mxu0 0
        %834 = vmatpush1.bf16.msra.mxu0 0
        %835 = vmatprep.subr.bf16.mxu0 0
        %836 = vmatpush1.bf16.msra.mxu0 0
        %837 = vmatprep.subr.bf16.mxu0 0
        %838 = vmatpush1.bf16.msra.mxu0 0
        %839 = vmatprep.subr.bf16.mxu0 0
        %840 = vmatpush1.bf16.msra.mxu0 0
        %841 = vmatprep.subr.bf16.mxu0 0
        %842 = vmatpush1.bf16.msra.mxu0 0
        %843 = vmatprep.subr.bf16.mxu0 0
        %844 = vmatpush1.bf16.msra.mxu0 0
        %845 = vmatprep.subr.bf16.mxu0 0
        %846 = vmatpush1.bf16.msra.mxu0 0
        %847 = vmatprep.mubr.bf16.mxu0 0
        %848 = vmatmul.mubr.bf16.gmra.mrb[0].mxu0 %v529
        %v849 = vpop.f32.mrb[0].mxu0
        %v850 = vadd.f32 %v738, %v849
        %v851 = vpop.f32.mrb[0].mxu0
        %v852 = vpop.f32.mrb[0].mxu0
        %v853 = vpop.f32.mrb[0].mxu0
        %854 = vdwg.mxu0
        %v859 = vunpack.c.l.b16 %v447
        %v860 = vunpack.c.l.b16 %v448
        %v861 = vunpack.c.l.b16 %v449
        %v862 = vunpack.c.l.b16 %v450
        %v863 = vpack.c.b16 %v860, %v859
        %v864 = vpack.c.b16 %v862, %v861
        %867 = vmatprep.subr.bf16.mxu0 0
        %868 = vmatpush1.bf16.msra.mxu0 %v863
        %869 = vmatprep.subr.bf16.mxu0 0
        %870 = vmatpush1.bf16.msra.mxu0 %v864
        %871 = vmatprep.subr.bf16.mxu0 0
        %872 = vmatpush1.bf16.msra.mxu0 0
        %873 = vmatprep.subr.bf16.mxu0 0
        %874 = vmatpush1.bf16.msra.mxu0 0
        %875 = vmatprep.subr.bf16.mxu0 0
        %876 = vmatpush1.bf16.msra.mxu0 0
        %877 = vmatprep.subr.bf16.mxu0 0
        %878 = vmatpush1.bf16.msra.mxu0 0
        %879 = vmatprep.subr.bf16.mxu0 0
        %880 = vmatpush1.bf16.msra.mxu0 0
        %881 = vmatprep.subr.bf16.mxu0 0
        %882 = vmatpush1.bf16.msra.mxu0 0
        %883 = vmatprep.subr.bf16.mxu0 0
        %884 = vmatpush1.bf16.msra.mxu0 0
        %885 = vmatprep.subr.bf16.mxu0 0
        %886 = vmatpush1.bf16.msra.mxu0 0
        %887 = vmatprep.subr.bf16.mxu0 0
        %888 = vmatpush1.bf16.msra.mxu0 0
        %889 = vmatprep.subr.bf16.mxu0 0
        %890 = vmatpush1.bf16.msra.mxu0 0
        %891 = vmatprep.subr.bf16.mxu0 0
        %892 = vmatpush1.bf16.msra.mxu0 0
        %893 = vmatprep.subr.bf16.mxu0 0
        %894 = vmatpush1.bf16.msra.mxu0 0
        %895 = vmatprep.subr.bf16.mxu0 0
        %896 = vmatpush1.bf16.msra.mxu0 0
        %897 = vmatprep.subr.bf16.mxu0 0
        %898 = vmatpush1.bf16.msra.mxu0 0
        %899 = vmatprep.mubr.bf16.mxu0 0
        %900 = vmatmul.mubr.bf16.gmra.mrb[0].mxu0 %v529
        %v901 = vpop.f32.mrb[0].mxu0
        %v902 = vadd.f32 %v742, %v901
        %v903 = vpop.f32.mrb[0].mxu0
        %v904 = vpop.f32.mrb[0].mxu0
        %v905 = vpop.f32.mrb[0].mxu0
        %906 = vdwg.mxu0
        %v911 = vunpack.c.l.b16 %v451
        %v912 = vunpack.c.l.b16 %v452
        %v913 = vunpack.c.l.b16 %v453
        %v914 = vunpack.c.l.b16 %v454
        %v915 = vpack.c.b16 %v912, %v911
        %v916 = vpack.c.b16 %v914, %v913
        %919 = vmatprep.subr.bf16.mxu0 0
        %920 = vmatpush1.bf16.msra.mxu0 %v915
        %921 = vmatprep.subr.bf16.mxu0 0
        %922 = vmatpush1.bf16.msra.mxu0 %v916
        %923 = vmatprep.subr.bf16.mxu0 0
        %924 = vmatpush1.bf16.msra.mxu0 0
        %925 = vmatprep.subr.bf16.mxu0 0
        %926 = vmatpush1.bf16.msra.mxu0 0
        %927 = vmatprep.subr.bf16.mxu0 0
        %928 = vmatpush1.bf16.msra.mxu0 0
        %929 = vmatprep.subr.bf16.mxu0 0
        %930 = vmatpush1.bf16.msra.mxu0 0
        %931 = vmatprep.subr.bf16.mxu0 0
        %932 = vmatpush1.bf16.msra.mxu0 0
        %933 = vmatprep.subr.bf16.mxu0 0
        %934 = vmatpush1.bf16.msra.mxu0 0
        %935 = vmatprep.subr.bf16.mxu0 0
        %936 = vmatpush1.bf16.msra.mxu0 0
        %937 = vmatprep.subr.bf16.mxu0 0
        %938 = vmatpush1.bf16.msra.mxu0 0
        %939 = vmatprep.subr.bf16.mxu0 0
        %940 = vmatpush1.bf16.msra.mxu0 0
        %941 = vmatprep.subr.bf16.mxu0 0
        %942 = vmatpush1.bf16.msra.mxu0 0
        %943 = vmatprep.subr.bf16.mxu0 0
        %944 = vmatpush1.bf16.msra.mxu0 0
        %945 = vmatprep.subr.bf16.mxu0 0
        %946 = vmatpush1.bf16.msra.mxu0 0
        %947 = vmatprep.subr.bf16.mxu0 0
        %948 = vmatpush1.bf16.msra.mxu0 0
        %949 = vmatprep.subr.bf16.mxu0 0
        %950 = vmatpush1.bf16.msra.mxu0 0
        %951 = vmatprep.mubr.bf16.mxu0 0
        %952 = vmatmul.mubr.bf16.gmra.mrb[0].mxu0 %v529
        %v953 = vpop.f32.mrb[0].mxu0
        %v954 = vadd.f32 %v746, %v953
        %v955 = vpop.f32.mrb[0].mxu0
        %v956 = vpop.f32.mrb[0].mxu0
        %v957 = vpop.f32.mrb[0].mxu0
        %958 = vdwg.mxu0
        %v963 = vlaneseq
        %v964 = vshrl.u32 %v963, 7
        %v965 = vsub.s32 0, %v964
        %v966 = vrot.slane %v479, %v965
        %v967 = vlaneseq
        %v968 = vshrl.u32 %v967, 7
        %v969 = vsub.s32 0, %v968
        %v970 = vrot.slane %v480, %v969
        %v971 = vlaneseq
        %v972 = vshrl.u32 %v971, 7
        %v973 = vsub.s32 0, %v972
        %v974 = vrot.slane %v481, %v973
        %v975 = vlaneseq
        %v976 = vshrl.u32 %v975, 7
        %v977 = vsub.s32 0, %v976
        %v978 = vrot.slane %v482, %v977
        %v987 = vunpack.c.l.b16 %v455
        %v988 = vunpack.c.l.b16 %v456
        %v989 = vunpack.c.l.b16 %v457
        %v990 = vunpack.c.l.b16 %v458
        %v991 = vpack.c.b16 %v988, %v987
        %v992 = vpack.c.b16 %v990, %v989
        %995 = vmatprep.subr.bf16.mxu0 0
        %996 = vmatpush1.bf16.msra.mxu0 %v991
        %997 = vmatprep.subr.bf16.mxu0 0
        %998 = vmatpush1.bf16.msra.mxu0 %v992
        %999 = vmatprep.subr.bf16.mxu0 0
        %1000 = vmatpush1.bf16.msra.mxu0 0
        %1001 = vmatprep.subr.bf16.mxu0 0
        %1002 = vmatpush1.bf16.msra.mxu0 0
        %1003 = vmatprep.subr.bf16.mxu0 0
        %1004 = vmatpush1.bf16.msra.mxu0 0
        %1005 = vmatprep.subr.bf16.mxu0 0
        %1006 = vmatpush1.bf16.msra.mxu0 0
        %1007 = vmatprep.subr.bf16.mxu0 0
        %1008 = vmatpush1.bf16.msra.mxu0 0
        %1009 = vmatprep.subr.bf16.mxu0 0
        %1010 = vmatpush1.bf16.msra.mxu0 0
        %1011 = vmatprep.subr.bf16.mxu0 0
        %1012 = vmatpush1.bf16.msra.mxu0 0
        %1013 = vmatprep.subr.bf16.mxu0 0
        %1014 = vmatpush1.bf16.msra.mxu0 0
        %1015 = vmatprep.subr.bf16.mxu0 0
        %1016 = vmatpush1.bf16.msra.mxu0 0
        %1017 = vmatprep.subr.bf16.mxu0 0
        %1018 = vmatpush1.bf16.msra.mxu0 0
        %1019 = vmatprep.subr.bf16.mxu0 0
        %1020 = vmatpush1.bf16.msra.mxu0 0
        %1021 = vmatprep.subr.bf16.mxu0 0
        %1022 = vmatpush1.bf16.msra.mxu0 0
        %1023 = vmatprep.subr.bf16.mxu0 0
        %1024 = vmatpush1.bf16.msra.mxu0 0
        %1025 = vmatprep.subr.bf16.mxu0 0
        %1026 = vmatpush1.bf16.msra.mxu0 0
        %1027 = vmatprep.mubr.bf16.mxu0 0
        %1028 = vmatmul.mubr.bf16.gmra.mrb[0].mxu0 %v529
        %v1029 = vpop.f32.mrb[0].mxu0
        %v1030 = vadd.f32 %v966, %v1029
        %v1031 = vpop.f32.mrb[0].mxu0
        %v1032 = vpop.f32.mrb[0].mxu0
        %v1033 = vpop.f32.mrb[0].mxu0
        %1034 = vdwg.mxu0
        %v1039 = vunpack.c.l.b16 %v459
        %v1040 = vunpack.c.l.b16 %v460
        %v1041 = vunpack.c.l.b16 %v461
        %v1042 = vunpack.c.l.b16 %v462
        %v1043 = vpack.c.b16 %v1040, %v1039
        %v1044 = vpack.c.b16 %v1042, %v1041
        %1047 = vmatprep.subr.bf16.mxu0 0
        %1048 = vmatpush1.bf16.msra.mxu0 %v1043
        %1049 = vmatprep.subr.bf16.mxu0 0
        %1050 = vmatpush1.bf16.msra.mxu0 %v1044
        %1051 = vmatprep.subr.bf16.mxu0 0
        %1052 = vmatpush1.bf16.msra.mxu0 0
        %1053 = vmatprep.subr.bf16.mxu0 0
        %1054 = vmatpush1.bf16.msra.mxu0 0
        %1055 = vmatprep.subr.bf16.mxu0 0
        %1056 = vmatpush1.bf16.msra.mxu0 0
        %1057 = vmatprep.subr.bf16.mxu0 0
        %1058 = vmatpush1.bf16.msra.mxu0 0
        %1059 = vmatprep.subr.bf16.mxu0 0
        %1060 = vmatpush1.bf16.msra.mxu0 0
        %1061 = vmatprep.subr.bf16.mxu0 0
        %1062 = vmatpush1.bf16.msra.mxu0 0
        %1063 = vmatprep.subr.bf16.mxu0 0
        %1064 = vmatpush1.bf16.msra.mxu0 0
        %1065 = vmatprep.subr.bf16.mxu0 0
        %1066 = vmatpush1.bf16.msra.mxu0 0
        %1067 = vmatprep.subr.bf16.mxu0 0
        %1068 = vmatpush1.bf16.msra.mxu0 0
        %1069 = vmatprep.subr.bf16.mxu0 0
        %1070 = vmatpush1.bf16.msra.mxu0 0
        %1071 = vmatprep.subr.bf16.mxu0 0
        %1072 = vmatpush1.bf16.msra.mxu0 0
        %1073 = vmatprep.subr.bf16.mxu0 0
        %1074 = vmatpush1.bf16.msra.mxu0 0
        %1075 = vmatprep.subr.bf16.mxu0 0
        %1076 = vmatpush1.bf16.msra.mxu0 0
        %1077 = vmatprep.subr.bf16.mxu0 0
        %1078 = vmatpush1.bf16.msra.mxu0 0
        %1079 = vmatprep.mubr.bf16.mxu0 0
        %1080 = vmatmul.mubr.bf16.gmra.mrb[0].mxu0 %v529
        %v1081 = vpop.f32.mrb[0].mxu0
        %v1082 = vadd.f32 %v970, %v1081
        %v1083 = vpop.f32.mrb[0].mxu0
        %v1084 = vpop.f32.mrb[0].mxu0
        %v1085 = vpop.f32.mrb[0].mxu0
        %1086 = vdwg.mxu0
        %v1091 = vunpack.c.l.b16 %v463
        %v1092 = vunpack.c.l.b16 %v464
        %v1093 = vunpack.c.l.b16 %v465
        %v1094 = vunpack.c.l.b16 %v466
        %v1095 = vpack.c.b16 %v1092, %v1091
        %v1096 = vpack.c.b16 %v1094, %v1093
        %1099 = vmatprep.subr.bf16.mxu0 0
        %1100 = vmatpush1.bf16.msra.mxu0 %v1095
        %1101 = vmatprep.subr.bf16.mxu0 0
        %1102 = vmatpush1.bf16.msra.mxu0 %v1096
        %1103 = vmatprep.subr.bf16.mxu0 0
        %1104 = vmatpush1.bf16.msra.mxu0 0
        %1105 = vmatprep.subr.bf16.mxu0 0
        %1106 = vmatpush1.bf16.msra.mxu0 0
        %1107 = vmatprep.subr.bf16.mxu0 0
        %1108 = vmatpush1.bf16.msra.mxu0 0
        %1109 = vmatprep.subr.bf16.mxu0 0
        %1110 = vmatpush1.bf16.msra.mxu0 0
        %1111 = vmatprep.subr.bf16.mxu0 0
        %1112 = vmatpush1.bf16.msra.mxu0 0
        %1113 = vmatprep.subr.bf16.mxu0 0
        %1114 = vmatpush1.bf16.msra.mxu0 0
        %1115 = vmatprep.subr.bf16.mxu0 0
        %1116 = vmatpush1.bf16.msra.mxu0 0
        %1117 = vmatprep.subr.bf16.mxu0 0
        %1118 = vmatpush1.bf16.msra.mxu0 0
        %1119 = vmatprep.subr.bf16.mxu0 0
        %1120 = vmatpush1.bf16.msra.mxu0 0
        %1121 = vmatprep.subr.bf16.mxu0 0
        %1122 = vmatpush1.bf16.msra.mxu0 0
        %1123 = vmatprep.subr.bf16.mxu0 0
        %1124 = vmatpush1.bf16.msra.mxu0 0
        %1125 = vmatprep.subr.bf16.mxu0 0
        %1126 = vmatpush1.bf16.msra.mxu0 0
        %1127 = vmatprep.subr.bf16.mxu0 0
        %1128 = vmatpush1.bf16.msra.mxu0 0
        %1129 = vmatprep.subr.bf16.mxu0 0
        %1130 = vmatpush1.bf16.msra.mxu0 0
        %1131 = vmatprep.mubr.bf16.mxu0 0
        %1132 = vmatmul.mubr.bf16.gmra.mrb[0].mxu0 %v529
        %v1133 = vpop.f32.mrb[0].mxu0
        %v1134 = vadd.f32 %v974, %v1133
        %v1135 = vpop.f32.mrb[0].mxu0
        %v1136 = vpop.f32.mrb[0].mxu0
        %v1137 = vpop.f32.mrb[0].mxu0
        %1138 = vdwg.mxu0
        %v1143 = vunpack.c.l.b16 %v467
        %v1144 = vunpack.c.l.b16 %v468
        %v1145 = vunpack.c.l.b16 %v469
        %v1146 = vunpack.c.l.b16 %v470
        %v1147 = vpack.c.b16 %v1144, %v1143
        %v1148 = vpack.c.b16 %v1146, %v1145
        %1151 = vmatprep.subr.bf16.mxu0 0
        %1152 = vmatpush1.bf16.msra.mxu0 %v1147
        %1153 = vmatprep.subr.bf16.mxu0 0
        %1154 = vmatpush1.bf16.msra.mxu0 %v1148
        %1155 = vmatprep.subr.bf16.mxu0 0
        %1156 = vmatpush1.bf16.msra.mxu0 0
        %1157 = vmatprep.subr.bf16.mxu0 0
        %1158 = vmatpush1.bf16.msra.mxu0 0
        %1159 = vmatprep.subr.bf16.mxu0 0
        %1160 = vmatpush1.bf16.msra.mxu0 0
        %1161 = vmatprep.subr.bf16.mxu0 0
        %1162 = vmatpush1.bf16.msra.mxu0 0
        %1163 = vmatprep.subr.bf16.mxu0 0
        %1164 = vmatpush1.bf16.msra.mxu0 0
        %1165 = vmatprep.subr.bf16.mxu0 0
        %1166 = vmatpush1.bf16.msra.mxu0 0
        %1167 = vmatprep.subr.bf16.mxu0 0
        %1168 = vmatpush1.bf16.msra.mxu0 0
        %1169 = vmatprep.subr.bf16.mxu0 0
        %1170 = vmatpush1.bf16.msra.mxu0 0
        %1171 = vmatprep.subr.bf16.mxu0 0
        %1172 = vmatpush1.bf16.msra.mxu0 0
        %1173 = vmatprep.subr.bf16.mxu0 0
        %1174 = vmatpush1.bf16.msra.mxu0 0
        %1175 = vmatprep.subr.bf16.mxu0 0
        %1176 = vmatpush1.bf16.msra.mxu0 0
        %1177 = vmatprep.subr.bf16.mxu0 0
        %1178 = vmatpush1.bf16.msra.mxu0 0
        %1179 = vmatprep.subr.bf16.mxu0 0
        %1180 = vmatpush1.bf16.msra.mxu0 0
        %1181 = vmatprep.subr.bf16.mxu0 0
        %1182 = vmatpush1.bf16.msra.mxu0 0
        %1183 = vmatprep.mubr.bf16.mxu0 0
        %1184 = vmatmul.mubr.bf16.gmra.mrb[0].mxu0 %v529
        %v1185 = vpop.f32.mrb[0].mxu0
        %v1186 = vadd.f32 %v978, %v1185
        %v1187 = vpop.f32.mrb[0].mxu0
        %v1188 = vpop.f32.mrb[0].mxu0
        %v1189 = vpop.f32.mrb[0].mxu0
        %1190 = vdwg.mxu0
        %v1191 = vpack.c.bf16 %v566, %v566
        %v1192 = vpack.c.bf16 %v618, %v618
        %v1193 = vpack.c.bf16 %v670, %v670
        %v1194 = vpack.c.bf16 %v722, %v722
        %v1195 = vpack.c.bf16 %v798, %v798
        %v1196 = vpack.c.bf16 %v850, %v850
        %v1197 = vpack.c.bf16 %v902, %v902
        %v1198 = vpack.c.bf16 %v954, %v954
        %vm1199 = vcmask 64512
        %v1201 = vsel %vm1199, %v1191, 0
        %v1204 = vsel %vm1199, %v1195, 0
        %1206 = vmatprep.subr.bf16.mxu0 0
        %1207 = vmatpush1.bf16.xpose.msra.mxu0 %v1204
        %1208 = vmatprep.subr.bf16.mxu0 0
        %1209 = vmatpush1.bf16.xpose.msra.mxu0 0
        %1210 = vmatprep.subr.bf16.mxu0 0
        %1211 = vmatpush1.bf16.xpose.msra.mxu0 0
        %1212 = vmatprep.subr.bf16.mxu0 0
        %1213 = vmatpush1.bf16.xpose.msra.mxu0 0
        %1214 = vmatprep.subr.bf16.mxu0 0
        %1215 = vmatpush1.bf16.xpose.msra.mxu0 0
        %1216 = vmatprep.subr.bf16.mxu0 0
        %1217 = vmatpush1.bf16.xpose.msra.mxu0 0
        %1218 = vmatprep.subr.bf16.mxu0 0
        %1219 = vmatpush1.bf16.xpose.msra.mxu0 0
        %1220 = vmatprep.subr.bf16.mxu0 0
        %1221 = vmatpush1.bf16.xpose.msra.mxu0 0
        %1222 = vmatprep.subr.bf16.mxu0 0
        %1223 = vmatpush1.bf16.xpose.msra.mxu0 0
        %1224 = vmatprep.subr.bf16.mxu0 0
        %1225 = vmatpush1.bf16.xpose.msra.mxu0 0
        %1226 = vmatprep.subr.bf16.mxu0 0
        %1227 = vmatpush1.bf16.xpose.msra.mxu0 0
        %1228 = vmatprep.subr.bf16.mxu0 0
        %1229 = vmatpush1.bf16.xpose.msra.mxu0 0
        %1230 = vmatprep.subr.bf16.mxu0 0
        %1231 = vmatpush1.bf16.xpose.msra.mxu0 0
        %1232 = vmatprep.subr.bf16.mxu0 0
        %1233 = vmatpush1.bf16.xpose.msra.mxu0 0
        %1234 = vmatprep.subr.bf16.mxu0 0
        %1235 = vmatpush1.bf16.xpose.msra.mxu0 0
        %1236 = vmatprep.subr.bf16.mxu0 0
        %1237 = vmatpush1.bf16.xpose.msra.mxu0 0
        %1238 = vmatprep.mubr.bf16.mxu0 0
        %1239 = vmatmul.mubr.bf16.gmra.mrb[0].mxu0 %v1201
        %v1240 = vpop.f32.mrb[0].mxu0
        %v1241 = vadd.f32 0.0, %v1240
        %v1242 = vpop.f32.mrb[0].mxu0
        %v1243 = vpop.f32.mrb[0].mxu0
        %v1244 = vpop.f32.mrb[0].mxu0
        %1245 = vdwg.mxu0
        %v1247 = vsel %vm1199, %v1192, 0
        %v1250 = vsel %vm1199, %v1196, 0
        %1252 = vmatprep.subr.bf16.mxu0 0
        %1253 = vmatpush1.bf16.xpose.msra.mxu0 %v1250
        %1254 = vmatprep.subr.bf16.mxu0 0
        %1255 = vmatpush1.bf16.xpose.msra.mxu0 0
        %1256 = vmatprep.subr.bf16.mxu0 0
        %1257 = vmatpush1.bf16.xpose.msra.mxu0 0
        %1258 = vmatprep.subr.bf16.mxu0 0
        %1259 = vmatpush1.bf16.xpose.msra.mxu0 0
        %1260 = vmatprep.subr.bf16.mxu0 0
        %1261 = vmatpush1.bf16.xpose.msra.mxu0 0
        %1262 = vmatprep.subr.bf16.mxu0 0
        %1263 = vmatpush1.bf16.xpose.msra.mxu0 0
        %1264 = vmatprep.subr.bf16.mxu0 0
        %1265 = vmatpush1.bf16.xpose.msra.mxu0 0
        %1266 = vmatprep.subr.bf16.mxu0 0
        %1267 = vmatpush1.bf16.xpose.msra.mxu0 0
        %1268 = vmatprep.subr.bf16.mxu0 0
        %1269 = vmatpush1.bf16.xpose.msra.mxu0 0
        %1270 = vmatprep.subr.bf16.mxu0 0
        %1271 = vmatpush1.bf16.xpose.msra.mxu0 0
        %1272 = vmatprep.subr.bf16.mxu0 0
        %1273 = vmatpush1.bf16.xpose.msra.mxu0 0
        %1274 = vmatprep.subr.bf16.mxu0 0
        %1275 = vmatpush1.bf16.xpose.msra.mxu0 0
        %1276 = vmatprep.subr.bf16.mxu0 0
        %1277 = vmatpush1.bf16.xpose.msra.mxu0 0
        %1278 = vmatprep.subr.bf16.mxu0 0
        %1279 = vmatpush1.bf16.xpose.msra.mxu0 0
        %1280 = vmatprep.subr.bf16.mxu0 0
        %1281 = vmatpush1.bf16.xpose.msra.mxu0 0
        %1282 = vmatprep.subr.bf16.mxu0 0
        %1283 = vmatpush1.bf16.xpose.msra.mxu0 0
        %1284 = vmatprep.mubr.bf16.mxu0 0
        %1285 = vmatmul.mubr.bf16.gmra.mrb[0].mxu0 %v1247
        %v1286 = vpop.f32.mrb[0].mxu0
        %v1287 = vadd.f32 0.0, %v1286
        %v1288 = vpop.f32.mrb[0].mxu0
        %v1289 = vpop.f32.mrb[0].mxu0
        %v1290 = vpop.f32.mrb[0].mxu0
        %1291 = vdwg.mxu0
        %v1293 = vsel %vm1199, %v1193, 0
        %v1296 = vsel %vm1199, %v1197, 0
        %1298 = vmatprep.subr.bf16.mxu0 0
        %1299 = vmatpush1.bf16.xpose.msra.mxu0 %v1296
        %1300 = vmatprep.subr.bf16.mxu0 0
        %1301 = vmatpush1.bf16.xpose.msra.mxu0 0
        %1302 = vmatprep.subr.bf16.mxu0 0
        %1303 = vmatpush1.bf16.xpose.msra.mxu0 0
        %1304 = vmatprep.subr.bf16.mxu0 0
        %1305 = vmatpush1.bf16.xpose.msra.mxu0 0
        %1306 = vmatprep.subr.bf16.mxu0 0
        %1307 = vmatpush1.bf16.xpose.msra.mxu0 0
        %1308 = vmatprep.subr.bf16.mxu0 0
        %1309 = vmatpush1.bf16.xpose.msra.mxu0 0
        %1310 = vmatprep.subr.bf16.mxu0 0
        %1311 = vmatpush1.bf16.xpose.msra.mxu0 0
        %1312 = vmatprep.subr.bf16.mxu0 0
        %1313 = vmatpush1.bf16.xpose.msra.mxu0 0
        %1314 = vmatprep.subr.bf16.mxu0 0
        %1315 = vmatpush1.bf16.xpose.msra.mxu0 0
        %1316 = vmatprep.subr.bf16.mxu0 0
        %1317 = vmatpush1.bf16.xpose.msra.mxu0 0
        %1318 = vmatprep.subr.bf16.mxu0 0
        %1319 = vmatpush1.bf16.xpose.msra.mxu0 0
        %1320 = vmatprep.subr.bf16.mxu0 0
        %1321 = vmatpush1.bf16.xpose.msra.mxu0 0
        %1322 = vmatprep.subr.bf16.mxu0 0
        %1323 = vmatpush1.bf16.xpose.msra.mxu0 0
        %1324 = vmatprep.subr.bf16.mxu0 0
        %1325 = vmatpush1.bf16.xpose.msra.mxu0 0
        %1326 = vmatprep.subr.bf16.mxu0 0
        %1327 = vmatpush1.bf16.xpose.msra.mxu0 0
        %1328 = vmatprep.subr.bf16.mxu0 0
        %1329 = vmatpush1.bf16.xpose.msra.mxu0 0
        %1330 = vmatprep.mubr.bf16.mxu0 0
        %1331 = vmatmul.mubr.bf16.gmra.mrb[0].mxu0 %v1293
        %v1332 = vpop.f32.mrb[0].mxu0
        %v1333 = vadd.f32 0.0, %v1332
        %v1334 = vpop.f32.mrb[0].mxu0
        %v1335 = vpop.f32.mrb[0].mxu0
        %v1336 = vpop.f32.mrb[0].mxu0
        %1337 = vdwg.mxu0
        %v1339 = vsel %vm1199, %v1194, 0
        %v1342 = vsel %vm1199, %v1198, 0
        %1344 = vmatprep.subr.bf16.mxu0 0
        %1345 = vmatpush1.bf16.xpose.msra.mxu0 %v1342
        %1346 = vmatprep.subr.bf16.mxu0 0
        %1347 = vmatpush1.bf16.xpose.msra.mxu0 0
        %1348 = vmatprep.subr.bf16.mxu0 0
        %1349 = vmatpush1.bf16.xpose.msra.mxu0 0
        %1350 = vmatprep.subr.bf16.mxu0 0
        %1351 = vmatpush1.bf16.xpose.msra.mxu0 0
        %1352 = vmatprep.subr.bf16.mxu0 0
        %1353 = vmatpush1.bf16.xpose.msra.mxu0 0
        %1354 = vmatprep.subr.bf16.mxu0 0
        %1355 = vmatpush1.bf16.xpose.msra.mxu0 0
        %1356 = vmatprep.subr.bf16.mxu0 0
        %1357 = vmatpush1.bf16.xpose.msra.mxu0 0
        %1358 = vmatprep.subr.bf16.mxu0 0
        %1359 = vmatpush1.bf16.xpose.msra.mxu0 0
        %1360 = vmatprep.subr.bf16.mxu0 0
        %1361 = vmatpush1.bf16.xpose.msra.mxu0 0
        %1362 = vmatprep.subr.bf16.mxu0 0
        %1363 = vmatpush1.bf16.xpose.msra.mxu0 0
        %1364 = vmatprep.subr.bf16.mxu0 0
        %1365 = vmatpush1.bf16.xpose.msra.mxu0 0
        %1366 = vmatprep.subr.bf16.mxu0 0
        %1367 = vmatpush1.bf16.xpose.msra.mxu0 0
        %1368 = vmatprep.subr.bf16.mxu0 0
        %1369 = vmatpush1.bf16.xpose.msra.mxu0 0
        %1370 = vmatprep.subr.bf16.mxu0 0
        %1371 = vmatpush1.bf16.xpose.msra.mxu0 0
        %1372 = vmatprep.subr.bf16.mxu0 0
        %1373 = vmatpush1.bf16.xpose.msra.mxu0 0
        %1374 = vmatprep.subr.bf16.mxu0 0
        %1375 = vmatpush1.bf16.xpose.msra.mxu0 0
        %1376 = vmatprep.mubr.bf16.mxu0 0
        %1377 = vmatmul.mubr.bf16.gmra.mrb[0].mxu0 %v1339
        %v1378 = vpop.f32.mrb[0].mxu0
        %v1379 = vadd.f32 0.0, %v1378
        %v1380 = vpop.f32.mrb[0].mxu0
        %v1381 = vpop.f32.mrb[0].mxu0
        %v1382 = vpop.f32.mrb[0].mxu0
        %1383 = vdwg.mxu0
        %v1384 = vsel %vm1199, %v1241, -inf
        %1385 = vmax.xlane.f32.xlu0 %v1384
        %v1386 = vpop.xlane.xlu0 %1385
        %v1387 = vsel %vm1199, %v1287, -inf
        %1388 = vmax.xlane.f32.xlu0 %v1387
        %v1389 = vpop.xlane.xlu0 %1388
        %v1390 = vsel %vm1199, %v1333, -inf
        %1391 = vmax.xlane.f32.xlu0 %v1390
        %v1392 = vpop.xlane.xlu0 %1391
        %v1393 = vsel %vm1199, %v1379, -inf
        %1394 = vmax.xlane.f32.xlu0 %v1393
        %v1395 = vpop.xlane.xlu0 %1394
        %v1396 = vsub.f32 %v1241, %v1386
        %v1397 = vsub.f32 %v1287, %v1389
        %v1398 = vsub.f32 %v1333, %v1392
        %v1399 = vsub.f32 %v1379, %v1395
        %v1400 = vmul.f32 %v1396, 1.442695
        %v1401 = vpow.pop %v1400
        %v1402 = vmul.f32 %v1397, 1.442695
        %v1403 = vpow.pop %v1402
        %v1404 = vmul.f32 %v1398, 1.442695
        %v1405 = vpow.pop %v1404
        %v1406 = vmul.f32 %v1399, 1.442695
        %v1407 = vpow.pop %v1406
        %v1408 = vsel %vm1199, %v1401, 0.0
        %1409 = vadd.xlane.f32.xlu0 %v1408
        %v1410 = vpop.xlane.xlu0 %1409
        %v1411 = vsel %vm1199, %v1403, 0.0
        %1412 = vadd.xlane.f32.xlu0 %v1411
        %v1413 = vpop.xlane.xlu0 %1412
        %v1414 = vsel %vm1199, %v1405, 0.0
        %1415 = vadd.xlane.f32.xlu0 %v1414
        %v1416 = vpop.xlane.xlu0 %1415
        %v1417 = vsel %vm1199, %v1407, 0.0
        %1418 = vadd.xlane.f32.xlu0 %v1417
        %v1419 = vpop.xlane.xlu0 %1418
        %v1420 = vrcp.pop %v1410
        %v1421 = vrcp.pop %v1413
        %v1422 = vrcp.pop %v1416
        %v1423 = vrcp.pop %v1419
        %v1424 = vmul.f32 %v1401, %v1420
        %v1425 = vmul.f32 %v1403, %v1421
        %v1426 = vmul.f32 %v1405, %v1422
        %v1427 = vmul.f32 %v1407, %v1423
        %1428 = vst.msk [vmem:[%s411] sm:$0xff] %vm1199, %v1424
        %1429 = vst.msk [vmem:[%s411 + $0x8] sm:$0xff] %vm1199, %v1425
        %1430 = vst.msk [vmem:[%s411 + $0x10] sm:$0xff] %vm1199, %v1426
        %1431 = vst.msk [vmem:[%s411 + $0x18] sm:$0xff] %vm1199, %v1427
        %v1432 = vpack.c.bf16 %v1424, %v1424
        %v1433 = vpack.c.bf16 %v1425, %v1425
        %v1434 = vpack.c.bf16 %v1426, %v1426
        %v1435 = vpack.c.bf16 %v1427, %v1427
        %v1436 = vpack.c.bf16 %v1030, %v1030
        %v1437 = vpack.c.bf16 %v1082, %v1082
        %v1438 = vpack.c.bf16 %v1134, %v1134
        %v1439 = vpack.c.bf16 %v1186, %v1186
        %v1441 = vsel %vm1199, %v1432, 0
        %vm1443 = vcmask 1043456
        %v1445 = vsel %vm1443, %v1436, 0
        %1447 = vmatprep.subr.bf16.mxu0 0
        %1448 = vmatpush1.bf16.msra.mxu0 %v1445
        %1449 = vmatprep.subr.bf16.mxu0 0
        %1450 = vmatpush1.bf16.msra.mxu0 0
        %1451 = vmatprep.subr.bf16.mxu0 0
        %1452 = vmatpush1.bf16.msra.mxu0 0
        %1453 = vmatprep.subr.bf16.mxu0 0
        %1454 = vmatpush1.bf16.msra.mxu0 0
        %1455 = vmatprep.subr.bf16.mxu0 0
        %1456 = vmatpush1.bf16.msra.mxu0 0
        %1457 = vmatprep.subr.bf16.mxu0 0
        %1458 = vmatpush1.bf16.msra.mxu0 0
        %1459 = vmatprep.subr.bf16.mxu0 0
        %1460 = vmatpush1.bf16.msra.mxu0 0
        %1461 = vmatprep.subr.bf16.mxu0 0
        %1462 = vmatpush1.bf16.msra.mxu0 0
        %1463 = vmatprep.subr.bf16.mxu0 0
        %1464 = vmatpush1.bf16.msra.mxu0 0
        %1465 = vmatprep.subr.bf16.mxu0 0
        %1466 = vmatpush1.bf16.msra.mxu0 0
        %1467 = vmatprep.subr.bf16.mxu0 0
        %1468 = vmatpush1.bf16.msra.mxu0 0
        %1469 = vmatprep.subr.bf16.mxu0 0
        %1470 = vmatpush1.bf16.msra.mxu0 0
        %1471 = vmatprep.subr.bf16.mxu0 0
        %1472 = vmatpush1.bf16.msra.mxu0 0
        %1473 = vmatprep.subr.bf16.mxu0 0
        %1474 = vmatpush1.bf16.msra.mxu0 0
        %1475 = vmatprep.subr.bf16.mxu0 0
        %1476 = vmatpush1.bf16.msra.mxu0 0
        %1477 = vmatprep.subr.bf16.mxu0 0
        %1478 = vmatpush1.bf16.msra.mxu0 0
        %1479 = vmatprep.mubr.bf16.mxu0 0
        %1480 = vmatmul.mubr.bf16.gmra.mrb[0].mxu0 %v1441
        %v1481 = vpop.f32.mrb[0].mxu0
        %v1482 = vadd.f32 0.0, %v1481
        %v1483 = vpop.f32.mrb[0].mxu0
        %v1484 = vpop.f32.mrb[0].mxu0
        %v1485 = vpop.f32.mrb[0].mxu0
        %1486 = vdwg.mxu0
        %v1488 = vsel %vm1199, %v1433, 0
        %v1491 = vsel %vm1443, %v1437, 0
        %1493 = vmatprep.subr.bf16.mxu0 0
        %1494 = vmatpush1.bf16.msra.mxu0 %v1491
        %1495 = vmatprep.subr.bf16.mxu0 0
        %1496 = vmatpush1.bf16.msra.mxu0 0
        %1497 = vmatprep.subr.bf16.mxu0 0
        %1498 = vmatpush1.bf16.msra.mxu0 0
        %1499 = vmatprep.subr.bf16.mxu0 0
        %1500 = vmatpush1.bf16.msra.mxu0 0
        %1501 = vmatprep.subr.bf16.mxu0 0
        %1502 = vmatpush1.bf16.msra.mxu0 0
        %1503 = vmatprep.subr.bf16.mxu0 0
        %1504 = vmatpush1.bf16.msra.mxu0 0
        %1505 = vmatprep.subr.bf16.mxu0 0
        %1506 = vmatpush1.bf16.msra.mxu0 0
        %1507 = vmatprep.subr.bf16.mxu0 0
        %1508 = vmatpush1.bf16.msra.mxu0 0
        %1509 = vmatprep.subr.bf16.mxu0 0
        %1510 = vmatpush1.bf16.msra.mxu0 0
        %1511 = vmatprep.subr.bf16.mxu0 0
        %1512 = vmatpush1.bf16.msra.mxu0 0
        %1513 = vmatprep.subr.bf16.mxu0 0
        %1514 = vmatpush1.bf16.msra.mxu0 0
        %1515 = vmatprep.subr.bf16.mxu0 0
        %1516 = vmatpush1.bf16.msra.mxu0 0
        %1517 = vmatprep.subr.bf16.mxu0 0
        %1518 = vmatpush1.bf16.msra.mxu0 0
        %1519 = vmatprep.subr.bf16.mxu0 0
        %1520 = vmatpush1.bf16.msra.mxu0 0
        %1521 = vmatprep.subr.bf16.mxu0 0
        %1522 = vmatpush1.bf16.msra.mxu0 0
        %1523 = vmatprep.subr.bf16.mxu0 0
        %1524 = vmatpush1.bf16.msra.mxu0 0
        %1525 = vmatprep.mubr.bf16.mxu0 0
        %1526 = vmatmul.mubr.bf16.gmra.mrb[0].mxu0 %v1488
        %v1527 = vpop.f32.mrb[0].mxu0
        %v1528 = vadd.f32 0.0, %v1527
        %v1529 = vpop.f32.mrb[0].mxu0
        %v1530 = vpop.f32.mrb[0].mxu0
        %v1531 = vpop.f32.mrb[0].mxu0
        %1532 = vdwg.mxu0
        %v1534 = vsel %vm1199, %v1434, 0
        %v1537 = vsel %vm1443, %v1438, 0
        %1539 = vmatprep.subr.bf16.mxu0 0
        %1540 = vmatpush1.bf16.msra.mxu0 %v1537
        %1541 = vmatprep.subr.bf16.mxu0 0
        %1542 = vmatpush1.bf16.msra.mxu0 0
        %1543 = vmatprep.subr.bf16.mxu0 0
        %1544 = vmatpush1.bf16.msra.mxu0 0
        %1545 = vmatprep.subr.bf16.mxu0 0
        %1546 = vmatpush1.bf16.msra.mxu0 0
        %1547 = vmatprep.subr.bf16.mxu0 0
        %1548 = vmatpush1.bf16.msra.mxu0 0
        %1549 = vmatprep.subr.bf16.mxu0 0
        %1550 = vmatpush1.bf16.msra.mxu0 0
        %1551 = vmatprep.subr.bf16.mxu0 0
        %1552 = vmatpush1.bf16.msra.mxu0 0
        %1553 = vmatprep.subr.bf16.mxu0 0
        %1554 = vmatpush1.bf16.msra.mxu0 0
        %1555 = vmatprep.subr.bf16.mxu0 0
        %1556 = vmatpush1.bf16.msra.mxu0 0
        %1557 = vmatprep.subr.bf16.mxu0 0
        %1558 = vmatpush1.bf16.msra.mxu0 0
        %1559 = vmatprep.subr.bf16.mxu0 0
        %1560 = vmatpush1.bf16.msra.mxu0 0
        %1561 = vmatprep.subr.bf16.mxu0 0
        %1562 = vmatpush1.bf16.msra.mxu0 0
        %1563 = vmatprep.subr.bf16.mxu0 0
        %1564 = vmatpush1.bf16.msra.mxu0 0
        %1565 = vmatprep.subr.bf16.mxu0 0
        %1566 = vmatpush1.bf16.msra.mxu0 0
        %1567 = vmatprep.subr.bf16.mxu0 0
        %1568 = vmatpush1.bf16.msra.mxu0 0
        %1569 = vmatprep.subr.bf16.mxu0 0
        %1570 = vmatpush1.bf16.msra.mxu0 0
        %1571 = vmatprep.mubr.bf16.mxu0 0
        %1572 = vmatmul.mubr.bf16.gmra.mrb[0].mxu0 %v1534
        %v1573 = vpop.f32.mrb[0].mxu0
        %v1574 = vadd.f32 0.0, %v1573
        %v1575 = vpop.f32.mrb[0].mxu0
        %v1576 = vpop.f32.mrb[0].mxu0
        %v1577 = vpop.f32.mrb[0].mxu0
        %1578 = vdwg.mxu0
        %v1580 = vsel %vm1199, %v1435, 0
        %v1583 = vsel %vm1443, %v1439, 0
        %1585 = vmatprep.subr.bf16.mxu0 0
        %1586 = vmatpush1.bf16.msra.mxu0 %v1583
        %1587 = vmatprep.subr.bf16.mxu0 0
        %1588 = vmatpush1.bf16.msra.mxu0 0
        %1589 = vmatprep.subr.bf16.mxu0 0
        %1590 = vmatpush1.bf16.msra.mxu0 0
        %1591 = vmatprep.subr.bf16.mxu0 0
        %1592 = vmatpush1.bf16.msra.mxu0 0
        %1593 = vmatprep.subr.bf16.mxu0 0
        %1594 = vmatpush1.bf16.msra.mxu0 0
        %1595 = vmatprep.subr.bf16.mxu0 0
        %1596 = vmatpush1.bf16.msra.mxu0 0
        %1597 = vmatprep.subr.bf16.mxu0 0
        %1598 = vmatpush1.bf16.msra.mxu0 0
        %1599 = vmatprep.subr.bf16.mxu0 0
        %1600 = vmatpush1.bf16.msra.mxu0 0
        %1601 = vmatprep.subr.bf16.mxu0 0
        %1602 = vmatpush1.bf16.msra.mxu0 0
        %1603 = vmatprep.subr.bf16.mxu0 0
        %1604 = vmatpush1.bf16.msra.mxu0 0
        %1605 = vmatprep.subr.bf16.mxu0 0
        %1606 = vmatpush1.bf16.msra.mxu0 0
        %1607 = vmatprep.subr.bf16.mxu0 0
        %1608 = vmatpush1.bf16.msra.mxu0 0
        %1609 = vmatprep.subr.bf16.mxu0 0
        %1610 = vmatpush1.bf16.msra.mxu0 0
        %1611 = vmatprep.subr.bf16.mxu0 0
        %1612 = vmatpush1.bf16.msra.mxu0 0
        %1613 = vmatprep.subr.bf16.mxu0 0
        %1614 = vmatpush1.bf16.msra.mxu0 0
        %1615 = vmatprep.subr.bf16.mxu0 0
        %1616 = vmatpush1.bf16.msra.mxu0 0
        %1617 = vmatprep.mubr.bf16.mxu0 0
        %1618 = vmatmul.mubr.bf16.gmra.mrb[0].mxu0 %v1580
        %v1619 = vpop.f32.mrb[0].mxu0
        %v1620 = vadd.f32 0.0, %v1619
        %v1621 = vpop.f32.mrb[0].mxu0
        %v1622 = vpop.f32.mrb[0].mxu0
        %v1623 = vpop.f32.mrb[0].mxu0
        %1624 = vdwg.mxu0
        %v1625 = vpack.c.bf16 %v1482, %v1482
        %v1627 = vsel %vm1199, %v1625, 0
        %v1630 = vsel %vm1443, %v483, 0
        %1632 = vmatprep.subr.bf16.mxu0 0
        %1633 = vmatpush1.bf16.msra.mxu0 %v1630
        %1634 = vmatprep.subr.bf16.mxu0 0
        %1635 = vmatpush1.bf16.msra.mxu0 0
        %1636 = vmatprep.subr.bf16.mxu0 0
        %1637 = vmatpush1.bf16.msra.mxu0 0
        %1638 = vmatprep.subr.bf16.mxu0 0
        %1639 = vmatpush1.bf16.msra.mxu0 0
        %1640 = vmatprep.subr.bf16.mxu0 0
        %1641 = vmatpush1.bf16.msra.mxu0 0
        %1642 = vmatprep.subr.bf16.mxu0 0
        %1643 = vmatpush1.bf16.msra.mxu0 0
        %1644 = vmatprep.subr.bf16.mxu0 0
        %1645 = vmatpush1.bf16.msra.mxu0 0
        %1646 = vmatprep.subr.bf16.mxu0 0
        %1647 = vmatpush1.bf16.msra.mxu0 0
        %1648 = vmatprep.subr.bf16.mxu0 0
        %1649 = vmatpush1.bf16.msra.mxu0 0
        %1650 = vmatprep.subr.bf16.mxu0 0
        %1651 = vmatpush1.bf16.msra.mxu0 0
        %1652 = vmatprep.subr.bf16.mxu0 0
        %1653 = vmatpush1.bf16.msra.mxu0 0
        %1654 = vmatprep.subr.bf16.mxu0 0
        %1655 = vmatpush1.bf16.msra.mxu0 0
        %1656 = vmatprep.subr.bf16.mxu0 0
        %1657 = vmatpush1.bf16.msra.mxu0 0
        %1658 = vmatprep.subr.bf16.mxu0 0
        %1659 = vmatpush1.bf16.msra.mxu0 0
        %1660 = vmatprep.subr.bf16.mxu0 0
        %1661 = vmatpush1.bf16.msra.mxu0 0
        %1662 = vmatprep.subr.bf16.mxu0 0
        %1663 = vmatpush1.bf16.msra.mxu0 0
        %1664 = vmatprep.mubr.bf16.mxu0 0
        %1665 = vmatmul.mubr.bf16.gmra.mrb[0].mxu0 %v1627
        %v1666 = vpop.f32.mrb[0].mxu0
        %v1667 = vadd.f32 0.0, %v1666
        %v1668 = vpop.f32.mrb[0].mxu0
        %v1669 = vpop.f32.mrb[0].mxu0
        %v1670 = vpop.f32.mrb[0].mxu0
        %1671 = vdwg.mxu0
        %v1673 = vlaneseq
        %v1674 = vshrl.u32 %v1673, 7
        %v1675 = vsub.s32 0, %v1674
        %v1676 = vrot.slane %v487, %v1675
        %v1678 = vadd.f32 %v1676, %v1667
        %v1679 = vpack.c.bf16 %v1528, %v1528
        %v1681 = vsel %vm1199, %v1679, 0
        %v1684 = vsel %vm1443, %v484, 0
        %1686 = vmatprep.subr.bf16.mxu0 0
        %1687 = vmatpush1.bf16.msra.mxu0 %v1684
        %1688 = vmatprep.subr.bf16.mxu0 0
        %1689 = vmatpush1.bf16.msra.mxu0 0
        %1690 = vmatprep.subr.bf16.mxu0 0
        %1691 = vmatpush1.bf16.msra.mxu0 0
        %1692 = vmatprep.subr.bf16.mxu0 0
        %1693 = vmatpush1.bf16.msra.mxu0 0
        %1694 = vmatprep.subr.bf16.mxu0 0
        %1695 = vmatpush1.bf16.msra.mxu0 0
        %1696 = vmatprep.subr.bf16.mxu0 0
        %1697 = vmatpush1.bf16.msra.mxu0 0
        %1698 = vmatprep.subr.bf16.mxu0 0
        %1699 = vmatpush1.bf16.msra.mxu0 0
        %1700 = vmatprep.subr.bf16.mxu0 0
        %1701 = vmatpush1.bf16.msra.mxu0 0
        %1702 = vmatprep.subr.bf16.mxu0 0
        %1703 = vmatpush1.bf16.msra.mxu0 0
        %1704 = vmatprep.subr.bf16.mxu0 0
        %1705 = vmatpush1.bf16.msra.mxu0 0
        %1706 = vmatprep.subr.bf16.mxu0 0
        %1707 = vmatpush1.bf16.msra.mxu0 0
        %1708 = vmatprep.subr.bf16.mxu0 0
        %1709 = vmatpush1.bf16.msra.mxu0 0
        %1710 = vmatprep.subr.bf16.mxu0 0
        %1711 = vmatpush1.bf16.msra.mxu0 0
        %1712 = vmatprep.subr.bf16.mxu0 0
        %1713 = vmatpush1.bf16.msra.mxu0 0
        %1714 = vmatprep.subr.bf16.mxu0 0
        %1715 = vmatpush1.bf16.msra.mxu0 0
        %1716 = vmatprep.subr.bf16.mxu0 0
        %1717 = vmatpush1.bf16.msra.mxu0 0
        %1718 = vmatprep.mubr.bf16.mxu0 0
        %1719 = vmatmul.mubr.bf16.gmra.mrb[0].mxu0 %v1681
        %v1720 = vpop.f32.mrb[0].mxu0
        %v1721 = vadd.f32 0.0, %v1720
        %v1722 = vpop.f32.mrb[0].mxu0
        %v1723 = vpop.f32.mrb[0].mxu0
        %v1724 = vpop.f32.mrb[0].mxu0
        %1725 = vdwg.mxu0
        %v1726 = vadd.f32 %v1678, %v1721
        %v1727 = vpack.c.bf16 %v1574, %v1574
        %v1729 = vsel %vm1199, %v1727, 0
        %v1732 = vsel %vm1443, %v485, 0
        %1734 = vmatprep.subr.bf16.mxu0 0
        %1735 = vmatpush1.bf16.msra.mxu0 %v1732
        %1736 = vmatprep.subr.bf16.mxu0 0
        %1737 = vmatpush1.bf16.msra.mxu0 0
        %1738 = vmatprep.subr.bf16.mxu0 0
        %1739 = vmatpush1.bf16.msra.mxu0 0
        %1740 = vmatprep.subr.bf16.mxu0 0
        %1741 = vmatpush1.bf16.msra.mxu0 0
        %1742 = vmatprep.subr.bf16.mxu0 0
        %1743 = vmatpush1.bf16.msra.mxu0 0
        %1744 = vmatprep.subr.bf16.mxu0 0
        %1745 = vmatpush1.bf16.msra.mxu0 0
        %1746 = vmatprep.subr.bf16.mxu0 0
        %1747 = vmatpush1.bf16.msra.mxu0 0
        %1748 = vmatprep.subr.bf16.mxu0 0
        %1749 = vmatpush1.bf16.msra.mxu0 0
        %1750 = vmatprep.subr.bf16.mxu0 0
        %1751 = vmatpush1.bf16.msra.mxu0 0
        %1752 = vmatprep.subr.bf16.mxu0 0
        %1753 = vmatpush1.bf16.msra.mxu0 0
        %1754 = vmatprep.subr.bf16.mxu0 0
        %1755 = vmatpush1.bf16.msra.mxu0 0
        %1756 = vmatprep.subr.bf16.mxu0 0
        %1757 = vmatpush1.bf16.msra.mxu0 0
        %1758 = vmatprep.subr.bf16.mxu0 0
        %1759 = vmatpush1.bf16.msra.mxu0 0
        %1760 = vmatprep.subr.bf16.mxu0 0
        %1761 = vmatpush1.bf16.msra.mxu0 0
        %1762 = vmatprep.subr.bf16.mxu0 0
        %1763 = vmatpush1.bf16.msra.mxu0 0
        %1764 = vmatprep.subr.bf16.mxu0 0
        %1765 = vmatpush1.bf16.msra.mxu0 0
        %1766 = vmatprep.mubr.bf16.mxu0 0
        %1767 = vmatmul.mubr.bf16.gmra.mrb[0].mxu0 %v1729
        %v1768 = vpop.f32.mrb[0].mxu0
        %v1769 = vadd.f32 0.0, %v1768
        %v1770 = vpop.f32.mrb[0].mxu0
        %v1771 = vpop.f32.mrb[0].mxu0
        %v1772 = vpop.f32.mrb[0].mxu0
        %1773 = vdwg.mxu0
        %v1774 = vadd.f32 %v1726, %v1769
        %v1775 = vpack.c.bf16 %v1620, %v1620
        %v1777 = vsel %vm1199, %v1775, 0
        %v1780 = vsel %vm1443, %v486, 0
        %1782 = vmatprep.subr.bf16.mxu0 0
        %1783 = vmatpush1.bf16.msra.mxu0 %v1780
        %1784 = vmatprep.subr.bf16.mxu0 0
        %1785 = vmatpush1.bf16.msra.mxu0 0
        %1786 = vmatprep.subr.bf16.mxu0 0
        %1787 = vmatpush1.bf16.msra.mxu0 0
        %1788 = vmatprep.subr.bf16.mxu0 0
        %1789 = vmatpush1.bf16.msra.mxu0 0
        %1790 = vmatprep.subr.bf16.mxu0 0
        %1791 = vmatpush1.bf16.msra.mxu0 0
        %1792 = vmatprep.subr.bf16.mxu0 0
        %1793 = vmatpush1.bf16.msra.mxu0 0
        %1794 = vmatprep.subr.bf16.mxu0 0
        %1795 = vmatpush1.bf16.msra.mxu0 0
        %1796 = vmatprep.subr.bf16.mxu0 0
        %1797 = vmatpush1.bf16.msra.mxu0 0
        %1798 = vmatprep.subr.bf16.mxu0 0
        %1799 = vmatpush1.bf16.msra.mxu0 0
        %1800 = vmatprep.subr.bf16.mxu0 0
        %1801 = vmatpush1.bf16.msra.mxu0 0
        %1802 = vmatprep.subr.bf16.mxu0 0
        %1803 = vmatpush1.bf16.msra.mxu0 0
        %1804 = vmatprep.subr.bf16.mxu0 0
        %1805 = vmatpush1.bf16.msra.mxu0 0
        %1806 = vmatprep.subr.bf16.mxu0 0
        %1807 = vmatpush1.bf16.msra.mxu0 0
        %1808 = vmatprep.subr.bf16.mxu0 0
        %1809 = vmatpush1.bf16.msra.mxu0 0
        %1810 = vmatprep.subr.bf16.mxu0 0
        %1811 = vmatpush1.bf16.msra.mxu0 0
        %1812 = vmatprep.subr.bf16.mxu0 0
        %1813 = vmatpush1.bf16.msra.mxu0 0
        %1814 = vmatprep.mubr.bf16.mxu0 0
        %1815 = vmatmul.mubr.bf16.gmra.mrb[0].mxu0 %v1777
        %v1816 = vpop.f32.mrb[0].mxu0
        %v1817 = vadd.f32 0.0, %v1816
        %v1818 = vpop.f32.mrb[0].mxu0
        %v1819 = vpop.f32.mrb[0].mxu0
        %v1820 = vpop.f32.mrb[0].mxu0
        %1821 = vdwg.mxu0
        %v1822 = vadd.f32 %v1774, %v1817
        %v1823 = vadd.f32 %v422, %v1822
        %v1824 = vsel %vm527, %v1823, 0.0
        %1825 = vadd.xlane.f32.xlu0 %v1824
        %v1826 = vpop.xlane.xlu0 %1825
        %v1827 = vrcp.pop 32.0
        %v1828 = vmul.f32 %v1826, %v1827
        %v1829 = vsub.f32 %v1823, %v1828
        %v1830 = vmul.f32 %v1829, %v1829
        %v1831 = vsel %vm527, %v1830, 0.0
        %1832 = vadd.xlane.f32.xlu0 %v1831
        %v1833 = vpop.xlane.xlu0 %1832
        %v1834 = vmul.f32 %v1833, %v1827
        %v1835 = vadd.f32 %v1834, 1e-05
        %v1836 = vrsqrt.pop %v1835
        %v1837 = vmul.f32 %v1829, %v1836
        %v1839 = vlaneseq
        %v1840 = vshrl.u32 %v1839, 7
        %v1841 = vsub.s32 0, %v1840
        %v1842 = vrot.slane %v488, %v1841
        %v1844 = vmul.f32 %v1837, %v1842
        %v1846 = vlaneseq
        %v1847 = vshrl.u32 %v1846, 7
        %v1848 = vsub.s32 0, %v1847
        %v1849 = vrot.slane %v489, %v1848
        %v1851 = vadd.f32 %v1844, %v1849
        %1852 = vst.msk [vmem:[%s419] sm:$0xff] %vm527, %v1851
        %p1853 = scmp.lt.s32.totalorder %s27, 1
        %s1854 = scalar_select %p1853, %s27, 1
        %s1855 = smul.addr %s1854, 8
        %s1856 = scalar_lea.vmem %s11, %s1855
        %s1857 = sand.u32 %s297, 1
        %s1858 = scalar_lea.sflag [#allocation3], %s1857
        %s1859 = sand.u32 %s297, 1
        %s1860 = smul.addr %s1859, 32
        %s1861 = scalar_lea.vmem [#allocation2], %s1860
        // Predicated region
        $region65: #{decoder_forward.7} parent=63 // pred_check
          %p1862 = pneg %p281
        $region66: #{decoder_forward.7} parent=63 // pred_check_branch
          %1864 = sbr.rel (%p1862) target = $region68
        $region67: #{decoder_forward.7} parent=63 // pred_region
          _
        $region68: #{decoder_forward.7} parent=63 // pred_fallthru
          _
        // Predicated region
        $region69: #{decoder_forward.7} parent=63 // pred_check
          %p1865 = pneg %p307
        $region70: #{decoder_forward.7} parent=63 // pred_check_branch
          %1867 = sbr.rel (%p1865) target = $region72
        $region71: #{decoder_forward.7} parent=63 // pred_region
          %s1868 = smul.u32 4, %s27
          %s1870 = ssub.s32 512, 512
          %1871 = vsyncadd %s1858, %s1870
          %s1872 = smul.addr %s1868, 128
          %s1873 = scalar_lea.hbm %s12, %s1872
          %s1874 = sshll.u32 %s1861, 4
          %s1875 = int_to_ptr.vmem [resolvable:$true] %s1874
          %1880 = dma.vmem_to_hbm [thread:$0]  %s1875, 512, %s1873, %s1858, 128, 128, 8
        $region72: #{decoder_forward.7} parent=63 // pred_fallthru
          _
      $region64: #{decoder_forward.7} parent=5 // pred_fallthru
        _
      %p1881 = scmp.le.s32.totalorder 2, %s22
      // Predicated region
      $region73: #{decoder_forward.7} parent=5 // pred_check
        %p1882 = pneg %p1881
      $region74: #{decoder_forward.7} parent=5 // pred_check_branch
        %1884 = sbr.rel (%p1882) target = $region76
      $region75: #{decoder_forward.7} parent=5 // pred_region
        %s1885 = ssub.s32 %s22, 2
        // Predicated region
        $region77: #{decoder_forward.7} parent=75 // pred_check
          %p1886 = pneg %p287
        $region78: #{decoder_forward.7} parent=75 // pred_check_branch
          %1888 = sbr.rel (%p1886) target = $region80
        $region79: #{decoder_forward.7} parent=75 // pred_region
          %p1889 = scmp.lt.s32.totalorder %s28, 1
          %s1890 = scalar_select %p1889, %s28, 1
          %s1891 = smul.addr %s1890, 8
          %s1892 = scalar_lea.vmem %s11, %s1891
        $region80: #{decoder_forward.7} parent=75 // pred_fallthru
          _
        // Predicated region
        $region81: #{decoder_forward.7} parent=75 // pred_check
          %p1893 = pneg %p313
        $region82: #{decoder_forward.7} parent=75 // pred_check_branch
          %1895 = sbr.rel (%p1893) target = $region84
        $region83: #{decoder_forward.7} parent=75 // pred_region
          %s1896 = sand.u32 %s298, 1
          %s1897 = scalar_lea.sflag [#allocation3], %s1896
          %s1898 = sand.u32 %s298, 1
          %s1899 = smul.addr %s1898, 32
          %s1900 = scalar_lea.vmem [#allocation2], %s1899
          %1901 = dma.done %s1897, 512
        $region84: #{decoder_forward.7} parent=75 // pred_fallthru
          _
      $region76: #{decoder_forward.7} parent=5 // pred_fallthru
        _
    $region6: #{decoder_forward.7} parent=1 // loop_footer
      %s26 = sadd.s32 1, %s22
    $region7: #{decoder_forward.7} parent=1 // loop_footer_branch
      %21 = sbr.rel target = $region3
    $region8: #{decoder_forward.7} parent=1 // loop_exit
      _
    %1902 = vsyncpa [#allocation3], 1
    %s1903 = scalar_lea.sflag [#allocation3], 1
    %1904 = vsyncpa %s1903, 1

</llo_original>
